<compile_context>
chip_gen: v7x
topology: tpu7x:2x2x1
jax: 0.10.0
libtpu: 0.0.40
codegen_flags: <defaults>
</compile_context>

<pallas_src>
import jax
import jax.numpy as jnp
from jax import lax
from jax.experimental import pallas as pl
from jax.experimental.pallas import tpu as pltpu

N_FEATURES = 4
IN_PAD = 8          # input feature dim 4 padded to a sublane multiple
HID_PAD = 128       # hidden dims padded to one lane group
OUT_PAD = 8         # lanes actually written to HBM for the output
SUB_ROWS = 128      # rows per inner sub-chunk inside a batch tile

# layer sizes: in-100-100-50-3-50-100-100-out
LAYER_DIMS = [
    (N_FEATURES, 100),
    (100, 100),
    (100, 50),
    (50, 3),
    (3, 50),
    (50, 100),
    (100, 100),
    (100, N_FEATURES),
]


def _round_up(x, m):
    return (x + m - 1) // m * m


def ae_3d_100_kernel(x_ref,
                     w1, b1, w2, b2, w3, b3, w4, b4,
                     w5, b5, w6, b6, w7, b7, w8, b8,
                     o_ref):
    """Full encoder+decoder forward on one batch tile.

    Encoder: Lin(4,100) Tanh Lin(100,100) Tanh Lin(100,50) Tanh Lin(50,3)
    Decoder: Tanh Lin(3,50) Tanh Lin(50,100) Tanh Lin(100,100) Tanh Lin(100,4)

    All dims are zero-padded to lane/sublane-aligned shapes; padded lanes stay
    exactly zero through every layer, so no masking is needed inside the chain.
    """
    tile_rows = x_ref.shape[0]
    sub = SUB_ROWS if tile_rows % SUB_ROWS == 0 else tile_rows
    n_chunks = tile_rows // sub
    out_lanes = o_ref.shape[1]

    def lin(h, w_ref, b_ref):
        # bf16 operands, f32 accumulation on the MXU; bias add in f32.
        return jnp.dot(h.astype(w_ref.dtype), w_ref[...],
                       preferred_element_type=jnp.float32) + b_ref[...]

    def chunk_body(c, carry):
        r = pl.multiple_of(c * sub, sub)
        h = x_ref[pl.ds(r, sub), :]

        # --- encoder ---
        h = jnp.tanh(lin(h, w1, b1))
        h = jnp.tanh(lin(h, w2, b2))
        h = jnp.tanh(lin(h, w3, b3))
        z = lin(h, w4, b4)          # latent (no activation inside encoder)

        # --- decoder (starts with Tanh on the latent) ---
        h = jnp.tanh(z)
        h = jnp.tanh(lin(h, w5, b5))
        h = jnp.tanh(lin(h, w6, b6))
        h = jnp.tanh(lin(h, w7, b7))
        out = lin(h, w8, b8)        # final Linear, no activation

        # Only the first OUT_PAD lanes carry real data; store just those.
        o_ref[pl.ds(r, sub), :] = out[:, :out_lanes].astype(o_ref.dtype)
        return carry

    lax.fori_loop(0, n_chunks, chunk_body, 0, unroll=True)


def pad_params(params, dot_dtype=jnp.bfloat16):
    """Zero-pad weights/biases to aligned shapes.

    Weights stored (in, out) -> (in_pad, out_pad), cast to `dot_dtype`.
    Biases -> (1, out_pad), kept in f32.
    """
    padded = []
    prev_out_pad = IN_PAD
    for (w, b) in params:
        fan_in, fan_out = w.shape
        in_pad = prev_out_pad
        out_pad = _round_up(fan_out, HID_PAD)
        wp = jnp.zeros((in_pad, out_pad), dot_dtype)
        wp = wp.at[:fan_in, :fan_out].set(w.astype(dot_dtype))
        bp = jnp.zeros((1, out_pad), jnp.float32)
        bp = bp.at[0, :fan_out].set(b.astype(jnp.float32))
        padded.append((wp, bp))
        prev_out_pad = out_pad
    return padded


def ae_3d_100_forward(x, params, *, batch_tile=256, dot_dtype=jnp.bfloat16):
    """x: (B, n_features) float32. params: list of (w, b), w as (in, out)."""
    B, F = x.shape
    assert F == N_FEATURES
    assert batch_tile % SUB_ROWS == 0 or batch_tile % 8 == 0

    padded_params = pad_params(params, dot_dtype)

    # Pad batch up to a multiple of the tile and features to IN_PAD (zeros).
    B_pad = _round_up(B, batch_tile)
    x_pad = jnp.zeros((B_pad, IN_PAD), dot_dtype)
    x_pad = x_pad.at[:B, :F].set(x.astype(dot_dtype))

    in_specs = [pl.BlockSpec((batch_tile, IN_PAD), lambda i: (i, 0))]
    args = [x_pad]
    for (w, b) in padded_params:
        # Constant block index -> weights/biases DMA'd once and kept in VMEM.
        in_specs.append(pl.BlockSpec(w.shape, lambda i: (0, 0)))
        in_specs.append(pl.BlockSpec(b.shape, lambda i: (0, 0)))
        args.append(w)
        args.append(b)

    out_spec = pl.BlockSpec((batch_tile, OUT_PAD), lambda i: (i, 0))

    out_padded = pl.pallas_call(
        ae_3d_100_kernel,
        out_shape=jax.ShapeDtypeStruct((B_pad, OUT_PAD), jnp.float32),
        grid_spec=pltpu.PrefetchScalarGridSpec(
            num_scalar_prefetch=0,
            grid=(B_pad // batch_tile,),
            in_specs=in_specs,
            out_specs=out_spec,
        ),
        compiler_params=pltpu.CompilerParams(
            dimension_semantics=("parallel",)),
    )(*args)

    # Only the first N_FEATURES lanes are meaningful; slice outside the kernel.
    return out_padded[:B, :N_FEATURES].astype(x.dtype)


def init_params(key):
    """Deterministic PyTorch-style init: U(-1/sqrt(fan_in), 1/sqrt(fan_in)).

    Weights stored as (in, out) — i.e. the transpose of PyTorch's (out, in).
    """
    params = []
    for (fan_in, fan_out) in LAYER_DIMS:
        key, kw, kb = jax.random.split(key, 3)
        bound = 1.0 / jnp.sqrt(jnp.float32(fan_in))
        w = jax.random.uniform(kw, (fan_in, fan_out), jnp.float32,
                               minval=-bound, maxval=bound)
        b = jax.random.uniform(kb, (fan_out,), jnp.float32,
                               minval=-bound, maxval=bound)
        params.append((w, b))
    return params


def reference_forward(x, params, dot_dtype=jnp.bfloat16):
    """Pure-JAX reference that mirrors the kernel's bf16 operand quantization."""
    def lin(h, w, b):
        return jnp.dot(h.astype(dot_dtype), w.astype(dot_dtype),
                       preferred_element_type=jnp.float32) + b

    h = x
    # encoder
    h = jnp.tanh(lin(h, *params[0]))
    h = jnp.tanh(lin(h, *params[1]))
    h = jnp.tanh(lin(h, *params[2]))
    z = lin(h, *params[3])
    # decoder
    h = jnp.tanh(z)
    h = jnp.tanh(lin(h, *params[4]))
    h = jnp.tanh(lin(h, *params[5]))
    h = jnp.tanh(lin(h, *params[6]))
    return lin(h, *params[7])


if __name__ == "__main__":
    key = jax.random.PRNGKey(0)
    kx, kp = jax.random.split(key)

    B = 512  # two grid steps at batch_tile=256 (exercises megacore split)
    x = jax.random.normal(kx, (B, N_FEATURES), jnp.float32)
    params = init_params(kp)

    fwd = jax.jit(lambda xx, pp: ae_3d_100_forward(xx, pp, batch_tile=256))
    out = jax.block_until_ready(fwd(x, params))

    ref = reference_forward(x, params)
    assert out.shape == (B, N_FEATURES)
    max_err = jnp.max(jnp.abs(out - ref))
    assert jnp.allclose(out, ref, atol=1e-2, rtol=1e-2), (
        f"mismatch: max abs err {max_err}")

    print("KERNEL_OK")
</pallas_src>

<mosaic_0001>
module attributes {stable_mosaic.version = 11 : i64} {
  func.func @ae_3d_100_kernel(%arg0: i32, %arg1: memref<256x8xbf16, #tpu.memory_space<vmem>>, %arg2: memref<8x128xbf16, #tpu.memory_space<vmem>>, %arg3: memref<1x128xf32, #tpu.memory_space<vmem>>, %arg4: memref<128x128xbf16, #tpu.memory_space<vmem>>, %arg5: memref<1x128xf32, #tpu.memory_space<vmem>>, %arg6: memref<128x128xbf16, #tpu.memory_space<vmem>>, %arg7: memref<1x128xf32, #tpu.memory_space<vmem>>, %arg8: memref<128x128xbf16, #tpu.memory_space<vmem>>, %arg9: memref<1x128xf32, #tpu.memory_space<vmem>>, %arg10: memref<128x128xbf16, #tpu.memory_space<vmem>>, %arg11: memref<1x128xf32, #tpu.memory_space<vmem>>, %arg12: memref<128x128xbf16, #tpu.memory_space<vmem>>, %arg13: memref<1x128xf32, #tpu.memory_space<vmem>>, %arg14: memref<128x128xbf16, #tpu.memory_space<vmem>>, %arg15: memref<1x128xf32, #tpu.memory_space<vmem>>, %arg16: memref<128x128xbf16, #tpu.memory_space<vmem>>, %arg17: memref<1x128xf32, #tpu.memory_space<vmem>>, %arg18: memref<256x8xf32, #tpu.memory_space<vmem>>) attributes {dimension_semantics = [#tpu.dimension_semantics<parallel>], iteration_bounds = array<i64: 2>, scalar_prefetch = 0 : i64, scratch_operands = 0 : i64, tpu.core_type = #tpu.core_type<tc>, window_params = [{transform_indices = @transform_0, window_bounds = array<i64: 256, 8>}, {pipeline_mode = #tpu.pipeline_mode<synchronous>, transform_indices = @transform_1, window_bounds = array<i64: 8, 128>}, {pipeline_mode = #tpu.pipeline_mode<synchronous>, transform_indices = @transform_2, window_bounds = array<i64: 1, 128>}, {pipeline_mode = #tpu.pipeline_mode<synchronous>, transform_indices = @transform_3, window_bounds = array<i64: 128, 128>}, {pipeline_mode = #tpu.pipeline_mode<synchronous>, transform_indices = @transform_4, window_bounds = array<i64: 1, 128>}, {pipeline_mode = #tpu.pipeline_mode<synchronous>, transform_indices = @transform_5, window_bounds = array<i64: 128, 128>}, {pipeline_mode = #tpu.pipeline_mode<synchronous>, transform_indices = @transform_6, window_bounds = array<i64: 1, 128>}, {pipeline_mode = #tpu.pipeline_mode<synchronous>, transform_indices = @transform_7, window_bounds = array<i64: 128, 128>}, {pipeline_mode = #tpu.pipeline_mode<synchronous>, transform_indices = @transform_8, window_bounds = array<i64: 1, 128>}, {pipeline_mode = #tpu.pipeline_mode<synchronous>, transform_indices = @transform_9, window_bounds = array<i64: 128, 128>}, {pipeline_mode = #tpu.pipeline_mode<synchronous>, transform_indices = @transform_10, window_bounds = array<i64: 1, 128>}, {pipeline_mode = #tpu.pipeline_mode<synchronous>, transform_indices = @transform_11, window_bounds = array<i64: 128, 128>}, {pipeline_mode = #tpu.pipeline_mode<synchronous>, transform_indices = @transform_12, window_bounds = array<i64: 1, 128>}, {pipeline_mode = #tpu.pipeline_mode<synchronous>, transform_indices = @transform_13, window_bounds = array<i64: 128, 128>}, {pipeline_mode = #tpu.pipeline_mode<synchronous>, transform_indices = @transform_14, window_bounds = array<i64: 1, 128>}, {pipeline_mode = #tpu.pipeline_mode<synchronous>, transform_indices = @transform_15, window_bounds = array<i64: 128, 128>}, {pipeline_mode = #tpu.pipeline_mode<synchronous>, transform_indices = @transform_16, window_bounds = array<i64: 1, 128>}, {transform_indices = @transform_17, window_bounds = array<i64: 256, 8>}]} {
    %c0_i32 = arith.constant 0 : i32
    %c128_i32 = arith.constant 128 : i32
    %0 = arith.muli %c0_i32, %c128_i32 : i32
    %1 = tpu.assume_multiple %0, 128 : i32
    %2 = arith.index_cast %1 : i32 to index
    %c0 = arith.constant 0 : index
    %3 = vector.load %arg1[%2, %c0] : memref<256x8xbf16, #tpu.memory_space<vmem>>, vector<128x8xbf16>
    %c0_0 = arith.constant 0 : index
    %c0_1 = arith.constant 0 : index
    %4 = vector.load %arg2[%c0_0, %c0_1] : memref<8x128xbf16, #tpu.memory_space<vmem>>, vector<8x128xbf16>
    %cst = arith.constant dense<0.000000e+00> : vector<128x128xf32>
    %5 = tpu.matmul %3, %4, %cst {dimension_numbers = #tpu.dot_dimension_numbers<[1], [0], [0], [1], [0, 0, 1, 1], [], []>} : vector<128x8xbf16>, vector<8x128xbf16>, vector<128x128xf32> -> vector<128x128xf32>
    %c0_2 = arith.constant 0 : index
    %c0_3 = arith.constant 0 : index
    %6 = vector.load %arg3[%c0_2, %c0_3] : memref<1x128xf32, #tpu.memory_space<vmem>>, vector<1x128xf32>
    %7 = vector.broadcast %6 : vector<1x128xf32> to vector<128x128xf32>
    %8 = arith.addf %5, %7 : vector<128x128xf32>
    %9 = math.tanh %8 : vector<128x128xf32>
    %10 = arith.truncf %9 : vector<128x128xf32> to vector<128x128xbf16>
    %c0_4 = arith.constant 0 : index
    %c0_5 = arith.constant 0 : index
    %11 = vector.load %arg4[%c0_4, %c0_5] : memref<128x128xbf16, #tpu.memory_space<vmem>>, vector<128x128xbf16>
    %cst_6 = arith.constant dense<0.000000e+00> : vector<128x128xf32>
    %12 = tpu.matmul %10, %11, %cst_6 {dimension_numbers = #tpu.dot_dimension_numbers<[1], [0], [0], [1], [0, 0, 1, 1], [], []>} : vector<128x128xbf16>, vector<128x128xbf16>, vector<128x128xf32> -> vector<128x128xf32>
    %c0_7 = arith.constant 0 : index
    %c0_8 = arith.constant 0 : index
    %13 = vector.load %arg5[%c0_7, %c0_8] : memref<1x128xf32, #tpu.memory_space<vmem>>, vector<1x128xf32>
    %14 = vector.broadcast %13 : vector<1x128xf32> to vector<128x128xf32>
    %15 = arith.addf %12, %14 : vector<128x128xf32>
    %16 = math.tanh %15 : vector<128x128xf32>
    %17 = arith.truncf %16 : vector<128x128xf32> to vector<128x128xbf16>
    %c0_9 = arith.constant 0 : index
    %c0_10 = arith.constant 0 : index
    %18 = vector.load %arg6[%c0_9, %c0_10] : memref<128x128xbf16, #tpu.memory_space<vmem>>, vector<128x128xbf16>
    %cst_11 = arith.constant dense<0.000000e+00> : vector<128x128xf32>
    %19 = tpu.matmul %17, %18, %cst_11 {dimension_numbers = #tpu.dot_dimension_numbers<[1], [0], [0], [1], [0, 0, 1, 1], [], []>} : vector<128x128xbf16>, vector<128x128xbf16>, vector<128x128xf32> -> vector<128x128xf32>
    %c0_12 = arith.constant 0 : index
    %c0_13 = arith.constant 0 : index
    %20 = vector.load %arg7[%c0_12, %c0_13] : memref<1x128xf32, #tpu.memory_space<vmem>>, vector<1x128xf32>
    %21 = vector.broadcast %20 : vector<1x128xf32> to vector<128x128xf32>
    %22 = arith.addf %19, %21 : vector<128x128xf32>
    %23 = math.tanh %22 : vector<128x128xf32>
    %24 = arith.truncf %23 : vector<128x128xf32> to vector<128x128xbf16>
    %c0_14 = arith.constant 0 : index
    %c0_15 = arith.constant 0 : index
    %25 = vector.load %arg8[%c0_14, %c0_15] : memref<128x128xbf16, #tpu.memory_space<vmem>>, vector<128x128xbf16>
    %cst_16 = arith.constant dense<0.000000e+00> : vector<128x128xf32>
    %26 = tpu.matmul %24, %25, %cst_16 {dimension_numbers = #tpu.dot_dimension_numbers<[1], [0], [0], [1], [0, 0, 1, 1], [], []>} : vector<128x128xbf16>, vector<128x128xbf16>, vector<128x128xf32> -> vector<128x128xf32>
    %c0_17 = arith.constant 0 : index
    %c0_18 = arith.constant 0 : index
    %27 = vector.load %arg9[%c0_17, %c0_18] : memref<1x128xf32, #tpu.memory_space<vmem>>, vector<1x128xf32>
    %28 = vector.broadcast %27 : vector<1x128xf32> to vector<128x128xf32>
    %29 = arith.addf %26, %28 : vector<128x128xf32>
    %30 = math.tanh %29 : vector<128x128xf32>
    %31 = arith.truncf %30 : vector<128x128xf32> to vector<128x128xbf16>
    %c0_19 = arith.constant 0 : index
    %c0_20 = arith.constant 0 : index
    %32 = vector.load %arg10[%c0_19, %c0_20] : memref<128x128xbf16, #tpu.memory_space<vmem>>, vector<128x128xbf16>
    %cst_21 = arith.constant dense<0.000000e+00> : vector<128x128xf32>
    %33 = tpu.matmul %31, %32, %cst_21 {dimension_numbers = #tpu.dot_dimension_numbers<[1], [0], [0], [1], [0, 0, 1, 1], [], []>} : vector<128x128xbf16>, vector<128x128xbf16>, vector<128x128xf32> -> vector<128x128xf32>
    %c0_22 = arith.constant 0 : index
    %c0_23 = arith.constant 0 : index
    %34 = vector.load %arg11[%c0_22, %c0_23] : memref<1x128xf32, #tpu.memory_space<vmem>>, vector<1x128xf32>
    %35 = vector.broadcast %34 : vector<1x128xf32> to vector<128x128xf32>
    %36 = arith.addf %33, %35 : vector<128x128xf32>
    %37 = math.tanh %36 : vector<128x128xf32>
    %38 = arith.truncf %37 : vector<128x128xf32> to vector<128x128xbf16>
    %c0_24 = arith.constant 0 : index
    %c0_25 = arith.constant 0 : index
    %39 = vector.load %arg12[%c0_24, %c0_25] : memref<128x128xbf16, #tpu.memory_space<vmem>>, vector<128x128xbf16>
    %cst_26 = arith.constant dense<0.000000e+00> : vector<128x128xf32>
    %40 = tpu.matmul %38, %39, %cst_26 {dimension_numbers = #tpu.dot_dimension_numbers<[1], [0], [0], [1], [0, 0, 1, 1], [], []>} : vector<128x128xbf16>, vector<128x128xbf16>, vector<128x128xf32> -> vector<128x128xf32>
    %c0_27 = arith.constant 0 : index
    %c0_28 = arith.constant 0 : index
    %41 = vector.load %arg13[%c0_27, %c0_28] : memref<1x128xf32, #tpu.memory_space<vmem>>, vector<1x128xf32>
    %42 = vector.broadcast %41 : vector<1x128xf32> to vector<128x128xf32>
    %43 = arith.addf %40, %42 : vector<128x128xf32>
    %44 = math.tanh %43 : vector<128x128xf32>
    %45 = arith.truncf %44 : vector<128x128xf32> to vector<128x128xbf16>
    %c0_29 = arith.constant 0 : index
    %c0_30 = arith.constant 0 : index
    %46 = vector.load %arg14[%c0_29, %c0_30] : memref<128x128xbf16, #tpu.memory_space<vmem>>, vector<128x128xbf16>
    %cst_31 = arith.constant dense<0.000000e+00> : vector<128x128xf32>
    %47 = tpu.matmul %45, %46, %cst_31 {dimension_numbers = #tpu.dot_dimension_numbers<[1], [0], [0], [1], [0, 0, 1, 1], [], []>} : vector<128x128xbf16>, vector<128x128xbf16>, vector<128x128xf32> -> vector<128x128xf32>
    %c0_32 = arith.constant 0 : index
    %c0_33 = arith.constant 0 : index
    %48 = vector.load %arg15[%c0_32, %c0_33] : memref<1x128xf32, #tpu.memory_space<vmem>>, vector<1x128xf32>
    %49 = vector.broadcast %48 : vector<1x128xf32> to vector<128x128xf32>
    %50 = arith.addf %47, %49 : vector<128x128xf32>
    %51 = math.tanh %50 : vector<128x128xf32>
    %52 = arith.truncf %51 : vector<128x128xf32> to vector<128x128xbf16>
    %c0_34 = arith.constant 0 : index
    %c0_35 = arith.constant 0 : index
    %53 = vector.load %arg16[%c0_34, %c0_35] : memref<128x128xbf16, #tpu.memory_space<vmem>>, vector<128x128xbf16>
    %cst_36 = arith.constant dense<0.000000e+00> : vector<128x128xf32>
    %54 = tpu.matmul %52, %53, %cst_36 {dimension_numbers = #tpu.dot_dimension_numbers<[1], [0], [0], [1], [0, 0, 1, 1], [], []>} : vector<128x128xbf16>, vector<128x128xbf16>, vector<128x128xf32> -> vector<128x128xf32>
    %c0_37 = arith.constant 0 : index
    %c0_38 = arith.constant 0 : index
    %55 = vector.load %arg17[%c0_37, %c0_38] : memref<1x128xf32, #tpu.memory_space<vmem>>, vector<1x128xf32>
    %56 = vector.broadcast %55 : vector<1x128xf32> to vector<128x128xf32>
    %57 = arith.addf %54, %56 : vector<128x128xf32>
    %58 = vector.extract_strided_slice %57 {offsets = [0, 0], sizes = [128, 8], strides = [1, 1]} : vector<128x128xf32> to vector<128x8xf32>
    %59 = arith.index_cast %1 : i32 to index
    %c0_39 = arith.constant 0 : index
    %60 = vector.load %arg18[%59, %c0_39] : memref<256x8xf32, #tpu.memory_space<vmem>>, vector<128x8xf32>
    tpu.vector_store %arg18[%59, %c0_39], %58 {strides = array<i32>} : memref<256x8xf32, #tpu.memory_space<vmem>>, vector<128x8xf32>,
    %c1_i32 = arith.constant 1 : i32
    %c128_i32_40 = arith.constant 128 : i32
    %61 = arith.muli %c1_i32, %c128_i32_40 : i32
    %62 = tpu.assume_multiple %61, 128 : i32
    %63 = arith.index_cast %62 : i32 to index
    %c0_41 = arith.constant 0 : index
    %64 = vector.load %arg1[%63, %c0_41] : memref<256x8xbf16, #tpu.memory_space<vmem>>, vector<128x8xbf16>
    %c0_42 = arith.constant 0 : index
    %c0_43 = arith.constant 0 : index
    %65 = vector.load %arg2[%c0_42, %c0_43] : memref<8x128xbf16, #tpu.memory_space<vmem>>, vector<8x128xbf16>
    %cst_44 = arith.constant dense<0.000000e+00> : vector<128x128xf32>
    %66 = tpu.matmul %64, %65, %cst_44 {dimension_numbers = #tpu.dot_dimension_numbers<[1], [0], [0], [1], [0, 0, 1, 1], [], []>} : vector<128x8xbf16>, vector<8x128xbf16>, vector<128x128xf32> -> vector<128x128xf32>
    %c0_45 = arith.constant 0 : index
    %c0_46 = arith.constant 0 : index
    %67 = vector.load %arg3[%c0_45, %c0_46] : memref<1x128xf32, #tpu.memory_space<vmem>>, vector<1x128xf32>
    %68 = vector.broadcast %67 : vector<1x128xf32> to vector<128x128xf32>
    %69 = arith.addf %66, %68 : vector<128x128xf32>
    %70 = math.tanh %69 : vector<128x128xf32>
    %71 = arith.truncf %70 : vector<128x128xf32> to vector<128x128xbf16>
    %c0_47 = arith.constant 0 : index
    %c0_48 = arith.constant 0 : index
    %72 = vector.load %arg4[%c0_47, %c0_48] : memref<128x128xbf16, #tpu.memory_space<vmem>>, vector<128x128xbf16>
    %cst_49 = arith.constant dense<0.000000e+00> : vector<128x128xf32>
    %73 = tpu.matmul %71, %72, %cst_49 {dimension_numbers = #tpu.dot_dimension_numbers<[1], [0], [0], [1], [0, 0, 1, 1], [], []>} : vector<128x128xbf16>, vector<128x128xbf16>, vector<128x128xf32> -> vector<128x128xf32>
    %c0_50 = arith.constant 0 : index
    %c0_51 = arith.constant 0 : index
    %74 = vector.load %arg5[%c0_50, %c0_51] : memref<1x128xf32, #tpu.memory_space<vmem>>, vector<1x128xf32>
    %75 = vector.broadcast %74 : vector<1x128xf32> to vector<128x128xf32>
    %76 = arith.addf %73, %75 : vector<128x128xf32>
    %77 = math.tanh %76 : vector<128x128xf32>
    %78 = arith.truncf %77 : vector<128x128xf32> to vector<128x128xbf16>
    %c0_52 = arith.constant 0 : index
    %c0_53 = arith.constant 0 : index
    %79 = vector.load %arg6[%c0_52, %c0_53] : memref<128x128xbf16, #tpu.memory_space<vmem>>, vector<128x128xbf16>
    %cst_54 = arith.constant dense<0.000000e+00> : vector<128x128xf32>
    %80 = tpu.matmul %78, %79, %cst_54 {dimension_numbers = #tpu.dot_dimension_numbers<[1], [0], [0], [1], [0, 0, 1, 1], [], []>} : vector<128x128xbf16>, vector<128x128xbf16>, vector<128x128xf32> -> vector<128x128xf32>
    %c0_55 = arith.constant 0 : index
    %c0_56 = arith.constant 0 : index
    %81 = vector.load %arg7[%c0_55, %c0_56] : memref<1x128xf32, #tpu.memory_space<vmem>>, vector<1x128xf32>
    %82 = vector.broadcast %81 : vector<1x128xf32> to vector<128x128xf32>
    %83 = arith.addf %80, %82 : vector<128x128xf32>
    %84 = math.tanh %83 : vector<128x128xf32>
    %85 = arith.truncf %84 : vector<128x128xf32> to vector<128x128xbf16>
    %c0_57 = arith.constant 0 : index
    %c0_58 = arith.constant 0 : index
    %86 = vector.load %arg8[%c0_57, %c0_58] : memref<128x128xbf16, #tpu.memory_space<vmem>>, vector<128x128xbf16>
    %cst_59 = arith.constant dense<0.000000e+00> : vector<128x128xf32>
    %87 = tpu.matmul %85, %86, %cst_59 {dimension_numbers = #tpu.dot_dimension_numbers<[1], [0], [0], [1], [0, 0, 1, 1], [], []>} : vector<128x128xbf16>, vector<128x128xbf16>, vector<128x128xf32> -> vector<128x128xf32>
    %c0_60 = arith.constant 0 : index
    %c0_61 = arith.constant 0 : index
    %88 = vector.load %arg9[%c0_60, %c0_61] : memref<1x128xf32, #tpu.memory_space<vmem>>, vector<1x128xf32>
    %89 = vector.broadcast %88 : vector<1x128xf32> to vector<128x128xf32>
    %90 = arith.addf %87, %89 : vector<128x128xf32>
    %91 = math.tanh %90 : vector<128x128xf32>
    %92 = arith.truncf %91 : vector<128x128xf32> to vector<128x128xbf16>
    %c0_62 = arith.constant 0 : index
    %c0_63 = arith.constant 0 : index
    %93 = vector.load %arg10[%c0_62, %c0_63] : memref<128x128xbf16, #tpu.memory_space<vmem>>, vector<128x128xbf16>
    %cst_64 = arith.constant dense<0.000000e+00> : vector<128x128xf32>
    %94 = tpu.matmul %92, %93, %cst_64 {dimension_numbers = #tpu.dot_dimension_numbers<[1], [0], [0], [1], [0, 0, 1, 1], [], []>} : vector<128x128xbf16>, vector<128x128xbf16>, vector<128x128xf32> -> vector<128x128xf32>
    %c0_65 = arith.constant 0 : index
    %c0_66 = arith.constant 0 : index
    %95 = vector.load %arg11[%c0_65, %c0_66] : memref<1x128xf32, #tpu.memory_space<vmem>>, vector<1x128xf32>
    %96 = vector.broadcast %95 : vector<1x128xf32> to vector<128x128xf32>
    %97 = arith.addf %94, %96 : vector<128x128xf32>
    %98 = math.tanh %97 : vector<128x128xf32>
    %99 = arith.truncf %98 : vector<128x128xf32> to vector<128x128xbf16>
    %c0_67 = arith.constant 0 : index
    %c0_68 = arith.constant 0 : index
    %100 = vector.load %arg12[%c0_67, %c0_68] : memref<128x128xbf16, #tpu.memory_space<vmem>>, vector<128x128xbf16>
    %cst_69 = arith.constant dense<0.000000e+00> : vector<128x128xf32>
    %101 = tpu.matmul %99, %100, %cst_69 {dimension_numbers = #tpu.dot_dimension_numbers<[1], [0], [0], [1], [0, 0, 1, 1], [], []>} : vector<128x128xbf16>, vector<128x128xbf16>, vector<128x128xf32> -> vector<128x128xf32>
    %c0_70 = arith.constant 0 : index
    %c0_71 = arith.constant 0 : index
    %102 = vector.load %arg13[%c0_70, %c0_71] : memref<1x128xf32, #tpu.memory_space<vmem>>, vector<1x128xf32>
    %103 = vector.broadcast %102 : vector<1x128xf32> to vector<128x128xf32>
    %104 = arith.addf %101, %103 : vector<128x128xf32>
    %105 = math.tanh %104 : vector<128x128xf32>
    %106 = arith.truncf %105 : vector<128x128xf32> to vector<128x128xbf16>
    %c0_72 = arith.constant 0 : index
    %c0_73 = arith.constant 0 : index
    %107 = vector.load %arg14[%c0_72, %c0_73] : memref<128x128xbf16, #tpu.memory_space<vmem>>, vector<128x128xbf16>
    %cst_74 = arith.constant dense<0.000000e+00> : vector<128x128xf32>
    %108 = tpu.matmul %106, %107, %cst_74 {dimension_numbers = #tpu.dot_dimension_numbers<[1], [0], [0], [1], [0, 0, 1, 1], [], []>} : vector<128x128xbf16>, vector<128x128xbf16>, vector<128x128xf32> -> vector<128x128xf32>
    %c0_75 = arith.constant 0 : index
    %c0_76 = arith.constant 0 : index
    %109 = vector.load %arg15[%c0_75, %c0_76] : memref<1x128xf32, #tpu.memory_space<vmem>>, vector<1x128xf32>
    %110 = vector.broadcast %109 : vector<1x128xf32> to vector<128x128xf32>
    %111 = arith.addf %108, %110 : vector<128x128xf32>
    %112 = math.tanh %111 : vector<128x128xf32>
    %113 = arith.truncf %112 : vector<128x128xf32> to vector<128x128xbf16>
    %c0_77 = arith.constant 0 : index
    %c0_78 = arith.constant 0 : index
    %114 = vector.load %arg16[%c0_77, %c0_78] : memref<128x128xbf16, #tpu.memory_space<vmem>>, vector<128x128xbf16>
    %cst_79 = arith.constant dense<0.000000e+00> : vector<128x128xf32>
    %115 = tpu.matmul %113, %114, %cst_79 {dimension_numbers = #tpu.dot_dimension_numbers<[1], [0], [0], [1], [0, 0, 1, 1], [], []>} : vector<128x128xbf16>, vector<128x128xbf16>, vector<128x128xf32> -> vector<128x128xf32>
    %c0_80 = arith.constant 0 : index
    %c0_81 = arith.constant 0 : index
    %116 = vector.load %arg17[%c0_80, %c0_81] : memref<1x128xf32, #tpu.memory_space<vmem>>, vector<1x128xf32>
    %117 = vector.broadcast %116 : vector<1x128xf32> to vector<128x128xf32>
    %118 = arith.addf %115, %117 : vector<128x128xf32>
    %119 = vector.extract_strided_slice %118 {offsets = [0, 0], sizes = [128, 8], strides = [1, 1]} : vector<128x128xf32> to vector<128x8xf32>
    %120 = arith.index_cast %62 : i32 to index
    %c0_82 = arith.constant 0 : index
    %121 = vector.load %arg18[%120, %c0_82] : memref<256x8xf32, #tpu.memory_space<vmem>>, vector<128x8xf32>
    tpu.vector_store %arg18[%120, %c0_82], %119 {strides = array<i32>} : memref<256x8xf32, #tpu.memory_space<vmem>>, vector<128x8xf32>,
    %c2_i32 = arith.constant 2 : i32
    return
  }
  func.func @transform_0(%arg0: i32) -> (i32, i32) {
    %c0_i32 = arith.constant 0 : i32
    %c0_i32_0 = arith.constant 0 : i32
    return %arg0, %c0_i32 : i32, i32
  }
  func.func @transform_1(%arg0: i32) -> (i32, i32) {
    %c0_i32 = arith.constant 0 : i32
    %c0_i32_0 = arith.constant 0 : i32
    %c0_i32_1 = arith.constant 0 : i32
    return %c0_i32, %c0_i32_0 : i32, i32
  }
  func.func @transform_2(%arg0: i32) -> (i32, i32) {
    %c0_i32 = arith.constant 0 : i32
    %c0_i32_0 = arith.constant 0 : i32
    %c0_i32_1 = arith.constant 0 : i32
    return %c0_i32, %c0_i32_0 : i32, i32
  }
  func.func @transform_3(%arg0: i32) -> (i32, i32) {
    %c0_i32 = arith.constant 0 : i32
    %c0_i32_0 = arith.constant 0 : i32
    %c0_i32_1 = arith.constant 0 : i32
    return %c0_i32, %c0_i32_0 : i32, i32
  }
  func.func @transform_4(%arg0: i32) -> (i32, i32) {
    %c0_i32 = arith.constant 0 : i32
    %c0_i32_0 = arith.constant 0 : i32
    %c0_i32_1 = arith.constant 0 : i32
    return %c0_i32, %c0_i32_0 : i32, i32
  }
  func.func @transform_5(%arg0: i32) -> (i32, i32) {
    %c0_i32 = arith.constant 0 : i32
    %c0_i32_0 = arith.constant 0 : i32
    %c0_i32_1 = arith.constant 0 : i32
    return %c0_i32, %c0_i32_0 : i32, i32
  }
  func.func @transform_6(%arg0: i32) -> (i32, i32) {
    %c0_i32 = arith.constant 0 : i32
    %c0_i32_0 = arith.constant 0 : i32
    %c0_i32_1 = arith.constant 0 : i32
    return %c0_i32, %c0_i32_0 : i32, i32
  }
  func.func @transform_7(%arg0: i32) -> (i32, i32) {
    %c0_i32 = arith.constant 0 : i32
    %c0_i32_0 = arith.constant 0 : i32
    %c0_i32_1 = arith.constant 0 : i32
    return %c0_i32, %c0_i32_0 : i32, i32
  }
  func.func @transform_8(%arg0: i32) -> (i32, i32) {
    %c0_i32 = arith.constant 0 : i32
    %c0_i32_0 = arith.constant 0 : i32
    %c0_i32_1 = arith.constant 0 : i32
    return %c0_i32, %c0_i32_0 : i32, i32
  }
  func.func @transform_9(%arg0: i32) -> (i32, i32) {
    %c0_i32 = arith.constant 0 : i32
    %c0_i32_0 = arith.constant 0 : i32
    %c0_i32_1 = arith.constant 0 : i32
    return %c0_i32, %c0_i32_0 : i32, i32
  }
  func.func @transform_10(%arg0: i32) -> (i32, i32) {
    %c0_i32 = arith.constant 0 : i32
    %c0_i32_0 = arith.constant 0 : i32
    %c0_i32_1 = arith.constant 0 : i32
    return %c0_i32, %c0_i32_0 : i32, i32
  }
  func.func @transform_11(%arg0: i32) -> (i32, i32) {
    %c0_i32 = arith.constant 0 : i32
    %c0_i32_0 = arith.constant 0 : i32
    %c0_i32_1 = arith.constant 0 : i32
    return %c0_i32, %c0_i32_0 : i32, i32
  }
  func.func @transform_12(%arg0: i32) -> (i32, i32) {
    %c0_i32 = arith.constant 0 : i32
    %c0_i32_0 = arith.constant 0 : i32
    %c0_i32_1 = arith.constant 0 : i32
    return %c0_i32, %c0_i32_0 : i32, i32
  }
  func.func @transform_13(%arg0: i32) -> (i32, i32) {
    %c0_i32 = arith.constant 0 : i32
    %c0_i32_0 = arith.constant 0 : i32
    %c0_i32_1 = arith.constant 0 : i32
    return %c0_i32, %c0_i32_0 : i32, i32
  }
  func.func @transform_14(%arg0: i32) -> (i32, i32) {
    %c0_i32 = arith.constant 0 : i32
    %c0_i32_0 = arith.constant 0 : i32
    %c0_i32_1 = arith.constant 0 : i32
    return %c0_i32, %c0_i32_0 : i32, i32
  }
  func.func @transform_15(%arg0: i32) -> (i32, i32) {
    %c0_i32 = arith.constant 0 : i32
    %c0_i32_0 = arith.constant 0 : i32
    %c0_i32_1 = arith.constant 0 : i32
    return %c0_i32, %c0_i32_0 : i32, i32
  }
  func.func @transform_16(%arg0: i32) -> (i32, i32) {
    %c0_i32 = arith.constant 0 : i32
    %c0_i32_0 = arith.constant 0 : i32
    %c0_i32_1 = arith.constant 0 : i32
    return %c0_i32, %c0_i32_0 : i32, i32
  }
  func.func @transform_17(%arg0: i32) -> (i32, i32) {
    %c0_i32 = arith.constant 0 : i32
    %c0_i32_0 = arith.constant 0 : i32
    return %arg0, %c0_i32 : i32, i32
  }
}

</mosaic_0001>

<llo_original>
// kernel: _lambda_.1
$region0: #{_lambda_.1}
  #allocation0 [shape = 'u32[]', space=smem, size = 0x4, offset = 0x4, fixed_abs, tag = 'smem constant byte address 0x4 - core index']
  #allocation1 [shape = 'u32[144,128]{1,0:T(1,128)}', space=vmem, size = 0x12000, scoped, tag = 'internal scratch']
  %s0 = inlined_call_operand.vmem [shape: bf16[512,8], index: 0, kind: input, shape index: {}]
  %s1 = inlined_call_operand.vmem [shape: bf16[8,128], index: 1, kind: input, shape index: {}]
  %s2 = inlined_call_operand.vmem [shape: f32[1,128], index: 2, kind: input, shape index: {}]
  %s3 = inlined_call_operand.vmem [shape: bf16[128,128], index: 3, kind: input, shape index: {}]
  %s4 = inlined_call_operand.vmem [shape: f32[1,128], index: 4, kind: input, shape index: {}]
  %s5 = inlined_call_operand.vmem [shape: bf16[128,128], index: 5, kind: input, shape index: {}]
  %s6 = inlined_call_operand.vmem [shape: f32[1,128], index: 6, kind: input, shape index: {}]
  %s7 = inlined_call_operand.vmem [shape: bf16[128,128], index: 7, kind: input, shape index: {}]
  %s8 = inlined_call_operand.vmem [shape: f32[1,128], index: 8, kind: input, shape index: {}]
  %s9 = inlined_call_operand.vmem [shape: bf16[128,128], index: 9, kind: input, shape index: {}]
  %s10 = inlined_call_operand.vmem [shape: f32[1,128], index: 10, kind: input, shape index: {}]
  %s11 = inlined_call_operand.vmem [shape: bf16[128,128], index: 11, kind: input, shape index: {}]
  %s12 = inlined_call_operand.vmem [shape: f32[1,128], index: 12, kind: input, shape index: {}]
  %s13 = inlined_call_operand.vmem [shape: bf16[128,128], index: 13, kind: input, shape index: {}]
  %s14 = inlined_call_operand.vmem [shape: f32[1,128], index: 14, kind: input, shape index: {}]
  %s15 = inlined_call_operand.vmem [shape: bf16[128,128], index: 15, kind: input, shape index: {}]
  %s16 = inlined_call_operand.vmem [shape: f32[1,128], index: 16, kind: input, shape index: {}]
  %s17 = inlined_call_operand.vmem [shape: f32[512,8], index: 17, kind: output, shape index: {}]
  %s18 = sld [smem:[#allocation0]]
  $region101: #{_lambda_.1} parent=0
    _
  %s20 = ssub.s32 1, %s18
  %s21 = scalar_select 0, %s20, %s18
  loop: start=0, step=1, limit=4
  $region2: #{_lambda_.1} parent=0 // loop_pre_header
    _
  $region3: #{_lambda_.1} parent=0 // loop_header
    %s23 = sphi 0, %s27
    %p24 = scmp.ge.s32.totalorder %s23, 4
    %s33 = sphi 0, %s35
    %s36 = sphi 0, %s33
    %s37 = sphi 0, %s36
    %s53 = sphi 0, %s37
    %s57 = sphi 0, %s57
    %s59 = sphi 0, %s57
    %s60 = sphi 0, %s59
    %s74 = sphi 0, %s60
    %s78 = sphi 0, %s78
    %s80 = sphi 0, %s78
    %s81 = sphi 0, %s80
    %s95 = sphi 0, %s81
    %s99 = sphi 0, %s99
    %s101 = sphi 0, %s99
    %s102 = sphi 0, %s101
    %s116 = sphi 0, %s102
    %s120 = sphi 0, %s120
    %s122 = sphi 0, %s120
    %s123 = sphi 0, %s122
    %s137 = sphi 0, %s123
    %s141 = sphi 0, %s141
    %s143 = sphi 0, %s141
    %s144 = sphi 0, %s143
    %s158 = sphi 0, %s144
    %s162 = sphi 0, %s162
    %s164 = sphi 0, %s162
    %s165 = sphi 0, %s164
    %s179 = sphi 0, %s165
    %s183 = sphi 0, %s183
    %s185 = sphi 0, %s183
    %s186 = sphi 0, %s185
    %s200 = sphi 0, %s186
    %s204 = sphi 0, %s204
    %s206 = sphi 0, %s204
    %s207 = sphi 0, %s206
    %s221 = sphi 0, %s207
    %s225 = sphi 0, %s225
    %s227 = sphi 0, %s225
    %s228 = sphi 0, %s227
    %s242 = sphi 0, %s228
    %s246 = sphi 0, %s246
    %s248 = sphi 0, %s246
    %s249 = sphi 0, %s248
    %s263 = sphi 0, %s249
    %s267 = sphi 0, %s267
    %s269 = sphi 0, %s267
    %s270 = sphi 0, %s269
    %s284 = sphi 0, %s270
    %s288 = sphi 0, %s288
    %s290 = sphi 0, %s288
    %s291 = sphi 0, %s290
    %s305 = sphi 0, %s291
    %s309 = sphi 0, %s309
    %s311 = sphi 0, %s309
    %s312 = sphi 0, %s311
    %s326 = sphi 0, %s312
    %s330 = sphi 0, %s330
    %s332 = sphi 0, %s330
    %s333 = sphi 0, %s332
    %s347 = sphi 0, %s333
    %s351 = sphi 0, %s351
    %s353 = sphi 0, %s351
    %s354 = sphi 0, %s353
    %s368 = sphi 0, %s354
    %s372 = sphi 0, %s372
    %s374 = sphi 0, %s372
    %s375 = sphi 0, %s374
    %s389 = sphi 0, %s375
    %s395 = sphi 0, %s397
    %s398 = sphi 0, %s395
    %s399 = sphi 0, %s398
    %s415 = sphi 0, %s399
  $region4: #{_lambda_.1} parent=0 // loop_header_branch
    %26 = sbr.rel (%p24) target = $region8
  $region5: #{_lambda_.1} parent=0 // loop_body
    %s28 = ssub.s32 %s23, 1
    %s29 = ssub.s32 %s23, 2
    %s30 = sadd.s32 %s23, 1
    %s31 = ssub.s32 %s23, %s30
    %p32 = scmp.eq.s32.totalorder %s31, 0
    %s34 = sadd.s32 %s33, 1
    %s35 = scalar_select %p32, %s33, %s34
    %p38 = pneg %p32
    %p39 = scmp.eq.s32.totalorder %s23, 1
    %p40 = por %p38, %p39
    %p41 = scmp.ne.s32.totalorder %s33, %s36
    %p42 = scmp.eq.s32.totalorder %s23, 0
    %p43 = por %p41, %p42
    %p44 = scmp.ne.s32.totalorder %s33, %s36
    %p45 = scmp.eq.s32.totalorder %s28, 1
    %p46 = por %p44, %p45
    %p47 = scmp.ne.s32.totalorder %s36, %s37
    %p48 = scmp.eq.s32.totalorder %s28, 0
    %p49 = por %p47, %p48
    %p50 = scmp.ne.s32.totalorder %s36, %s37
    %p51 = scmp.eq.s32.totalorder %s29, 1
    %p52 = por %p50, %p51
    %p54 = scmp.ne.s32.totalorder %s37, %s53
    %p55 = scmp.eq.s32.totalorder %s29, 0
    %p56 = por %p54, %p55
    %s58 = sadd.s32 %s57, 1
    %p61 = scmp.eq.s32.totalorder %s23, 1
    %p62 = scmp.ne.s32.totalorder %s57, %s59
    %p63 = scmp.eq.s32.totalorder %s23, 0
    %p64 = por %p62, %p63
    %p65 = scmp.ne.s32.totalorder %s57, %s59
    %p66 = scmp.eq.s32.totalorder %s28, 1
    %p67 = por %p65, %p66
    %p68 = scmp.ne.s32.totalorder %s59, %s60
    %p69 = scmp.eq.s32.totalorder %s28, 0
    %p70 = por %p68, %p69
    %p71 = scmp.ne.s32.totalorder %s59, %s60
    %p72 = scmp.eq.s32.totalorder %s29, 1
    %p73 = por %p71, %p72
    %p75 = scmp.ne.s32.totalorder %s60, %s74
    %p76 = scmp.eq.s32.totalorder %s29, 0
    %p77 = por %p75, %p76
    %s79 = sadd.s32 %s78, 1
    %p82 = scmp.eq.s32.totalorder %s23, 1
    %p83 = scmp.ne.s32.totalorder %s78, %s80
    %p84 = scmp.eq.s32.totalorder %s23, 0
    %p85 = por %p83, %p84
    %p86 = scmp.ne.s32.totalorder %s78, %s80
    %p87 = scmp.eq.s32.totalorder %s28, 1
    %p88 = por %p86, %p87
    %p89 = scmp.ne.s32.totalorder %s80, %s81
    %p90 = scmp.eq.s32.totalorder %s28, 0
    %p91 = por %p89, %p90
    %p92 = scmp.ne.s32.totalorder %s80, %s81
    %p93 = scmp.eq.s32.totalorder %s29, 1
    %p94 = por %p92, %p93
    %p96 = scmp.ne.s32.totalorder %s81, %s95
    %p97 = scmp.eq.s32.totalorder %s29, 0
    %p98 = por %p96, %p97
    %s100 = sadd.s32 %s99, 1
    %p103 = scmp.eq.s32.totalorder %s23, 1
    %p104 = scmp.ne.s32.totalorder %s99, %s101
    %p105 = scmp.eq.s32.totalorder %s23, 0
    %p106 = por %p104, %p105
    %p107 = scmp.ne.s32.totalorder %s99, %s101
    %p108 = scmp.eq.s32.totalorder %s28, 1
    %p109 = por %p107, %p108
    %p110 = scmp.ne.s32.totalorder %s101, %s102
    %p111 = scmp.eq.s32.totalorder %s28, 0
    %p112 = por %p110, %p111
    %p113 = scmp.ne.s32.totalorder %s101, %s102
    %p114 = scmp.eq.s32.totalorder %s29, 1
    %p115 = por %p113, %p114
    %p117 = scmp.ne.s32.totalorder %s102, %s116
    %p118 = scmp.eq.s32.totalorder %s29, 0
    %p119 = por %p117, %p118
    %s121 = sadd.s32 %s120, 1
    %p124 = scmp.eq.s32.totalorder %s23, 1
    %p125 = scmp.ne.s32.totalorder %s120, %s122
    %p126 = scmp.eq.s32.totalorder %s23, 0
    %p127 = por %p125, %p126
    %p128 = scmp.ne.s32.totalorder %s120, %s122
    %p129 = scmp.eq.s32.totalorder %s28, 1
    %p130 = por %p128, %p129
    %p131 = scmp.ne.s32.totalorder %s122, %s123
    %p132 = scmp.eq.s32.totalorder %s28, 0
    %p133 = por %p131, %p132
    %p134 = scmp.ne.s32.totalorder %s122, %s123
    %p135 = scmp.eq.s32.totalorder %s29, 1
    %p136 = por %p134, %p135
    %p138 = scmp.ne.s32.totalorder %s123, %s137
    %p139 = scmp.eq.s32.totalorder %s29, 0
    %p140 = por %p138, %p139
    %s142 = sadd.s32 %s141, 1
    %p145 = scmp.eq.s32.totalorder %s23, 1
    %p146 = scmp.ne.s32.totalorder %s141, %s143
    %p147 = scmp.eq.s32.totalorder %s23, 0
    %p148 = por %p146, %p147
    %p149 = scmp.ne.s32.totalorder %s141, %s143
    %p150 = scmp.eq.s32.totalorder %s28, 1
    %p151 = por %p149, %p150
    %p152 = scmp.ne.s32.totalorder %s143, %s144
    %p153 = scmp.eq.s32.totalorder %s28, 0
    %p154 = por %p152, %p153
    %p155 = scmp.ne.s32.totalorder %s143, %s144
    %p156 = scmp.eq.s32.totalorder %s29, 1
    %p157 = por %p155, %p156
    %p159 = scmp.ne.s32.totalorder %s144, %s158
    %p160 = scmp.eq.s32.totalorder %s29, 0
    %p161 = por %p159, %p160
    %s163 = sadd.s32 %s162, 1
    %p166 = scmp.eq.s32.totalorder %s23, 1
    %p167 = scmp.ne.s32.totalorder %s162, %s164
    %p168 = scmp.eq.s32.totalorder %s23, 0
    %p169 = por %p167, %p168
    %p170 = scmp.ne.s32.totalorder %s162, %s164
    %p171 = scmp.eq.s32.totalorder %s28, 1
    %p172 = por %p170, %p171
    %p173 = scmp.ne.s32.totalorder %s164, %s165
    %p174 = scmp.eq.s32.totalorder %s28, 0
    %p175 = por %p173, %p174
    %p176 = scmp.ne.s32.totalorder %s164, %s165
    %p177 = scmp.eq.s32.totalorder %s29, 1
    %p178 = por %p176, %p177
    %p180 = scmp.ne.s32.totalorder %s165, %s179
    %p181 = scmp.eq.s32.totalorder %s29, 0
    %p182 = por %p180, %p181
    %s184 = sadd.s32 %s183, 1
    %p187 = scmp.eq.s32.totalorder %s23, 1
    %p188 = scmp.ne.s32.totalorder %s183, %s185
    %p189 = scmp.eq.s32.totalorder %s23, 0
    %p190 = por %p188, %p189
    %p191 = scmp.ne.s32.totalorder %s183, %s185
    %p192 = scmp.eq.s32.totalorder %s28, 1
    %p193 = por %p191, %p192
    %p194 = scmp.ne.s32.totalorder %s185, %s186
    %p195 = scmp.eq.s32.totalorder %s28, 0
    %p196 = por %p194, %p195
    %p197 = scmp.ne.s32.totalorder %s185, %s186
    %p198 = scmp.eq.s32.totalorder %s29, 1
    %p199 = por %p197, %p198
    %p201 = scmp.ne.s32.totalorder %s186, %s200
    %p202 = scmp.eq.s32.totalorder %s29, 0
    %p203 = por %p201, %p202
    %s205 = sadd.s32 %s204, 1
    %p208 = scmp.eq.s32.totalorder %s23, 1
    %p209 = scmp.ne.s32.totalorder %s204, %s206
    %p210 = scmp.eq.s32.totalorder %s23, 0
    %p211 = por %p209, %p210
    %p212 = scmp.ne.s32.totalorder %s204, %s206
    %p213 = scmp.eq.s32.totalorder %s28, 1
    %p214 = por %p212, %p213
    %p215 = scmp.ne.s32.totalorder %s206, %s207
    %p216 = scmp.eq.s32.totalorder %s28, 0
    %p217 = por %p215, %p216
    %p218 = scmp.ne.s32.totalorder %s206, %s207
    %p219 = scmp.eq.s32.totalorder %s29, 1
    %p220 = por %p218, %p219
    %p222 = scmp.ne.s32.totalorder %s207, %s221
    %p223 = scmp.eq.s32.totalorder %s29, 0
    %p224 = por %p222, %p223
    %s226 = sadd.s32 %s225, 1
    %p229 = scmp.eq.s32.totalorder %s23, 1
    %p230 = scmp.ne.s32.totalorder %s225, %s227
    %p231 = scmp.eq.s32.totalorder %s23, 0
    %p232 = por %p230, %p231
    %p233 = scmp.ne.s32.totalorder %s225, %s227
    %p234 = scmp.eq.s32.totalorder %s28, 1
    %p235 = por %p233, %p234
    %p236 = scmp.ne.s32.totalorder %s227, %s228
    %p237 = scmp.eq.s32.totalorder %s28, 0
    %p238 = por %p236, %p237
    %p239 = scmp.ne.s32.totalorder %s227, %s228
    %p240 = scmp.eq.s32.totalorder %s29, 1
    %p241 = por %p239, %p240
    %p243 = scmp.ne.s32.totalorder %s228, %s242
    %p244 = scmp.eq.s32.totalorder %s29, 0
    %p245 = por %p243, %p244
    %s247 = sadd.s32 %s246, 1
    %p250 = scmp.eq.s32.totalorder %s23, 1
    %p251 = scmp.ne.s32.totalorder %s246, %s248
    %p252 = scmp.eq.s32.totalorder %s23, 0
    %p253 = por %p251, %p252
    %p254 = scmp.ne.s32.totalorder %s246, %s248
    %p255 = scmp.eq.s32.totalorder %s28, 1
    %p256 = por %p254, %p255
    %p257 = scmp.ne.s32.totalorder %s248, %s249
    %p258 = scmp.eq.s32.totalorder %s28, 0
    %p259 = por %p257, %p258
    %p260 = scmp.ne.s32.totalorder %s248, %s249
    %p261 = scmp.eq.s32.totalorder %s29, 1
    %p262 = por %p260, %p261
    %p264 = scmp.ne.s32.totalorder %s249, %s263
    %p265 = scmp.eq.s32.totalorder %s29, 0
    %p266 = por %p264, %p265
    %s268 = sadd.s32 %s267, 1
    %p271 = scmp.eq.s32.totalorder %s23, 1
    %p272 = scmp.ne.s32.totalorder %s267, %s269
    %p273 = scmp.eq.s32.totalorder %s23, 0
    %p274 = por %p272, %p273
    %p275 = scmp.ne.s32.totalorder %s267, %s269
    %p276 = scmp.eq.s32.totalorder %s28, 1
    %p277 = por %p275, %p276
    %p278 = scmp.ne.s32.totalorder %s269, %s270
    %p279 = scmp.eq.s32.totalorder %s28, 0
    %p280 = por %p278, %p279
    %p281 = scmp.ne.s32.totalorder %s269, %s270
    %p282 = scmp.eq.s32.totalorder %s29, 1
    %p283 = por %p281, %p282
    %p285 = scmp.ne.s32.totalorder %s270, %s284
    %p286 = scmp.eq.s32.totalorder %s29, 0
    %p287 = por %p285, %p286
    %s289 = sadd.s32 %s288, 1
    %p292 = scmp.eq.s32.totalorder %s23, 1
    %p293 = scmp.ne.s32.totalorder %s288, %s290
    %p294 = scmp.eq.s32.totalorder %s23, 0
    %p295 = por %p293, %p294
    %p296 = scmp.ne.s32.totalorder %s288, %s290
    %p297 = scmp.eq.s32.totalorder %s28, 1
    %p298 = por %p296, %p297
    %p299 = scmp.ne.s32.totalorder %s290, %s291
    %p300 = scmp.eq.s32.totalorder %s28, 0
    %p301 = por %p299, %p300
    %p302 = scmp.ne.s32.totalorder %s290, %s291
    %p303 = scmp.eq.s32.totalorder %s29, 1
    %p304 = por %p302, %p303
    %p306 = scmp.ne.s32.totalorder %s291, %s305
    %p307 = scmp.eq.s32.totalorder %s29, 0
    %p308 = por %p306, %p307
    %s310 = sadd.s32 %s309, 1
    %p313 = scmp.eq.s32.totalorder %s23, 1
    %p314 = scmp.ne.s32.totalorder %s309, %s311
    %p315 = scmp.eq.s32.totalorder %s23, 0
    %p316 = por %p314, %p315
    %p317 = scmp.ne.s32.totalorder %s309, %s311
    %p318 = scmp.eq.s32.totalorder %s28, 1
    %p319 = por %p317, %p318
    %p320 = scmp.ne.s32.totalorder %s311, %s312
    %p321 = scmp.eq.s32.totalorder %s28, 0
    %p322 = por %p320, %p321
    %p323 = scmp.ne.s32.totalorder %s311, %s312
    %p324 = scmp.eq.s32.totalorder %s29, 1
    %p325 = por %p323, %p324
    %p327 = scmp.ne.s32.totalorder %s312, %s326
    %p328 = scmp.eq.s32.totalorder %s29, 0
    %p329 = por %p327, %p328
    %s331 = sadd.s32 %s330, 1
    %p334 = scmp.eq.s32.totalorder %s23, 1
    %p335 = scmp.ne.s32.totalorder %s330, %s332
    %p336 = scmp.eq.s32.totalorder %s23, 0
    %p337 = por %p335, %p336
    %p338 = scmp.ne.s32.totalorder %s330, %s332
    %p339 = scmp.eq.s32.totalorder %s28, 1
    %p340 = por %p338, %p339
    %p341 = scmp.ne.s32.totalorder %s332, %s333
    %p342 = scmp.eq.s32.totalorder %s28, 0
    %p343 = por %p341, %p342
    %p344 = scmp.ne.s32.totalorder %s332, %s333
    %p345 = scmp.eq.s32.totalorder %s29, 1
    %p346 = por %p344, %p345
    %p348 = scmp.ne.s32.totalorder %s333, %s347
    %p349 = scmp.eq.s32.totalorder %s29, 0
    %p350 = por %p348, %p349
    %s352 = sadd.s32 %s351, 1
    %p355 = scmp.eq.s32.totalorder %s23, 1
    %p356 = scmp.ne.s32.totalorder %s351, %s353
    %p357 = scmp.eq.s32.totalorder %s23, 0
    %p358 = por %p356, %p357
    %p359 = scmp.ne.s32.totalorder %s351, %s353
    %p360 = scmp.eq.s32.totalorder %s28, 1
    %p361 = por %p359, %p360
    %p362 = scmp.ne.s32.totalorder %s353, %s354
    %p363 = scmp.eq.s32.totalorder %s28, 0
    %p364 = por %p362, %p363
    %p365 = scmp.ne.s32.totalorder %s353, %s354
    %p366 = scmp.eq.s32.totalorder %s29, 1
    %p367 = por %p365, %p366
    %p369 = scmp.ne.s32.totalorder %s354, %s368
    %p370 = scmp.eq.s32.totalorder %s29, 0
    %p371 = por %p369, %p370
    %s373 = sadd.s32 %s372, 1
    %p376 = scmp.eq.s32.totalorder %s23, 1
    %p377 = scmp.ne.s32.totalorder %s372, %s374
    %p378 = scmp.eq.s32.totalorder %s23, 0
    %p379 = por %p377, %p378
    %p380 = scmp.ne.s32.totalorder %s372, %s374
    %p381 = scmp.eq.s32.totalorder %s28, 1
    %p382 = por %p380, %p381
    %p383 = scmp.ne.s32.totalorder %s374, %s375
    %p384 = scmp.eq.s32.totalorder %s28, 0
    %p385 = por %p383, %p384
    %p386 = scmp.ne.s32.totalorder %s374, %s375
    %p387 = scmp.eq.s32.totalorder %s29, 1
    %p388 = por %p386, %p387
    %p390 = scmp.ne.s32.totalorder %s375, %s389
    %p391 = scmp.eq.s32.totalorder %s29, 0
    %p392 = por %p390, %p391
    %s393 = ssub.s32 %s23, %s30
    %p394 = scmp.eq.s32.totalorder %s393, 0
    %s396 = sadd.s32 %s395, 1
    %s397 = scalar_select %p394, %s395, %s396
    %p400 = pneg %p394
    %p401 = scmp.eq.s32.totalorder %s23, 1
    %p402 = por %p400, %p401
    %p403 = scmp.ne.s32.totalorder %s395, %s398
    %p404 = scmp.eq.s32.totalorder %s23, 0
    %p405 = por %p403, %p404
    %p406 = scmp.ne.s32.totalorder %s395, %s398
    %p407 = scmp.eq.s32.totalorder %s28, 1
    %p408 = por %p406, %p407
    %p409 = scmp.ne.s32.totalorder %s398, %s399
    %p410 = scmp.eq.s32.totalorder %s28, 0
    %p411 = por %p409, %p410
    %p412 = scmp.ne.s32.totalorder %s398, %s399
    %p413 = scmp.eq.s32.totalorder %s29, 1
    %p414 = por %p412, %p413
    %p416 = scmp.ne.s32.totalorder %s399, %s415
    %p417 = scmp.eq.s32.totalorder %s29, 0
    %p418 = por %p416, %p417
    %p419 = scmp.le.s32.totalorder 1, %s23
    %p420 = scmp.lt.s32.totalorder %s23, 3
    %p421 = pnand %p419, %p420
    %p422 = pneg %p421
    // Predicated region
    $region9: #{_lambda_.1} parent=5 // pred_check
      _
    $region10: #{_lambda_.1} parent=5 // pred_check_branch
      %424 = sbr.rel (%p421) target = $region12
    $region11: #{_lambda_.1} parent=5 // pred_region
      %s425 = ssub.s32 %s23, 1
      // Predicated region
      $region13: #{_lambda_.1} parent=11 // pred_check
        %p426 = pneg %p70
      $region14: #{_lambda_.1} parent=11 // pred_check_branch
        %428 = sbr.rel (%p426) target = $region16
      $region15: #{_lambda_.1} parent=11 // pred_region
        _
      $region16: #{_lambda_.1} parent=11 // pred_fallthru
        _
      // Predicated region
      $region17: #{_lambda_.1} parent=11 // pred_check
        %p429 = pneg %p91
      $region18: #{_lambda_.1} parent=11 // pred_check_branch
        %431 = sbr.rel (%p429) target = $region20
      $region19: #{_lambda_.1} parent=11 // pred_region
        _
      $region20: #{_lambda_.1} parent=11 // pred_fallthru
        _
      // Predicated region
      $region21: #{_lambda_.1} parent=11 // pred_check
        %p432 = pneg %p112
      $region22: #{_lambda_.1} parent=11 // pred_check_branch
        %434 = sbr.rel (%p432) target = $region24
      $region23: #{_lambda_.1} parent=11 // pred_region
        _
      $region24: #{_lambda_.1} parent=11 // pred_fallthru
        _
      // Predicated region
      $region25: #{_lambda_.1} parent=11 // pred_check
        %p435 = pneg %p133
      $region26: #{_lambda_.1} parent=11 // pred_check_branch
        %437 = sbr.rel (%p435) target = $region28
      $region27: #{_lambda_.1} parent=11 // pred_region
        _
      $region28: #{_lambda_.1} parent=11 // pred_fallthru
        _
      // Predicated region
      $region29: #{_lambda_.1} parent=11 // pred_check
        %p438 = pneg %p154
      $region30: #{_lambda_.1} parent=11 // pred_check_branch
        %440 = sbr.rel (%p438) target = $region32
      $region31: #{_lambda_.1} parent=11 // pred_region
        _
      $region32: #{_lambda_.1} parent=11 // pred_fallthru
        _
      // Predicated region
      $region33: #{_lambda_.1} parent=11 // pred_check
        %p441 = pneg %p175
      $region34: #{_lambda_.1} parent=11 // pred_check_branch
        %443 = sbr.rel (%p441) target = $region36
      $region35: #{_lambda_.1} parent=11 // pred_region
        _
      $region36: #{_lambda_.1} parent=11 // pred_fallthru
        _
      // Predicated region
      $region37: #{_lambda_.1} parent=11 // pred_check
        %p444 = pneg %p196
      $region38: #{_lambda_.1} parent=11 // pred_check_branch
        %446 = sbr.rel (%p444) target = $region40
      $region39: #{_lambda_.1} parent=11 // pred_region
        _
      $region40: #{_lambda_.1} parent=11 // pred_fallthru
        _
      // Predicated region
      $region41: #{_lambda_.1} parent=11 // pred_check
        %p447 = pneg %p217
      $region42: #{_lambda_.1} parent=11 // pred_check_branch
        %449 = sbr.rel (%p447) target = $region44
      $region43: #{_lambda_.1} parent=11 // pred_region
        _
      $region44: #{_lambda_.1} parent=11 // pred_fallthru
        _
      // Predicated region
      $region45: #{_lambda_.1} parent=11 // pred_check
        %p450 = pneg %p238
      $region46: #{_lambda_.1} parent=11 // pred_check_branch
        %452 = sbr.rel (%p450) target = $region48
      $region47: #{_lambda_.1} parent=11 // pred_region
        _
      $region48: #{_lambda_.1} parent=11 // pred_fallthru
        _
      // Predicated region
      $region49: #{_lambda_.1} parent=11 // pred_check
        %p453 = pneg %p259
      $region50: #{_lambda_.1} parent=11 // pred_check_branch
        %455 = sbr.rel (%p453) target = $region52
      $region51: #{_lambda_.1} parent=11 // pred_region
        _
      $region52: #{_lambda_.1} parent=11 // pred_fallthru
        _
      // Predicated region
      $region53: #{_lambda_.1} parent=11 // pred_check
        %p456 = pneg %p280
      $region54: #{_lambda_.1} parent=11 // pred_check_branch
        %458 = sbr.rel (%p456) target = $region56
      $region55: #{_lambda_.1} parent=11 // pred_region
        _
      $region56: #{_lambda_.1} parent=11 // pred_fallthru
        _
      // Predicated region
      $region57: #{_lambda_.1} parent=11 // pred_check
        %p459 = pneg %p301
      $region58: #{_lambda_.1} parent=11 // pred_check_branch
        %461 = sbr.rel (%p459) target = $region60
      $region59: #{_lambda_.1} parent=11 // pred_region
        _
      $region60: #{_lambda_.1} parent=11 // pred_fallthru
        _
      // Predicated region
      $region61: #{_lambda_.1} parent=11 // pred_check
        %p462 = pneg %p322
      $region62: #{_lambda_.1} parent=11 // pred_check_branch
        %464 = sbr.rel (%p462) target = $region64
      $region63: #{_lambda_.1} parent=11 // pred_region
        _
      $region64: #{_lambda_.1} parent=11 // pred_fallthru
        _
      // Predicated region
      $region65: #{_lambda_.1} parent=11 // pred_check
        %p465 = pneg %p343
      $region66: #{_lambda_.1} parent=11 // pred_check_branch
        %467 = sbr.rel (%p465) target = $region68
      $region67: #{_lambda_.1} parent=11 // pred_region
        _
      $region68: #{_lambda_.1} parent=11 // pred_fallthru
        _
      // Predicated region
      $region69: #{_lambda_.1} parent=11 // pred_check
        %p468 = pneg %p364
      $region70: #{_lambda_.1} parent=11 // pred_check_branch
        %470 = sbr.rel (%p468) target = $region72
      $region71: #{_lambda_.1} parent=11 // pred_region
        _
      $region72: #{_lambda_.1} parent=11 // pred_fallthru
        _
      // Predicated region
      $region73: #{_lambda_.1} parent=11 // pred_check
        %p471 = pneg %p385
      $region74: #{_lambda_.1} parent=11 // pred_check_branch
        %473 = sbr.rel (%p471) target = $region76
      $region75: #{_lambda_.1} parent=11 // pred_region
        _
      $region76: #{_lambda_.1} parent=11 // pred_fallthru
        _
    $region12: #{_lambda_.1} parent=5 // pred_fallthru
      _
    %p474 = scmp.lt.s32.totalorder %s23, 2
    // Predicated region
    $region77: #{_lambda_.1} parent=5 // pred_check
      %p475 = pneg %p474
    $region78: #{_lambda_.1} parent=5 // pred_check_branch
      %477 = sbr.rel (%p475) target = $region80
    $region79: #{_lambda_.1} parent=5 // pred_region
      // Predicated region
      $region81: #{_lambda_.1} parent=79 // pred_check
        %p478 = pneg %p43
      $region82: #{_lambda_.1} parent=79 // pred_check_branch
        %480 = sbr.rel (%p478) target = $region84
      $region83: #{_lambda_.1} parent=79 // pred_region
        %s481 = smul.u32 32, %s23
        %p482 = scmp.lt.s32.totalorder %s481, 63
        %s483 = scalar_select %p482, %s481, 63
        %s484 = smul.addr %s483, 4
        %s485 = scalar_lea.vmem %s0, %s484
        %s486 = smul.u32 32, %s23
      $region84: #{_lambda_.1} parent=79 // pred_fallthru
        _
    $region80: #{_lambda_.1} parent=5 // pred_fallthru
      _
    %p487 = scmp.le.s32.totalorder 1, %s23
    %p488 = scmp.lt.s32.totalorder %s23, 3
    %p489 = pnand %p487, %p488
    %p490 = pneg %p489
    // Predicated region
    $region85: #{_lambda_.1} parent=5 // pred_check
      _
    $region86: #{_lambda_.1} parent=5 // pred_check_branch
      %492 = sbr.rel (%p489) target = $region88
    $region87: #{_lambda_.1} parent=5 // pred_region
      %s493 = ssub.s32 %s23, 1
      %s494 = smul.u32 32, %s28
      %p495 = scmp.lt.s32.totalorder %s494, 63
      %s496 = scalar_select %p495, %s494, 63
      %s497 = smul.addr %s496, 4
      %s498 = scalar_lea.vmem %s0, %s497
      %p499 = pneg %p49
      %p500 = pneg %p46
      %p501 = pneg %p70
      %p502 = pneg %p67
      %p503 = pneg %p91
      %p504 = pneg %p88
      %p505 = pneg %p112
      %p506 = pneg %p109
      %p507 = pneg %p133
      %p508 = pneg %p130
      %p509 = pneg %p154
      %p510 = pneg %p151
      %p511 = pneg %p175
      %p512 = pneg %p172
      %p513 = pneg %p196
      %p514 = pneg %p193
      %p515 = pneg %p217
      %p516 = pneg %p214
      %p517 = pneg %p238
      %p518 = pneg %p235
      %p519 = pneg %p259
      %p520 = pneg %p256
      %p521 = pneg %p280
      %p522 = pneg %p277
      %p523 = pneg %p301
      %p524 = pneg %p298
      %p525 = pneg %p322
      %p526 = pneg %p319
      %p527 = pneg %p343
      %p528 = pneg %p340
      %p529 = pneg %p364
      %p530 = pneg %p361
      %p531 = pneg %p385
      %p532 = pneg %p382
      %p533 = pneg %p411
      %p534 = pneg %p408
      %s535 = smul.u32 32, %s28
      %p536 = scmp.lt.s32.totalorder %s535, 63
      %s537 = scalar_select %p536, %s535, 63
      %s538 = smul.addr %s537, 8
      %s539 = scalar_lea.vmem %s17, %s538
      %s540 = smul.u32 32, %s28
      %p541 = scmp.lt.s32.totalorder %s540, 63
      %s542 = scalar_select %p541, %s540, 63
      %s543 = smul.addr %s542, 4
      %s544 = scalar_lea.vmem %s0, %s543
      %s545 = smul.u32 32, %s28
      %s546 = smul.u32 32, %s28
      %p547 = scmp.lt.s32.totalorder %s546, 63
      %s548 = scalar_select %p547, %s546, 63
      %s549 = smul.addr %s548, 8
      %s550 = scalar_lea.vmem %s17, %s549
      %s551 = smul.u32 32, %s28
      %v553 = vld [vmem:[%s544] sm:$0xf]
      %v554 = vld [vmem:[%s544 + $0x4] sm:$0xf]
      %v555 = vld [vmem:[%s544 + $0x8] sm:$0xf]
      %v556 = vld [vmem:[%s544 + $0xc] sm:$0xf]
      %v557 = vld [vmem:[%s544 + $0x10] sm:$0xf]
      %v558 = vld [vmem:[%s544 + $0x14] sm:$0xf]
      %v559 = vld [vmem:[%s544 + $0x18] sm:$0xf]
      %v560 = vld [vmem:[%s544 + $0x1c] sm:$0xf]
      %v561 = vld [vmem:[%s544 + $0x20] sm:$0xf]
      %v562 = vld [vmem:[%s544 + $0x24] sm:$0xf]
      %v563 = vld [vmem:[%s544 + $0x28] sm:$0xf]
      %v564 = vld [vmem:[%s544 + $0x2c] sm:$0xf]
      %v565 = vld [vmem:[%s544 + $0x30] sm:$0xf]
      %v566 = vld [vmem:[%s544 + $0x34] sm:$0xf]
      %v567 = vld [vmem:[%s544 + $0x38] sm:$0xf]
      %v568 = vld [vmem:[%s544 + $0x3c] sm:$0xf]
      %v569 = vld [vmem:[%s1] sm:$0xf]
      %v570 = vld [vmem:[%s2] sm:$0x1]
      %v572 = vlaneseq
      %v573 = vshrl.u32 %v572, 7
      %v574 = vsub.s32 0, %v573
      %v575 = vrot.slane %v570, %v574
      %v593 = vunpack.c.l.b16 %v553
      %v594 = vunpack.c.l.b16 %v554
      %v595 = vunpack.c.l.b16 %v555
      %v596 = vunpack.c.l.b16 %v556
      %v597 = vunpack.c.l.b16 %v557
      %v598 = vunpack.c.l.b16 %v558
      %v599 = vunpack.c.l.b16 %v559
      %v600 = vunpack.c.l.b16 %v560
      %v601 = vunpack.c.l.b16 %v561
      %v602 = vunpack.c.l.b16 %v562
      %v603 = vunpack.c.l.b16 %v563
      %v604 = vunpack.c.l.b16 %v564
      %v605 = vunpack.c.l.b16 %v565
      %v606 = vunpack.c.l.b16 %v566
      %v607 = vunpack.c.l.b16 %v567
      %v608 = vunpack.c.l.b16 %v568
      %v609 = vpack.c.b16 %v594, %v593
      %v610 = vpack.c.b16 %v596, %v595
      %v611 = vpack.c.b16 %v598, %v597
      %v612 = vpack.c.b16 %v600, %v599
      %v613 = vpack.c.b16 %v602, %v601
      %v614 = vpack.c.b16 %v604, %v603
      %v615 = vpack.c.b16 %v606, %v605
      %v616 = vpack.c.b16 %v608, %v607
      %vm617 = vcmask 64512
      %v619 = vsel %vm617, %v609, 0
      %v622 = vsel %vm617, %v610, 0
      %v625 = vsel %vm617, %v611, 0
      %v628 = vsel %vm617, %v612, 0
      %v631 = vsel %vm617, %v613, 0
      %v634 = vsel %vm617, %v614, 0
      %v637 = vsel %vm617, %v615, 0
      %v640 = vsel %vm617, %v616, 0
      %vm642 = vcmask 1043456
      %v644 = vsel %vm642, %v569, 0
      %646 = vmatprep.subr.bf16.mxu0 0
      %647 = vmatpush1.bf16.msra.mxu0 %v644
      %648 = vmatprep.subr.bf16.mxu0 0
      %649 = vmatpush1.bf16.msra.mxu0 0
      %650 = vmatprep.subr.bf16.mxu0 0
      %651 = vmatpush1.bf16.msra.mxu0 0
      %652 = vmatprep.subr.bf16.mxu0 0
      %653 = vmatpush1.bf16.msra.mxu0 0
      %654 = vmatprep.subr.bf16.mxu0 0
      %655 = vmatpush1.bf16.msra.mxu0 0
      %656 = vmatprep.subr.bf16.mxu0 0
      %657 = vmatpush1.bf16.msra.mxu0 0
      %658 = vmatprep.subr.bf16.mxu0 0
      %659 = vmatpush1.bf16.msra.mxu0 0
      %660 = vmatprep.subr.bf16.mxu0 0
      %661 = vmatpush1.bf16.msra.mxu0 0
      %662 = vmatprep.subr.bf16.mxu0 0
      %663 = vmatpush1.bf16.msra.mxu0 0
      %664 = vmatprep.subr.bf16.mxu0 0
      %665 = vmatpush1.bf16.msra.mxu0 0
      %666 = vmatprep.subr.bf16.mxu0 0
      %667 = vmatpush1.bf16.msra.mxu0 0
      %668 = vmatprep.subr.bf16.mxu0 0
      %669 = vmatpush1.bf16.msra.mxu0 0
      %670 = vmatprep.subr.bf16.mxu0 0
      %671 = vmatpush1.bf16.msra.mxu0 0
      %672 = vmatprep.subr.bf16.mxu0 0
      %673 = vmatpush1.bf16.msra.mxu0 0
      %674 = vmatprep.subr.bf16.mxu0 0
      %675 = vmatpush1.bf16.msra.mxu0 0
      %676 = vmatprep.subr.bf16.mxu0 0
      %677 = vmatpush1.bf16.msra.mxu0 0
      %678 = vmatprep.mubr.bf16.mxu0 0
      %679 = vmatmul.mubr.bf16.gmra.mrb[0].mxu0 %v619
      %v680 = vpop.f32.mrb[0].mxu0
      %v681 = vadd.f32 %v575, %v680
      %v682 = vpop.f32.mrb[0].mxu0
      %v683 = vpop.f32.mrb[0].mxu0
      %v684 = vadd.f32 %v575, %v683
      %v685 = vpop.f32.mrb[0].mxu0
      %686 = vmatprep.mubr.bf16.mxu0 0
      %687 = vmatmul.mubr.bf16.gmra.mrb[0].mxu0 %v622
      %v688 = vpop.f32.mrb[0].mxu0
      %v689 = vadd.f32 %v575, %v688
      %v690 = vpop.f32.mrb[0].mxu0
      %v691 = vpop.f32.mrb[0].mxu0
      %v692 = vadd.f32 %v575, %v691
      %v693 = vpop.f32.mrb[0].mxu0
      %694 = vmatprep.mubr.bf16.mxu0 0
      %695 = vmatmul.mubr.bf16.gmra.mrb[0].mxu0 %v625
      %v696 = vpop.f32.mrb[0].mxu0
      %v697 = vadd.f32 %v575, %v696
      %v698 = vpop.f32.mrb[0].mxu0
      %v699 = vpop.f32.mrb[0].mxu0
      %v700 = vadd.f32 %v575, %v699
      %v701 = vpop.f32.mrb[0].mxu0
      %702 = vmatprep.mubr.bf16.mxu0 0
      %703 = vmatmul.mubr.bf16.gmra.mrb[0].mxu0 %v628
      %v704 = vpop.f32.mrb[0].mxu0
      %v705 = vadd.f32 %v575, %v704
      %v706 = vpop.f32.mrb[0].mxu0
      %v707 = vpop.f32.mrb[0].mxu0
      %v708 = vadd.f32 %v575, %v707
      %v709 = vpop.f32.mrb[0].mxu0
      %710 = vmatprep.mubr.bf16.mxu0 0
      %711 = vmatmul.mubr.bf16.gmra.mrb[0].mxu0 %v631
      %v712 = vpop.f32.mrb[0].mxu0
      %v713 = vadd.f32 %v575, %v712
      %v714 = vpop.f32.mrb[0].mxu0
      %v715 = vpop.f32.mrb[0].mxu0
      %v716 = vadd.f32 %v575, %v715
      %v717 = vpop.f32.mrb[0].mxu0
      %718 = vmatprep.mubr.bf16.mxu0 0
      %719 = vmatmul.mubr.bf16.gmra.mrb[0].mxu0 %v634
      %v720 = vpop.f32.mrb[0].mxu0
      %v721 = vadd.f32 %v575, %v720
      %v722 = vpop.f32.mrb[0].mxu0
      %v723 = vpop.f32.mrb[0].mxu0
      %v724 = vadd.f32 %v575, %v723
      %v725 = vpop.f32.mrb[0].mxu0
      %726 = vmatprep.mubr.bf16.mxu0 0
      %727 = vmatmul.mubr.bf16.gmra.mrb[0].mxu0 %v637
      %v728 = vpop.f32.mrb[0].mxu0
      %v729 = vadd.f32 %v575, %v728
      %v730 = vpop.f32.mrb[0].mxu0
      %v731 = vpop.f32.mrb[0].mxu0
      %v732 = vadd.f32 %v575, %v731
      %v733 = vpop.f32.mrb[0].mxu0
      %734 = vmatprep.mubr.bf16.mxu0 0
      %735 = vmatmul.mubr.bf16.gmra.mrb[0].mxu0 %v640
      %v736 = vpop.f32.mrb[0].mxu0
      %v737 = vadd.f32 %v575, %v736
      %v738 = vpop.f32.mrb[0].mxu0
      %v739 = vpop.f32.mrb[0].mxu0
      %v740 = vadd.f32 %v575, %v739
      %v741 = vpop.f32.mrb[0].mxu0
      %742 = vdwg.mxu0
      %v743 = vtanh.pop %v681
      %v744 = vtanh.pop %v684
      %v745 = vtanh.pop %v689
      %v746 = vtanh.pop %v692
      %v747 = vtanh.pop %v697
      %v748 = vtanh.pop %v700
      %v749 = vtanh.pop %v705
      %v750 = vtanh.pop %v708
      %v751 = vtanh.pop %v713
      %v752 = vtanh.pop %v716
      %v753 = vtanh.pop %v721
      %v754 = vtanh.pop %v724
      %v755 = vtanh.pop %v729
      %v756 = vtanh.pop %v732
      %v757 = vtanh.pop %v737
      %v758 = vtanh.pop %v740
      %v759 = vpack.c.bf16 %v744, %v743
      %v760 = vpack.c.bf16 %v746, %v745
      %v761 = vpack.c.bf16 %v748, %v747
      %v762 = vpack.c.bf16 %v750, %v749
      %v763 = vpack.c.bf16 %v752, %v751
      %v764 = vpack.c.bf16 %v754, %v753
      %v765 = vpack.c.bf16 %v756, %v755
      %v766 = vpack.c.bf16 %v758, %v757
      %v767 = vld [vmem:[%s3] sm:$0xf]
      %v768 = vld [vmem:[%s3 + $0x4] sm:$0xf]
      %v769 = vld [vmem:[%s3 + $0x8] sm:$0xf]
      %v770 = vld [vmem:[%s3 + $0xc] sm:$0xf]
      %v771 = vld [vmem:[%s3 + $0x10] sm:$0xf]
      %v772 = vld [vmem:[%s3 + $0x14] sm:$0xf]
      %v773 = vld [vmem:[%s3 + $0x18] sm:$0xf]
      %v774 = vld [vmem:[%s3 + $0x1c] sm:$0xf]
      %v775 = vld [vmem:[%s3 + $0x20] sm:$0xf]
      %v776 = vld [vmem:[%s3 + $0x24] sm:$0xf]
      %v777 = vld [vmem:[%s3 + $0x28] sm:$0xf]
      %v778 = vld [vmem:[%s3 + $0x2c] sm:$0xf]
      %v779 = vld [vmem:[%s3 + $0x30] sm:$0xf]
      %v780 = vld [vmem:[%s3 + $0x34] sm:$0xf]
      %v781 = vld [vmem:[%s3 + $0x38] sm:$0xf]
      %v782 = vld [vmem:[%s3 + $0x3c] sm:$0xf]
      %v783 = vld [vmem:[%s4] sm:$0x1]
      %v785 = vlaneseq
      %v786 = vshrl.u32 %v785, 7
      %v787 = vsub.s32 0, %v786
      %v788 = vrot.slane %v783, %v787
      %v806 = vunpack.c.l.b16 %v767
      %v807 = vunpack.c.l.b16 %v768
      %v808 = vunpack.c.l.b16 %v769
      %v809 = vunpack.c.l.b16 %v770
      %v810 = vunpack.c.l.b16 %v771
      %v811 = vunpack.c.l.b16 %v772
      %v812 = vunpack.c.l.b16 %v773
      %v813 = vunpack.c.l.b16 %v774
      %v814 = vunpack.c.l.b16 %v775
      %v815 = vunpack.c.l.b16 %v776
      %v816 = vunpack.c.l.b16 %v777
      %v817 = vunpack.c.l.b16 %v778
      %v818 = vunpack.c.l.b16 %v779
      %v819 = vunpack.c.l.b16 %v780
      %v820 = vunpack.c.l.b16 %v781
      %v821 = vunpack.c.l.b16 %v782
      %v822 = vpack.c.b16 %v807, %v806
      %v823 = vpack.c.b16 %v809, %v808
      %v824 = vpack.c.b16 %v811, %v810
      %v825 = vpack.c.b16 %v813, %v812
      %v826 = vpack.c.b16 %v815, %v814
      %v827 = vpack.c.b16 %v817, %v816
      %v828 = vpack.c.b16 %v819, %v818
      %v829 = vpack.c.b16 %v821, %v820
      %838 = vmatprep.subr.bf16.mxu0 0
      %839 = vmatpush1.bf16.msra.mxu0 %v822
      %840 = vmatprep.subr.bf16.mxu0 0
      %841 = vmatpush1.bf16.msra.mxu0 %v823
      %842 = vmatprep.subr.bf16.mxu0 0
      %843 = vmatpush1.bf16.msra.mxu0 %v824
      %844 = vmatprep.subr.bf16.mxu0 0
      %845 = vmatpush1.bf16.msra.mxu0 %v825
      %846 = vmatprep.subr.bf16.mxu0 0
      %847 = vmatpush1.bf16.msra.mxu0 %v826
      %848 = vmatprep.subr.bf16.mxu0 0
      %849 = vmatpush1.bf16.msra.mxu0 %v827
      %850 = vmatprep.subr.bf16.mxu0 0
      %851 = vmatpush1.bf16.msra.mxu0 %v828
      %852 = vmatprep.subr.bf16.mxu0 0
      %853 = vmatpush1.bf16.msra.mxu0 %v829
      %854 = vmatprep.subr.bf16.mxu0 0
      %855 = vmatpush1.bf16.msra.mxu0 0
      %856 = vmatprep.subr.bf16.mxu0 0
      %857 = vmatpush1.bf16.msra.mxu0 0
      %858 = vmatprep.subr.bf16.mxu0 0
      %859 = vmatpush1.bf16.msra.mxu0 0
      %860 = vmatprep.subr.bf16.mxu0 0
      %861 = vmatpush1.bf16.msra.mxu0 0
      %862 = vmatprep.subr.bf16.mxu0 0
      %863 = vmatpush1.bf16.msra.mxu0 0
      %864 = vmatprep.subr.bf16.mxu0 0
      %865 = vmatpush1.bf16.msra.mxu0 0
      %866 = vmatprep.subr.bf16.mxu0 0
      %867 = vmatpush1.bf16.msra.mxu0 0
      %868 = vmatprep.subr.bf16.mxu0 0
      %869 = vmatpush1.bf16.msra.mxu0 0
      %870 = vmatprep.mubr.bf16.mxu0 0
      %871 = vmatmul.mubr.bf16.gmra.mrb[0].mxu0 %v759
      %v872 = vpop.f32.mrb[0].mxu0
      %v873 = vadd.f32 %v788, %v872
      %v874 = vpop.f32.mrb[0].mxu0
      %v875 = vpop.f32.mrb[0].mxu0
      %v876 = vadd.f32 %v788, %v875
      %v877 = vpop.f32.mrb[0].mxu0
      %878 = vmatprep.mubr.bf16.mxu0 0
      %879 = vmatmul.mubr.bf16.gmra.mrb[0].mxu0 %v760
      %v880 = vpop.f32.mrb[0].mxu0
      %v881 = vadd.f32 %v788, %v880
      %v882 = vpop.f32.mrb[0].mxu0
      %v883 = vpop.f32.mrb[0].mxu0
      %v884 = vadd.f32 %v788, %v883
      %v885 = vpop.f32.mrb[0].mxu0
      %886 = vmatprep.mubr.bf16.mxu0 0
      %887 = vmatmul.mubr.bf16.gmra.mrb[0].mxu0 %v761
      %v888 = vpop.f32.mrb[0].mxu0
      %v889 = vadd.f32 %v788, %v888
      %v890 = vpop.f32.mrb[0].mxu0
      %v891 = vpop.f32.mrb[0].mxu0
      %v892 = vadd.f32 %v788, %v891
      %v893 = vpop.f32.mrb[0].mxu0
      %894 = vmatprep.mubr.bf16.mxu0 0
      %895 = vmatmul.mubr.bf16.gmra.mrb[0].mxu0 %v762
      %v896 = vpop.f32.mrb[0].mxu0
      %v897 = vadd.f32 %v788, %v896
      %v898 = vpop.f32.mrb[0].mxu0
      %v899 = vpop.f32.mrb[0].mxu0
      %v900 = vadd.f32 %v788, %v899
      %v901 = vpop.f32.mrb[0].mxu0
      %902 = vmatprep.mubr.bf16.mxu0 0
      %903 = vmatmul.mubr.bf16.gmra.mrb[0].mxu0 %v763
      %v904 = vpop.f32.mrb[0].mxu0
      %v905 = vadd.f32 %v788, %v904
      %v906 = vpop.f32.mrb[0].mxu0
      %v907 = vpop.f32.mrb[0].mxu0
      %v908 = vadd.f32 %v788, %v907
      %v909 = vpop.f32.mrb[0].mxu0
      %910 = vmatprep.mubr.bf16.mxu0 0
      %911 = vmatmul.mubr.bf16.gmra.mrb[0].mxu0 %v764
      %v912 = vpop.f32.mrb[0].mxu0
      %v913 = vadd.f32 %v788, %v912
      %v914 = vpop.f32.mrb[0].mxu0
      %v915 = vpop.f32.mrb[0].mxu0
      %v916 = vadd.f32 %v788, %v915
      %v917 = vpop.f32.mrb[0].mxu0
      %918 = vmatprep.mubr.bf16.mxu0 0
      %919 = vmatmul.mubr.bf16.gmra.mrb[0].mxu0 %v765
      %v920 = vpop.f32.mrb[0].mxu0
      %v921 = vadd.f32 %v788, %v920
      %v922 = vpop.f32.mrb[0].mxu0
      %v923 = vpop.f32.mrb[0].mxu0
      %v924 = vadd.f32 %v788, %v923
      %v925 = vpop.f32.mrb[0].mxu0
      %926 = vmatprep.mubr.bf16.mxu0 0
      %927 = vmatmul.mubr.bf16.gmra.mrb[0].mxu0 %v766
      %v928 = vpop.f32.mrb[0].mxu0
      %v929 = vadd.f32 %v788, %v928
      %v930 = vpop.f32.mrb[0].mxu0
      %v931 = vpop.f32.mrb[0].mxu0
      %v932 = vadd.f32 %v788, %v931
      %v933 = vpop.f32.mrb[0].mxu0
      %934 = vdwg.mxu0
      %v935 = vtanh.pop %v873
      %v936 = vtanh.pop %v876
      %v937 = vtanh.pop %v881
      %v938 = vtanh.pop %v884
      %v939 = vtanh.pop %v889
      %v940 = vtanh.pop %v892
      %v941 = vtanh.pop %v897
      %v942 = vtanh.pop %v900
      %v943 = vtanh.pop %v905
      %v944 = vtanh.pop %v908
      %v945 = vtanh.pop %v913
      %v946 = vtanh.pop %v916
      %v947 = vtanh.pop %v921
      %v948 = vtanh.pop %v924
      %v949 = vtanh.pop %v929
      %v950 = vtanh.pop %v932
      %v951 = vpack.c.bf16 %v936, %v935
      %v952 = vpack.c.bf16 %v938, %v937
      %v953 = vpack.c.bf16 %v940, %v939
      %v954 = vpack.c.bf16 %v942, %v941
      %v955 = vpack.c.bf16 %v944, %v943
      %v956 = vpack.c.bf16 %v946, %v945
      %v957 = vpack.c.bf16 %v948, %v947
      %v958 = vpack.c.bf16 %v950, %v949
      %v959 = vld [vmem:[%s5] sm:$0xf]
      %v960 = vld [vmem:[%s5 + $0x4] sm:$0xf]
      %v961 = vld [vmem:[%s5 + $0x8] sm:$0xf]
      %v962 = vld [vmem:[%s5 + $0xc] sm:$0xf]
      %v963 = vld [vmem:[%s5 + $0x10] sm:$0xf]
      %v964 = vld [vmem:[%s5 + $0x14] sm:$0xf]
      %v965 = vld [vmem:[%s5 + $0x18] sm:$0xf]
      %v966 = vld [vmem:[%s5 + $0x1c] sm:$0xf]
      %v967 = vld [vmem:[%s5 + $0x20] sm:$0xf]
      %v968 = vld [vmem:[%s5 + $0x24] sm:$0xf]
      %v969 = vld [vmem:[%s5 + $0x28] sm:$0xf]
      %v970 = vld [vmem:[%s5 + $0x2c] sm:$0xf]
      %v971 = vld [vmem:[%s5 + $0x30] sm:$0xf]
      %v972 = vld [vmem:[%s5 + $0x34] sm:$0xf]
      %v973 = vld [vmem:[%s5 + $0x38] sm:$0xf]
      %v974 = vld [vmem:[%s5 + $0x3c] sm:$0xf]
      %v975 = vld [vmem:[%s6] sm:$0x1]
      %v977 = vlaneseq
      %v978 = vshrl.u32 %v977, 7
      %v979 = vsub.s32 0, %v978
      %v980 = vrot.slane %v975, %v979
      %v998 = vunpack.c.l.b16 %v959
      %v999 = vunpack.c.l.b16 %v960
      %v1000 = vunpack.c.l.b16 %v961
      %v1001 = vunpack.c.l.b16 %v962
      %v1002 = vunpack.c.l.b16 %v963
      %v1003 = vunpack.c.l.b16 %v964
      %v1004 = vunpack.c.l.b16 %v965
      %v1005 = vunpack.c.l.b16 %v966
      %v1006 = vunpack.c.l.b16 %v967
      %v1007 = vunpack.c.l.b16 %v968
      %v1008 = vunpack.c.l.b16 %v969
      %v1009 = vunpack.c.l.b16 %v970
      %v1010 = vunpack.c.l.b16 %v971
      %v1011 = vunpack.c.l.b16 %v972
      %v1012 = vunpack.c.l.b16 %v973
      %v1013 = vunpack.c.l.b16 %v974
      %v1014 = vpack.c.b16 %v999, %v998
      %v1015 = vpack.c.b16 %v1001, %v1000
      %v1016 = vpack.c.b16 %v1003, %v1002
      %v1017 = vpack.c.b16 %v1005, %v1004
      %v1018 = vpack.c.b16 %v1007, %v1006
      %v1019 = vpack.c.b16 %v1009, %v1008
      %v1020 = vpack.c.b16 %v1011, %v1010
      %v1021 = vpack.c.b16 %v1013, %v1012
      %1030 = vmatprep.subr.bf16.mxu0 0
      %1031 = vmatpush1.bf16.msra.mxu0 %v1014
      %1032 = vmatprep.subr.bf16.mxu0 0
      %1033 = vmatpush1.bf16.msra.mxu0 %v1015
      %1034 = vmatprep.subr.bf16.mxu0 0
      %1035 = vmatpush1.bf16.msra.mxu0 %v1016
      %1036 = vmatprep.subr.bf16.mxu0 0
      %1037 = vmatpush1.bf16.msra.mxu0 %v1017
      %1038 = vmatprep.subr.bf16.mxu0 0
      %1039 = vmatpush1.bf16.msra.mxu0 %v1018
      %1040 = vmatprep.subr.bf16.mxu0 0
      %1041 = vmatpush1.bf16.msra.mxu0 %v1019
      %1042 = vmatprep.subr.bf16.mxu0 0
      %1043 = vmatpush1.bf16.msra.mxu0 %v1020
      %1044 = vmatprep.subr.bf16.mxu0 0
      %1045 = vmatpush1.bf16.msra.mxu0 %v1021
      %1046 = vmatprep.subr.bf16.mxu0 0
      %1047 = vmatpush1.bf16.msra.mxu0 0
      %1048 = vmatprep.subr.bf16.mxu0 0
      %1049 = vmatpush1.bf16.msra.mxu0 0
      %1050 = vmatprep.subr.bf16.mxu0 0
      %1051 = vmatpush1.bf16.msra.mxu0 0
      %1052 = vmatprep.subr.bf16.mxu0 0
      %1053 = vmatpush1.bf16.msra.mxu0 0
      %1054 = vmatprep.subr.bf16.mxu0 0
      %1055 = vmatpush1.bf16.msra.mxu0 0
      %1056 = vmatprep.subr.bf16.mxu0 0
      %1057 = vmatpush1.bf16.msra.mxu0 0
      %1058 = vmatprep.subr.bf16.mxu0 0
      %1059 = vmatpush1.bf16.msra.mxu0 0
      %1060 = vmatprep.subr.bf16.mxu0 0
      %1061 = vmatpush1.bf16.msra.mxu0 0
      %1062 = vmatprep.mubr.bf16.mxu0 0
      %1063 = vmatmul.mubr.bf16.gmra.mrb[0].mxu0 %v951
      %v1064 = vpop.f32.mrb[0].mxu0
      %v1065 = vadd.f32 %v980, %v1064
      %v1066 = vpop.f32.mrb[0].mxu0
      %v1067 = vpop.f32.mrb[0].mxu0
      %v1068 = vadd.f32 %v980, %v1067
      %v1069 = vpop.f32.mrb[0].mxu0
      %1070 = vmatprep.mubr.bf16.mxu0 0
      %1071 = vmatmul.mubr.bf16.gmra.mrb[0].mxu0 %v952
      %v1072 = vpop.f32.mrb[0].mxu0
      %v1073 = vadd.f32 %v980, %v1072
      %v1074 = vpop.f32.mrb[0].mxu0
      %v1075 = vpop.f32.mrb[0].mxu0
      %v1076 = vadd.f32 %v980, %v1075
      %v1077 = vpop.f32.mrb[0].mxu0
      %1078 = vmatprep.mubr.bf16.mxu0 0
      %1079 = vmatmul.mubr.bf16.gmra.mrb[0].mxu0 %v953
      %v1080 = vpop.f32.mrb[0].mxu0
      %v1081 = vadd.f32 %v980, %v1080
      %v1082 = vpop.f32.mrb[0].mxu0
      %v1083 = vpop.f32.mrb[0].mxu0
      %v1084 = vadd.f32 %v980, %v1083
      %v1085 = vpop.f32.mrb[0].mxu0
      %1086 = vmatprep.mubr.bf16.mxu0 0
      %1087 = vmatmul.mubr.bf16.gmra.mrb[0].mxu0 %v954
      %v1088 = vpop.f32.mrb[0].mxu0
      %v1089 = vadd.f32 %v980, %v1088
      %v1090 = vpop.f32.mrb[0].mxu0
      %v1091 = vpop.f32.mrb[0].mxu0
      %v1092 = vadd.f32 %v980, %v1091
      %v1093 = vpop.f32.mrb[0].mxu0
      %1094 = vmatprep.mubr.bf16.mxu0 0
      %1095 = vmatmul.mubr.bf16.gmra.mrb[0].mxu0 %v955
      %v1096 = vpop.f32.mrb[0].mxu0
      %v1097 = vadd.f32 %v980, %v1096
      %v1098 = vpop.f32.mrb[0].mxu0
      %v1099 = vpop.f32.mrb[0].mxu0
      %v1100 = vadd.f32 %v980, %v1099
      %v1101 = vpop.f32.mrb[0].mxu0
      %1102 = vmatprep.mubr.bf16.mxu0 0
      %1103 = vmatmul.mubr.bf16.gmra.mrb[0].mxu0 %v956
      %v1104 = vpop.f32.mrb[0].mxu0
      %v1105 = vadd.f32 %v980, %v1104
      %v1106 = vpop.f32.mrb[0].mxu0
      %v1107 = vpop.f32.mrb[0].mxu0
      %v1108 = vadd.f32 %v980, %v1107
      %v1109 = vpop.f32.mrb[0].mxu0
      %1110 = vmatprep.mubr.bf16.mxu0 0
      %1111 = vmatmul.mubr.bf16.gmra.mrb[0].mxu0 %v957
      %v1112 = vpop.f32.mrb[0].mxu0
      %v1113 = vadd.f32 %v980, %v1112
      %v1114 = vpop.f32.mrb[0].mxu0
      %v1115 = vpop.f32.mrb[0].mxu0
      %v1116 = vadd.f32 %v980, %v1115
      %v1117 = vpop.f32.mrb[0].mxu0
      %1118 = vmatprep.mubr.bf16.mxu0 0
      %1119 = vmatmul.mubr.bf16.gmra.mrb[0].mxu0 %v958
      %v1120 = vpop.f32.mrb[0].mxu0
      %v1121 = vadd.f32 %v980, %v1120
      %v1122 = vpop.f32.mrb[0].mxu0
      %v1123 = vpop.f32.mrb[0].mxu0
      %v1124 = vadd.f32 %v980, %v1123
      %v1125 = vpop.f32.mrb[0].mxu0
      %1126 = vdwg.mxu0
      %v1127 = vtanh.pop %v1065
      %v1128 = vtanh.pop %v1068
      %v1129 = vtanh.pop %v1073
      %v1130 = vtanh.pop %v1076
      %v1131 = vtanh.pop %v1081
      %v1132 = vtanh.pop %v1084
      %v1133 = vtanh.pop %v1089
      %v1134 = vtanh.pop %v1092
      %v1135 = vtanh.pop %v1097
      %v1136 = vtanh.pop %v1100
      %v1137 = vtanh.pop %v1105
      %v1138 = vtanh.pop %v1108
      %v1139 = vtanh.pop %v1113
      %v1140 = vtanh.pop %v1116
      %v1141 = vtanh.pop %v1121
      %v1142 = vtanh.pop %v1124
      %v1143 = vpack.c.bf16 %v1128, %v1127
      %v1144 = vpack.c.bf16 %v1130, %v1129
      %v1145 = vpack.c.bf16 %v1132, %v1131
      %v1146 = vpack.c.bf16 %v1134, %v1133
      %v1147 = vpack.c.bf16 %v1136, %v1135
      %v1148 = vpack.c.bf16 %v1138, %v1137
      %v1149 = vpack.c.bf16 %v1140, %v1139
      %v1150 = vpack.c.bf16 %v1142, %v1141
      %v1151 = vld [vmem:[%s7] sm:$0xf]
      %v1152 = vld [vmem:[%s7 + $0x4] sm:$0xf]
      %v1153 = vld [vmem:[%s7 + $0x8] sm:$0xf]
      %v1154 = vld [vmem:[%s7 + $0xc] sm:$0xf]
      %v1155 = vld [vmem:[%s7 + $0x10] sm:$0xf]
      %v1156 = vld [vmem:[%s7 + $0x14] sm:$0xf]
      %v1157 = vld [vmem:[%s7 + $0x18] sm:$0xf]
      %v1158 = vld [vmem:[%s7 + $0x1c] sm:$0xf]
      %v1159 = vld [vmem:[%s7 + $0x20] sm:$0xf]
      %v1160 = vld [vmem:[%s7 + $0x24] sm:$0xf]
      %v1161 = vld [vmem:[%s7 + $0x28] sm:$0xf]
      %v1162 = vld [vmem:[%s7 + $0x2c] sm:$0xf]
      %v1163 = vld [vmem:[%s7 + $0x30] sm:$0xf]
      %v1164 = vld [vmem:[%s7 + $0x34] sm:$0xf]
      %v1165 = vld [vmem:[%s7 + $0x38] sm:$0xf]
      %v1166 = vld [vmem:[%s7 + $0x3c] sm:$0xf]
      %v1167 = vld [vmem:[%s8] sm:$0x1]
      %v1169 = vlaneseq
      %v1170 = vshrl.u32 %v1169, 7
      %v1171 = vsub.s32 0, %v1170
      %v1172 = vrot.slane %v1167, %v1171
      %v1190 = vunpack.c.l.b16 %v1151
      %v1191 = vunpack.c.l.b16 %v1152
      %v1192 = vunpack.c.l.b16 %v1153
      %v1193 = vunpack.c.l.b16 %v1154
      %v1194 = vunpack.c.l.b16 %v1155
      %v1195 = vunpack.c.l.b16 %v1156
      %v1196 = vunpack.c.l.b16 %v1157
      %v1197 = vunpack.c.l.b16 %v1158
      %v1198 = vunpack.c.l.b16 %v1159
      %v1199 = vunpack.c.l.b16 %v1160
      %v1200 = vunpack.c.l.b16 %v1161
      %v1201 = vunpack.c.l.b16 %v1162
      %v1202 = vunpack.c.l.b16 %v1163
      %v1203 = vunpack.c.l.b16 %v1164
      %v1204 = vunpack.c.l.b16 %v1165
      %v1205 = vunpack.c.l.b16 %v1166
      %v1206 = vpack.c.b16 %v1191, %v1190
      %v1207 = vpack.c.b16 %v1193, %v1192
      %v1208 = vpack.c.b16 %v1195, %v1194
      %v1209 = vpack.c.b16 %v1197, %v1196
      %v1210 = vpack.c.b16 %v1199, %v1198
      %v1211 = vpack.c.b16 %v1201, %v1200
      %v1212 = vpack.c.b16 %v1203, %v1202
      %v1213 = vpack.c.b16 %v1205, %v1204
      %1222 = vmatprep.subr.bf16.mxu0 0
      %1223 = vmatpush1.bf16.msra.mxu0 %v1206
      %1224 = vmatprep.subr.bf16.mxu0 0
      %1225 = vmatpush1.bf16.msra.mxu0 %v1207
      %1226 = vmatprep.subr.bf16.mxu0 0
      %1227 = vmatpush1.bf16.msra.mxu0 %v1208
      %1228 = vmatprep.subr.bf16.mxu0 0
      %1229 = vmatpush1.bf16.msra.mxu0 %v1209
      %1230 = vmatprep.subr.bf16.mxu0 0
      %1231 = vmatpush1.bf16.msra.mxu0 %v1210
      %1232 = vmatprep.subr.bf16.mxu0 0
      %1233 = vmatpush1.bf16.msra.mxu0 %v1211
      %1234 = vmatprep.subr.bf16.mxu0 0
      %1235 = vmatpush1.bf16.msra.mxu0 %v1212
      %1236 = vmatprep.subr.bf16.mxu0 0
      %1237 = vmatpush1.bf16.msra.mxu0 %v1213
      %1238 = vmatprep.subr.bf16.mxu0 0
      %1239 = vmatpush1.bf16.msra.mxu0 0
      %1240 = vmatprep.subr.bf16.mxu0 0
      %1241 = vmatpush1.bf16.msra.mxu0 0
      %1242 = vmatprep.subr.bf16.mxu0 0
      %1243 = vmatpush1.bf16.msra.mxu0 0
      %1244 = vmatprep.subr.bf16.mxu0 0
      %1245 = vmatpush1.bf16.msra.mxu0 0
      %1246 = vmatprep.subr.bf16.mxu0 0
      %1247 = vmatpush1.bf16.msra.mxu0 0
      %1248 = vmatprep.subr.bf16.mxu0 0
      %1249 = vmatpush1.bf16.msra.mxu0 0
      %1250 = vmatprep.subr.bf16.mxu0 0
      %1251 = vmatpush1.bf16.msra.mxu0 0
      %1252 = vmatprep.subr.bf16.mxu0 0
      %1253 = vmatpush1.bf16.msra.mxu0 0
      %1254 = vmatprep.mubr.bf16.mxu0 0
      %1255 = vmatmul.mubr.bf16.gmra.mrb[0].mxu0 %v1143
      %v1256 = vpop.f32.mrb[0].mxu0
      %v1257 = vadd.f32 %v1172, %v1256
      %v1258 = vpop.f32.mrb[0].mxu0
      %v1259 = vpop.f32.mrb[0].mxu0
      %v1260 = vadd.f32 %v1172, %v1259
      %v1261 = vpop.f32.mrb[0].mxu0
      %1262 = vmatprep.mubr.bf16.mxu0 0
      %1263 = vmatmul.mubr.bf16.gmra.mrb[0].mxu0 %v1144
      %v1264 = vpop.f32.mrb[0].mxu0
      %v1265 = vadd.f32 %v1172, %v1264
      %v1266 = vpop.f32.mrb[0].mxu0
      %v1267 = vpop.f32.mrb[0].mxu0
      %v1268 = vadd.f32 %v1172, %v1267
      %v1269 = vpop.f32.mrb[0].mxu0
      %1270 = vmatprep.mubr.bf16.mxu0 0
      %1271 = vmatmul.mubr.bf16.gmra.mrb[0].mxu0 %v1145
      %v1272 = vpop.f32.mrb[0].mxu0
      %v1273 = vadd.f32 %v1172, %v1272
      %v1274 = vpop.f32.mrb[0].mxu0
      %v1275 = vpop.f32.mrb[0].mxu0
      %v1276 = vadd.f32 %v1172, %v1275
      %v1277 = vpop.f32.mrb[0].mxu0
      %1278 = vmatprep.mubr.bf16.mxu0 0
      %1279 = vmatmul.mubr.bf16.gmra.mrb[0].mxu0 %v1146
      %v1280 = vpop.f32.mrb[0].mxu0
      %v1281 = vadd.f32 %v1172, %v1280
      %v1282 = vpop.f32.mrb[0].mxu0
      %v1283 = vpop.f32.mrb[0].mxu0
      %v1284 = vadd.f32 %v1172, %v1283
      %v1285 = vpop.f32.mrb[0].mxu0
      %1286 = vmatprep.mubr.bf16.mxu0 0
      %1287 = vmatmul.mubr.bf16.gmra.mrb[0].mxu0 %v1147
      %v1288 = vpop.f32.mrb[0].mxu0
      %v1289 = vadd.f32 %v1172, %v1288
      %v1290 = vpop.f32.mrb[0].mxu0
      %v1291 = vpop.f32.mrb[0].mxu0
      %v1292 = vadd.f32 %v1172, %v1291
      %v1293 = vpop.f32.mrb[0].mxu0
      %1294 = vmatprep.mubr.bf16.mxu0 0
      %1295 = vmatmul.mubr.bf16.gmra.mrb[0].mxu0 %v1148
      %v1296 = vpop.f32.mrb[0].mxu0
      %v1297 = vadd.f32 %v1172, %v1296
      %v1298 = vpop.f32.mrb[0].mxu0
      %v1299 = vpop.f32.mrb[0].mxu0
      %v1300 = vadd.f32 %v1172, %v1299
      %v1301 = vpop.f32.mrb[0].mxu0
      %1302 = vmatprep.mubr.bf16.mxu0 0
      %1303 = vmatmul.mubr.bf16.gmra.mrb[0].mxu0 %v1149
      %v1304 = vpop.f32.mrb[0].mxu0
      %v1305 = vadd.f32 %v1172, %v1304
      %v1306 = vpop.f32.mrb[0].mxu0
      %v1307 = vpop.f32.mrb[0].mxu0
      %v1308 = vadd.f32 %v1172, %v1307
      %v1309 = vpop.f32.mrb[0].mxu0
      %1310 = vmatprep.mubr.bf16.mxu0 0
      %1311 = vmatmul.mubr.bf16.gmra.mrb[0].mxu0 %v1150
      %v1312 = vpop.f32.mrb[0].mxu0
      %v1313 = vadd.f32 %v1172, %v1312
      %v1314 = vpop.f32.mrb[0].mxu0
      %v1315 = vpop.f32.mrb[0].mxu0
      %v1316 = vadd.f32 %v1172, %v1315
      %v1317 = vpop.f32.mrb[0].mxu0
      %1318 = vdwg.mxu0
      %v1319 = vtanh.pop %v1257
      %v1320 = vtanh.pop %v1260
      %v1321 = vtanh.pop %v1265
      %v1322 = vtanh.pop %v1268
      %v1323 = vtanh.pop %v1273
      %v1324 = vtanh.pop %v1276
      %v1325 = vtanh.pop %v1281
      %v1326 = vtanh.pop %v1284
      %v1327 = vtanh.pop %v1289
      %v1328 = vtanh.pop %v1292
      %v1329 = vtanh.pop %v1297
      %v1330 = vtanh.pop %v1300
      %v1331 = vtanh.pop %v1305
      %v1332 = vtanh.pop %v1308
      %v1333 = vtanh.pop %v1313
      %v1334 = vtanh.pop %v1316
      %v1335 = vpack.c.bf16 %v1320, %v1319
      %v1336 = vpack.c.bf16 %v1322, %v1321
      %v1337 = vpack.c.bf16 %v1324, %v1323
      %v1338 = vpack.c.bf16 %v1326, %v1325
      %v1339 = vpack.c.bf16 %v1328, %v1327
      %v1340 = vpack.c.bf16 %v1330, %v1329
      %v1341 = vpack.c.bf16 %v1332, %v1331
      %v1342 = vpack.c.bf16 %v1334, %v1333
      %v1343 = vld [vmem:[%s9] sm:$0xf]
      %v1344 = vld [vmem:[%s9 + $0x4] sm:$0xf]
      %v1345 = vld [vmem:[%s9 + $0x8] sm:$0xf]
      %v1346 = vld [vmem:[%s9 + $0xc] sm:$0xf]
      %v1347 = vld [vmem:[%s9 + $0x10] sm:$0xf]
      %v1348 = vld [vmem:[%s9 + $0x14] sm:$0xf]
      %v1349 = vld [vmem:[%s9 + $0x18] sm:$0xf]
      %v1350 = vld [vmem:[%s9 + $0x1c] sm:$0xf]
      %v1351 = vld [vmem:[%s9 + $0x20] sm:$0xf]
      %v1352 = vld [vmem:[%s9 + $0x24] sm:$0xf]
      %v1353 = vld [vmem:[%s9 + $0x28] sm:$0xf]
      %v1354 = vld [vmem:[%s9 + $0x2c] sm:$0xf]
      %v1355 = vld [vmem:[%s9 + $0x30] sm:$0xf]
      %v1356 = vld [vmem:[%s9 + $0x34] sm:$0xf]
      %v1357 = vld [vmem:[%s9 + $0x38] sm:$0xf]
      %v1358 = vld [vmem:[%s9 + $0x3c] sm:$0xf]
      %v1359 = vld [vmem:[%s10] sm:$0x1]
      %v1361 = vlaneseq
      %v1362 = vshrl.u32 %v1361, 7
      %v1363 = vsub.s32 0, %v1362
      %v1364 = vrot.slane %v1359, %v1363
      %v1382 = vunpack.c.l.b16 %v1343
      %v1383 = vunpack.c.l.b16 %v1344
      %v1384 = vunpack.c.l.b16 %v1345
      %v1385 = vunpack.c.l.b16 %v1346
      %v1386 = vunpack.c.l.b16 %v1347
      %v1387 = vunpack.c.l.b16 %v1348
      %v1388 = vunpack.c.l.b16 %v1349
      %v1389 = vunpack.c.l.b16 %v1350
      %v1390 = vunpack.c.l.b16 %v1351
      %v1391 = vunpack.c.l.b16 %v1352
      %v1392 = vunpack.c.l.b16 %v1353
      %v1393 = vunpack.c.l.b16 %v1354
      %v1394 = vunpack.c.l.b16 %v1355
      %v1395 = vunpack.c.l.b16 %v1356
      %v1396 = vunpack.c.l.b16 %v1357
      %v1397 = vunpack.c.l.b16 %v1358
      %v1398 = vpack.c.b16 %v1383, %v1382
      %v1399 = vpack.c.b16 %v1385, %v1384
      %v1400 = vpack.c.b16 %v1387, %v1386
      %v1401 = vpack.c.b16 %v1389, %v1388
      %v1402 = vpack.c.b16 %v1391, %v1390
      %v1403 = vpack.c.b16 %v1393, %v1392
      %v1404 = vpack.c.b16 %v1395, %v1394
      %v1405 = vpack.c.b16 %v1397, %v1396
      %1414 = vmatprep.subr.bf16.mxu0 0
      %1415 = vmatpush1.bf16.msra.mxu0 %v1398
      %1416 = vmatprep.subr.bf16.mxu0 0
      %1417 = vmatpush1.bf16.msra.mxu0 %v1399
      %1418 = vmatprep.subr.bf16.mxu0 0
      %1419 = vmatpush1.bf16.msra.mxu0 %v1400
      %1420 = vmatprep.subr.bf16.mxu0 0
      %1421 = vmatpush1.bf16.msra.mxu0 %v1401
      %1422 = vmatprep.subr.bf16.mxu0 0
      %1423 = vmatpush1.bf16.msra.mxu0 %v1402
      %1424 = vmatprep.subr.bf16.mxu0 0
      %1425 = vmatpush1.bf16.msra.mxu0 %v1403
      %1426 = vmatprep.subr.bf16.mxu0 0
      %1427 = vmatpush1.bf16.msra.mxu0 %v1404
      %1428 = vmatprep.subr.bf16.mxu0 0
      %1429 = vmatpush1.bf16.msra.mxu0 %v1405
      %1430 = vmatprep.subr.bf16.mxu0 0
      %1431 = vmatpush1.bf16.msra.mxu0 0
      %1432 = vmatprep.subr.bf16.mxu0 0
      %1433 = vmatpush1.bf16.msra.mxu0 0
      %1434 = vmatprep.subr.bf16.mxu0 0
      %1435 = vmatpush1.bf16.msra.mxu0 0
      %1436 = vmatprep.subr.bf16.mxu0 0
      %1437 = vmatpush1.bf16.msra.mxu0 0
      %1438 = vmatprep.subr.bf16.mxu0 0
      %1439 = vmatpush1.bf16.msra.mxu0 0
      %1440 = vmatprep.subr.bf16.mxu0 0
      %1441 = vmatpush1.bf16.msra.mxu0 0
      %1442 = vmatprep.subr.bf16.mxu0 0
      %1443 = vmatpush1.bf16.msra.mxu0 0
      %1444 = vmatprep.subr.bf16.mxu0 0
      %1445 = vmatpush1.bf16.msra.mxu0 0
      %1446 = vmatprep.mubr.bf16.mxu0 0
      %1447 = vmatmul.mubr.bf16.gmra.mrb[0].mxu0 %v1335
      %v1448 = vpop.f32.mrb[0].mxu0
      %v1449 = vadd.f32 %v1364, %v1448
      %v1450 = vpop.f32.mrb[0].mxu0
      %v1451 = vpop.f32.mrb[0].mxu0
      %v1452 = vadd.f32 %v1364, %v1451
      %v1453 = vpop.f32.mrb[0].mxu0
      %1454 = vmatprep.mubr.bf16.mxu0 0
      %1455 = vmatmul.mubr.bf16.gmra.mrb[0].mxu0 %v1336
      %v1456 = vpop.f32.mrb[0].mxu0
      %v1457 = vadd.f32 %v1364, %v1456
      %v1458 = vpop.f32.mrb[0].mxu0
      %v1459 = vpop.f32.mrb[0].mxu0
      %v1460 = vadd.f32 %v1364, %v1459
      %v1461 = vpop.f32.mrb[0].mxu0
      %1462 = vmatprep.mubr.bf16.mxu0 0
      %1463 = vmatmul.mubr.bf16.gmra.mrb[0].mxu0 %v1337
      %v1464 = vpop.f32.mrb[0].mxu0
      %v1465 = vadd.f32 %v1364, %v1464
      %v1466 = vpop.f32.mrb[0].mxu0
      %v1467 = vpop.f32.mrb[0].mxu0
      %v1468 = vadd.f32 %v1364, %v1467
      %v1469 = vpop.f32.mrb[0].mxu0
      %1470 = vmatprep.mubr.bf16.mxu0 0
      %1471 = vmatmul.mubr.bf16.gmra.mrb[0].mxu0 %v1338
      %v1472 = vpop.f32.mrb[0].mxu0
      %v1473 = vadd.f32 %v1364, %v1472
      %v1474 = vpop.f32.mrb[0].mxu0
      %v1475 = vpop.f32.mrb[0].mxu0
      %v1476 = vadd.f32 %v1364, %v1475
      %v1477 = vpop.f32.mrb[0].mxu0
      %1478 = vmatprep.mubr.bf16.mxu0 0
      %1479 = vmatmul.mubr.bf16.gmra.mrb[0].mxu0 %v1339
      %v1480 = vpop.f32.mrb[0].mxu0
      %v1481 = vadd.f32 %v1364, %v1480
      %v1482 = vpop.f32.mrb[0].mxu0
      %v1483 = vpop.f32.mrb[0].mxu0
      %v1484 = vadd.f32 %v1364, %v1483
      %v1485 = vpop.f32.mrb[0].mxu0
      %1486 = vmatprep.mubr.bf16.mxu0 0
      %1487 = vmatmul.mubr.bf16.gmra.mrb[0].mxu0 %v1340
      %v1488 = vpop.f32.mrb[0].mxu0
      %v1489 = vadd.f32 %v1364, %v1488
      %v1490 = vpop.f32.mrb[0].mxu0
      %v1491 = vpop.f32.mrb[0].mxu0
      %v1492 = vadd.f32 %v1364, %v1491
      %v1493 = vpop.f32.mrb[0].mxu0
      %1494 = vmatprep.mubr.bf16.mxu0 0
      %1495 = vmatmul.mubr.bf16.gmra.mrb[0].mxu0 %v1341
      %v1496 = vpop.f32.mrb[0].mxu0
      %v1497 = vadd.f32 %v1364, %v1496
      %v1498 = vpop.f32.mrb[0].mxu0
      %v1499 = vpop.f32.mrb[0].mxu0
      %v1500 = vadd.f32 %v1364, %v1499
      %v1501 = vpop.f32.mrb[0].mxu0
      %1502 = vmatprep.mubr.bf16.mxu0 0
      %1503 = vmatmul.mubr.bf16.gmra.mrb[0].mxu0 %v1342
      %v1504 = vpop.f32.mrb[0].mxu0
      %v1505 = vadd.f32 %v1364, %v1504
      %v1506 = vpop.f32.mrb[0].mxu0
      %v1507 = vpop.f32.mrb[0].mxu0
      %v1508 = vadd.f32 %v1364, %v1507
      %v1509 = vpop.f32.mrb[0].mxu0
      %1510 = vdwg.mxu0
      %v1511 = vtanh.pop %v1449
      %v1512 = vtanh.pop %v1452
      %v1513 = vtanh.pop %v1457
      %v1514 = vtanh.pop %v1460
      %v1515 = vtanh.pop %v1465
      %v1516 = vtanh.pop %v1468
      %v1517 = vtanh.pop %v1473
      %v1518 = vtanh.pop %v1476
      %v1519 = vtanh.pop %v1481
      %v1520 = vtanh.pop %v1484
      %v1521 = vtanh.pop %v1489
      %v1522 = vtanh.pop %v1492
      %v1523 = vtanh.pop %v1497
      %v1524 = vtanh.pop %v1500
      %v1525 = vtanh.pop %v1505
      %v1526 = vtanh.pop %v1508
      %v1527 = vpack.c.bf16 %v1512, %v1511
      %v1528 = vpack.c.bf16 %v1514, %v1513
      %v1529 = vpack.c.bf16 %v1516, %v1515
      %v1530 = vpack.c.bf16 %v1518, %v1517
      %v1531 = vpack.c.bf16 %v1520, %v1519
      %v1532 = vpack.c.bf16 %v1522, %v1521
      %v1533 = vpack.c.bf16 %v1524, %v1523
      %v1534 = vpack.c.bf16 %v1526, %v1525
      %v1535 = vld [vmem:[%s11] sm:$0xf]
      %v1536 = vld [vmem:[%s11 + $0x4] sm:$0xf]
      %v1537 = vld [vmem:[%s11 + $0x8] sm:$0xf]
      %v1538 = vld [vmem:[%s11 + $0xc] sm:$0xf]
      %v1539 = vld [vmem:[%s11 + $0x10] sm:$0xf]
      %v1540 = vld [vmem:[%s11 + $0x14] sm:$0xf]
      %v1541 = vld [vmem:[%s11 + $0x18] sm:$0xf]
      %v1542 = vld [vmem:[%s11 + $0x1c] sm:$0xf]
      %v1543 = vld [vmem:[%s11 + $0x20] sm:$0xf]
      %v1544 = vld [vmem:[%s11 + $0x24] sm:$0xf]
      %v1545 = vld [vmem:[%s11 + $0x28] sm:$0xf]
      %v1546 = vld [vmem:[%s11 + $0x2c] sm:$0xf]
      %v1547 = vld [vmem:[%s11 + $0x30] sm:$0xf]
      %v1548 = vld [vmem:[%s11 + $0x34] sm:$0xf]
      %v1549 = vld [vmem:[%s11 + $0x38] sm:$0xf]
      %v1550 = vld [vmem:[%s11 + $0x3c] sm:$0xf]
      %v1551 = vld [vmem:[%s12] sm:$0x1]
      %v1553 = vlaneseq
      %v1554 = vshrl.u32 %v1553, 7
      %v1555 = vsub.s32 0, %v1554
      %v1556 = vrot.slane %v1551, %v1555
      %v1574 = vunpack.c.l.b16 %v1535
      %v1575 = vunpack.c.l.b16 %v1536
      %v1576 = vunpack.c.l.b16 %v1537
      %v1577 = vunpack.c.l.b16 %v1538
      %v1578 = vunpack.c.l.b16 %v1539
      %v1579 = vunpack.c.l.b16 %v1540
      %v1580 = vunpack.c.l.b16 %v1541
      %v1581 = vunpack.c.l.b16 %v1542
      %v1582 = vunpack.c.l.b16 %v1543
      %v1583 = vunpack.c.l.b16 %v1544
      %v1584 = vunpack.c.l.b16 %v1545
      %v1585 = vunpack.c.l.b16 %v1546
      %v1586 = vunpack.c.l.b16 %v1547
      %v1587 = vunpack.c.l.b16 %v1548
      %v1588 = vunpack.c.l.b16 %v1549
      %v1589 = vunpack.c.l.b16 %v1550
      %v1590 = vpack.c.b16 %v1575, %v1574
      %v1591 = vpack.c.b16 %v1577, %v1576
      %v1592 = vpack.c.b16 %v1579, %v1578
      %v1593 = vpack.c.b16 %v1581, %v1580
      %v1594 = vpack.c.b16 %v1583, %v1582
      %v1595 = vpack.c.b16 %v1585, %v1584
      %v1596 = vpack.c.b16 %v1587, %v1586
      %v1597 = vpack.c.b16 %v1589, %v1588
      %1606 = vmatprep.subr.bf16.mxu0 0
      %1607 = vmatpush1.bf16.msra.mxu0 %v1590
      %1608 = vmatprep.subr.bf16.mxu0 0
      %1609 = vmatpush1.bf16.msra.mxu0 %v1591
      %1610 = vmatprep.subr.bf16.mxu0 0
      %1611 = vmatpush1.bf16.msra.mxu0 %v1592
      %1612 = vmatprep.subr.bf16.mxu0 0
      %1613 = vmatpush1.bf16.msra.mxu0 %v1593
      %1614 = vmatprep.subr.bf16.mxu0 0
      %1615 = vmatpush1.bf16.msra.mxu0 %v1594
      %1616 = vmatprep.subr.bf16.mxu0 0
      %1617 = vmatpush1.bf16.msra.mxu0 %v1595
      %1618 = vmatprep.subr.bf16.mxu0 0
      %1619 = vmatpush1.bf16.msra.mxu0 %v1596
      %1620 = vmatprep.subr.bf16.mxu0 0
      %1621 = vmatpush1.bf16.msra.mxu0 %v1597
      %1622 = vmatprep.subr.bf16.mxu0 0
      %1623 = vmatpush1.bf16.msra.mxu0 0
      %1624 = vmatprep.subr.bf16.mxu0 0
      %1625 = vmatpush1.bf16.msra.mxu0 0
      %1626 = vmatprep.subr.bf16.mxu0 0
      %1627 = vmatpush1.bf16.msra.mxu0 0
      %1628 = vmatprep.subr.bf16.mxu0 0
      %1629 = vmatpush1.bf16.msra.mxu0 0
      %1630 = vmatprep.subr.bf16.mxu0 0
      %1631 = vmatpush1.bf16.msra.mxu0 0
      %1632 = vmatprep.subr.bf16.mxu0 0
      %1633 = vmatpush1.bf16.msra.mxu0 0
      %1634 = vmatprep.subr.bf16.mxu0 0
      %1635 = vmatpush1.bf16.msra.mxu0 0
      %1636 = vmatprep.subr.bf16.mxu0 0
      %1637 = vmatpush1.bf16.msra.mxu0 0
      %1638 = vmatprep.mubr.bf16.mxu0 0
      %1639 = vmatmul.mubr.bf16.gmra.mrb[0].mxu0 %v1527
      %v1640 = vpop.f32.mrb[0].mxu0
      %v1641 = vadd.f32 %v1556, %v1640
      %v1642 = vpop.f32.mrb[0].mxu0
      %v1643 = vpop.f32.mrb[0].mxu0
      %v1644 = vadd.f32 %v1556, %v1643
      %v1645 = vpop.f32.mrb[0].mxu0
      %1646 = vmatprep.mubr.bf16.mxu0 0
      %1647 = vmatmul.mubr.bf16.gmra.mrb[0].mxu0 %v1528
      %v1648 = vpop.f32.mrb[0].mxu0
      %v1649 = vadd.f32 %v1556, %v1648
      %v1650 = vpop.f32.mrb[0].mxu0
      %v1651 = vpop.f32.mrb[0].mxu0
      %v1652 = vadd.f32 %v1556, %v1651
      %v1653 = vpop.f32.mrb[0].mxu0
      %1654 = vmatprep.mubr.bf16.mxu0 0
      %1655 = vmatmul.mubr.bf16.gmra.mrb[0].mxu0 %v1529
      %v1656 = vpop.f32.mrb[0].mxu0
      %v1657 = vadd.f32 %v1556, %v1656
      %v1658 = vpop.f32.mrb[0].mxu0
      %v1659 = vpop.f32.mrb[0].mxu0
      %v1660 = vadd.f32 %v1556, %v1659
      %v1661 = vpop.f32.mrb[0].mxu0
      %1662 = vmatprep.mubr.bf16.mxu0 0
      %1663 = vmatmul.mubr.bf16.gmra.mrb[0].mxu0 %v1530
      %v1664 = vpop.f32.mrb[0].mxu0
      %v1665 = vadd.f32 %v1556, %v1664
      %v1666 = vpop.f32.mrb[0].mxu0
      %v1667 = vpop.f32.mrb[0].mxu0
      %v1668 = vadd.f32 %v1556, %v1667
      %v1669 = vpop.f32.mrb[0].mxu0
      %1670 = vmatprep.mubr.bf16.mxu0 0
      %1671 = vmatmul.mubr.bf16.gmra.mrb[0].mxu0 %v1531
      %v1672 = vpop.f32.mrb[0].mxu0
      %v1673 = vadd.f32 %v1556, %v1672
      %v1674 = vpop.f32.mrb[0].mxu0
      %v1675 = vpop.f32.mrb[0].mxu0
      %v1676 = vadd.f32 %v1556, %v1675
      %v1677 = vpop.f32.mrb[0].mxu0
      %1678 = vmatprep.mubr.bf16.mxu0 0
      %1679 = vmatmul.mubr.bf16.gmra.mrb[0].mxu0 %v1532
      %v1680 = vpop.f32.mrb[0].mxu0
      %v1681 = vadd.f32 %v1556, %v1680
      %v1682 = vpop.f32.mrb[0].mxu0
      %v1683 = vpop.f32.mrb[0].mxu0
      %v1684 = vadd.f32 %v1556, %v1683
      %v1685 = vpop.f32.mrb[0].mxu0
      %1686 = vmatprep.mubr.bf16.mxu0 0
      %1687 = vmatmul.mubr.bf16.gmra.mrb[0].mxu0 %v1533
      %v1688 = vpop.f32.mrb[0].mxu0
      %v1689 = vadd.f32 %v1556, %v1688
      %v1690 = vpop.f32.mrb[0].mxu0
      %v1691 = vpop.f32.mrb[0].mxu0
      %v1692 = vadd.f32 %v1556, %v1691
      %v1693 = vpop.f32.mrb[0].mxu0
      %1694 = vmatprep.mubr.bf16.mxu0 0
      %1695 = vmatmul.mubr.bf16.gmra.mrb[0].mxu0 %v1534
      %v1696 = vpop.f32.mrb[0].mxu0
      %v1697 = vadd.f32 %v1556, %v1696
      %v1698 = vpop.f32.mrb[0].mxu0
      %v1699 = vpop.f32.mrb[0].mxu0
      %v1700 = vadd.f32 %v1556, %v1699
      %v1701 = vpop.f32.mrb[0].mxu0
      %1702 = vdwg.mxu0
      %v1703 = vtanh.pop %v1641
      %v1704 = vtanh.pop %v1644
      %v1705 = vtanh.pop %v1649
      %v1706 = vtanh.pop %v1652
      %v1707 = vtanh.pop %v1657
      %v1708 = vtanh.pop %v1660
      %v1709 = vtanh.pop %v1665
      %v1710 = vtanh.pop %v1668
      %v1711 = vtanh.pop %v1673
      %v1712 = vtanh.pop %v1676
      %v1713 = vtanh.pop %v1681
      %v1714 = vtanh.pop %v1684
      %v1715 = vtanh.pop %v1689
      %v1716 = vtanh.pop %v1692
      %v1717 = vtanh.pop %v1697
      %v1718 = vtanh.pop %v1700
      %v1719 = vpack.c.bf16 %v1704, %v1703
      %v1720 = vpack.c.bf16 %v1706, %v1705
      %v1721 = vpack.c.bf16 %v1708, %v1707
      %v1722 = vpack.c.bf16 %v1710, %v1709
      %v1723 = vpack.c.bf16 %v1712, %v1711
      %v1724 = vpack.c.bf16 %v1714, %v1713
      %v1725 = vpack.c.bf16 %v1716, %v1715
      %v1726 = vpack.c.bf16 %v1718, %v1717
      %v1727 = vld [vmem:[%s13] sm:$0xf]
      %v1728 = vld [vmem:[%s13 + $0x4] sm:$0xf]
      %v1729 = vld [vmem:[%s13 + $0x8] sm:$0xf]
      %v1730 = vld [vmem:[%s13 + $0xc] sm:$0xf]
      %v1731 = vld [vmem:[%s13 + $0x10] sm:$0xf]
      %v1732 = vld [vmem:[%s13 + $0x14] sm:$0xf]
      %v1733 = vld [vmem:[%s13 + $0x18] sm:$0xf]
      %v1734 = vld [vmem:[%s13 + $0x1c] sm:$0xf]
      %v1735 = vld [vmem:[%s13 + $0x20] sm:$0xf]
      %v1736 = vld [vmem:[%s13 + $0x24] sm:$0xf]
      %v1737 = vld [vmem:[%s13 + $0x28] sm:$0xf]
      %v1738 = vld [vmem:[%s13 + $0x2c] sm:$0xf]
      %v1739 = vld [vmem:[%s13 + $0x30] sm:$0xf]
      %v1740 = vld [vmem:[%s13 + $0x34] sm:$0xf]
      %v1741 = vld [vmem:[%s13 + $0x38] sm:$0xf]
      %v1742 = vld [vmem:[%s13 + $0x3c] sm:$0xf]
      %v1743 = vld [vmem:[%s14] sm:$0x1]
      %v1745 = vlaneseq
      %v1746 = vshrl.u32 %v1745, 7
      %v1747 = vsub.s32 0, %v1746
      %v1748 = vrot.slane %v1743, %v1747
      %v1766 = vunpack.c.l.b16 %v1727
      %v1767 = vunpack.c.l.b16 %v1728
      %v1768 = vunpack.c.l.b16 %v1729
      %v1769 = vunpack.c.l.b16 %v1730
      %v1770 = vunpack.c.l.b16 %v1731
      %v1771 = vunpack.c.l.b16 %v1732
      %v1772 = vunpack.c.l.b16 %v1733
      %v1773 = vunpack.c.l.b16 %v1734
      %v1774 = vunpack.c.l.b16 %v1735
      %v1775 = vunpack.c.l.b16 %v1736
      %v1776 = vunpack.c.l.b16 %v1737
      %v1777 = vunpack.c.l.b16 %v1738
      %v1778 = vunpack.c.l.b16 %v1739
      %v1779 = vunpack.c.l.b16 %v1740
      %v1780 = vunpack.c.l.b16 %v1741
      %v1781 = vunpack.c.l.b16 %v1742
      %v1782 = vpack.c.b16 %v1767, %v1766
      %v1783 = vpack.c.b16 %v1769, %v1768
      %v1784 = vpack.c.b16 %v1771, %v1770
      %v1785 = vpack.c.b16 %v1773, %v1772
      %v1786 = vpack.c.b16 %v1775, %v1774
      %v1787 = vpack.c.b16 %v1777, %v1776
      %v1788 = vpack.c.b16 %v1779, %v1778
      %v1789 = vpack.c.b16 %v1781, %v1780
      %1798 = vmatprep.subr.bf16.mxu0 0
      %1799 = vmatpush1.bf16.msra.mxu0 %v1782
      %1800 = vmatprep.subr.bf16.mxu0 0
      %1801 = vmatpush1.bf16.msra.mxu0 %v1783
      %1802 = vmatprep.subr.bf16.mxu0 0
      %1803 = vmatpush1.bf16.msra.mxu0 %v1784
      %1804 = vmatprep.subr.bf16.mxu0 0
      %1805 = vmatpush1.bf16.msra.mxu0 %v1785
      %1806 = vmatprep.subr.bf16.mxu0 0
      %1807 = vmatpush1.bf16.msra.mxu0 %v1786
      %1808 = vmatprep.subr.bf16.mxu0 0
      %1809 = vmatpush1.bf16.msra.mxu0 %v1787
      %1810 = vmatprep.subr.bf16.mxu0 0
      %1811 = vmatpush1.bf16.msra.mxu0 %v1788
      %1812 = vmatprep.subr.bf16.mxu0 0
      %1813 = vmatpush1.bf16.msra.mxu0 %v1789
      %1814 = vmatprep.subr.bf16.mxu0 0
      %1815 = vmatpush1.bf16.msra.mxu0 0
      %1816 = vmatprep.subr.bf16.mxu0 0
      %1817 = vmatpush1.bf16.msra.mxu0 0
      %1818 = vmatprep.subr.bf16.mxu0 0
      %1819 = vmatpush1.bf16.msra.mxu0 0
      %1820 = vmatprep.subr.bf16.mxu0 0
      %1821 = vmatpush1.bf16.msra.mxu0 0
      %1822 = vmatprep.subr.bf16.mxu0 0
      %1823 = vmatpush1.bf16.msra.mxu0 0
      %1824 = vmatprep.subr.bf16.mxu0 0
      %1825 = vmatpush1.bf16.msra.mxu0 0
      %1826 = vmatprep.subr.bf16.mxu0 0
      %1827 = vmatpush1.bf16.msra.mxu0 0
      %1828 = vmatprep.subr.bf16.mxu0 0
      %1829 = vmatpush1.bf16.msra.mxu0 0
      %1830 = vmatprep.mubr.bf16.mxu0 0
      %1831 = vmatmul.mubr.bf16.gmra.mrb[0].mxu0 %v1719
      %v1832 = vpop.f32.mrb[0].mxu0
      %v1833 = vadd.f32 %v1748, %v1832
      %v1834 = vpop.f32.mrb[0].mxu0
      %v1835 = vpop.f32.mrb[0].mxu0
      %v1836 = vadd.f32 %v1748, %v1835
      %v1837 = vpop.f32.mrb[0].mxu0
      %1838 = vmatprep.mubr.bf16.mxu0 0
      %1839 = vmatmul.mubr.bf16.gmra.mrb[0].mxu0 %v1720
      %v1840 = vpop.f32.mrb[0].mxu0
      %v1841 = vadd.f32 %v1748, %v1840
      %v1842 = vpop.f32.mrb[0].mxu0
      %v1843 = vpop.f32.mrb[0].mxu0
      %v1844 = vadd.f32 %v1748, %v1843
      %v1845 = vpop.f32.mrb[0].mxu0
      %1846 = vmatprep.mubr.bf16.mxu0 0
      %1847 = vmatmul.mubr.bf16.gmra.mrb[0].mxu0 %v1721
      %v1848 = vpop.f32.mrb[0].mxu0
      %v1849 = vadd.f32 %v1748, %v1848
      %v1850 = vpop.f32.mrb[0].mxu0
      %v1851 = vpop.f32.mrb[0].mxu0
      %v1852 = vadd.f32 %v1748, %v1851
      %v1853 = vpop.f32.mrb[0].mxu0
      %1854 = vmatprep.mubr.bf16.mxu0 0
      %1855 = vmatmul.mubr.bf16.gmra.mrb[0].mxu0 %v1722
      %v1856 = vpop.f32.mrb[0].mxu0
      %v1857 = vadd.f32 %v1748, %v1856
      %v1858 = vpop.f32.mrb[0].mxu0
      %v1859 = vpop.f32.mrb[0].mxu0
      %v1860 = vadd.f32 %v1748, %v1859
      %v1861 = vpop.f32.mrb[0].mxu0
      %1862 = vmatprep.mubr.bf16.mxu0 0
      %1863 = vmatmul.mubr.bf16.gmra.mrb[0].mxu0 %v1723
      %v1864 = vpop.f32.mrb[0].mxu0
      %v1865 = vadd.f32 %v1748, %v1864
      %v1866 = vpop.f32.mrb[0].mxu0
      %v1867 = vpop.f32.mrb[0].mxu0
      %v1868 = vadd.f32 %v1748, %v1867
      %v1869 = vpop.f32.mrb[0].mxu0
      %1870 = vmatprep.mubr.bf16.mxu0 0
      %1871 = vmatmul.mubr.bf16.gmra.mrb[0].mxu0 %v1724
      %v1872 = vpop.f32.mrb[0].mxu0
      %v1873 = vadd.f32 %v1748, %v1872
      %v1874 = vpop.f32.mrb[0].mxu0
      %v1875 = vpop.f32.mrb[0].mxu0
      %v1876 = vadd.f32 %v1748, %v1875
      %v1877 = vpop.f32.mrb[0].mxu0
      %1878 = vmatprep.mubr.bf16.mxu0 0
      %1879 = vmatmul.mubr.bf16.gmra.mrb[0].mxu0 %v1725
      %v1880 = vpop.f32.mrb[0].mxu0
      %v1881 = vadd.f32 %v1748, %v1880
      %v1882 = vpop.f32.mrb[0].mxu0
      %v1883 = vpop.f32.mrb[0].mxu0
      %v1884 = vadd.f32 %v1748, %v1883
      %v1885 = vpop.f32.mrb[0].mxu0
      %1886 = vmatprep.mubr.bf16.mxu0 0
      %1887 = vmatmul.mubr.bf16.gmra.mrb[0].mxu0 %v1726
      %v1888 = vpop.f32.mrb[0].mxu0
      %v1889 = vadd.f32 %v1748, %v1888
      %v1890 = vpop.f32.mrb[0].mxu0
      %v1891 = vpop.f32.mrb[0].mxu0
      %v1892 = vadd.f32 %v1748, %v1891
      %v1893 = vpop.f32.mrb[0].mxu0
      %1894 = vdwg.mxu0
      %v1895 = vtanh.pop %v1833
      %v1896 = vtanh.pop %v1836
      %v1897 = vtanh.pop %v1841
      %v1898 = vtanh.pop %v1844
      %v1899 = vtanh.pop %v1849
      %v1900 = vtanh.pop %v1852
      %v1901 = vtanh.pop %v1857
      %v1902 = vtanh.pop %v1860
      %v1903 = vtanh.pop %v1865
      %v1904 = vtanh.pop %v1868
      %v1905 = vtanh.pop %v1873
      %v1906 = vtanh.pop %v1876
      %v1907 = vtanh.pop %v1881
      %v1908 = vtanh.pop %v1884
      %v1909 = vtanh.pop %v1889
      %v1910 = vtanh.pop %v1892
      %v1911 = vpack.c.bf16 %v1896, %v1895
      %v1912 = vpack.c.bf16 %v1898, %v1897
      %v1913 = vpack.c.bf16 %v1900, %v1899
      %v1914 = vpack.c.bf16 %v1902, %v1901
      %v1915 = vpack.c.bf16 %v1904, %v1903
      %v1916 = vpack.c.bf16 %v1906, %v1905
      %v1917 = vpack.c.bf16 %v1908, %v1907
      %v1918 = vpack.c.bf16 %v1910, %v1909
      %v1919 = vld [vmem:[%s15] sm:$0xf]
      %v1920 = vld [vmem:[%s15 + $0x4] sm:$0xf]
      %v1921 = vld [vmem:[%s15 + $0x8] sm:$0xf]
      %v1922 = vld [vmem:[%s15 + $0xc] sm:$0xf]
      %v1923 = vld [vmem:[%s15 + $0x10] sm:$0xf]
      %v1924 = vld [vmem:[%s15 + $0x14] sm:$0xf]
      %v1925 = vld [vmem:[%s15 + $0x18] sm:$0xf]
      %v1926 = vld [vmem:[%s15 + $0x1c] sm:$0xf]
      %v1927 = vld [vmem:[%s15 + $0x20] sm:$0xf]
      %v1928 = vld [vmem:[%s15 + $0x24] sm:$0xf]
      %v1929 = vld [vmem:[%s15 + $0x28] sm:$0xf]
      %v1930 = vld [vmem:[%s15 + $0x2c] sm:$0xf]
      %v1931 = vld [vmem:[%s15 + $0x30] sm:$0xf]
      %v1932 = vld [vmem:[%s15 + $0x34] sm:$0xf]
      %v1933 = vld [vmem:[%s15 + $0x38] sm:$0xf]
      %v1934 = vld [vmem:[%s15 + $0x3c] sm:$0xf]
      %v1935 = vld [vmem:[%s16] sm:$0x1]
      %v1937 = vlaneseq
      %v1938 = vshrl.u32 %v1937, 7
      %v1939 = vsub.s32 0, %v1938
      %v1940 = vrot.slane %v1935, %v1939
      %v1958 = vunpack.c.l.b16 %v1919
      %v1959 = vunpack.c.l.b16 %v1920
      %v1960 = vunpack.c.l.b16 %v1921
      %v1961 = vunpack.c.l.b16 %v1922
      %v1962 = vunpack.c.l.b16 %v1923
      %v1963 = vunpack.c.l.b16 %v1924
      %v1964 = vunpack.c.l.b16 %v1925
      %v1965 = vunpack.c.l.b16 %v1926
      %v1966 = vunpack.c.l.b16 %v1927
      %v1967 = vunpack.c.l.b16 %v1928
      %v1968 = vunpack.c.l.b16 %v1929
      %v1969 = vunpack.c.l.b16 %v1930
      %v1970 = vunpack.c.l.b16 %v1931
      %v1971 = vunpack.c.l.b16 %v1932
      %v1972 = vunpack.c.l.b16 %v1933
      %v1973 = vunpack.c.l.b16 %v1934
      %v1974 = vpack.c.b16 %v1959, %v1958
      %v1975 = vpack.c.b16 %v1961, %v1960
      %v1976 = vpack.c.b16 %v1963, %v1962
      %v1977 = vpack.c.b16 %v1965, %v1964
      %v1978 = vpack.c.b16 %v1967, %v1966
      %v1979 = vpack.c.b16 %v1969, %v1968
      %v1980 = vpack.c.b16 %v1971, %v1970
      %v1981 = vpack.c.b16 %v1973, %v1972
      %1990 = vmatprep.subr.bf16.mxu0 0
      %1991 = vmatpush1.bf16.msra.mxu0 %v1974
      %1992 = vmatprep.subr.bf16.mxu0 0
      %1993 = vmatpush1.bf16.msra.mxu0 %v1975
      %1994 = vmatprep.subr.bf16.mxu0 0
      %1995 = vmatpush1.bf16.msra.mxu0 %v1976
      %1996 = vmatprep.subr.bf16.mxu0 0
      %1997 = vmatpush1.bf16.msra.mxu0 %v1977
      %1998 = vmatprep.subr.bf16.mxu0 0
      %1999 = vmatpush1.bf16.msra.mxu0 %v1978
      %2000 = vmatprep.subr.bf16.mxu0 0
      %2001 = vmatpush1.bf16.msra.mxu0 %v1979
      %2002 = vmatprep.subr.bf16.mxu0 0
      %2003 = vmatpush1.bf16.msra.mxu0 %v1980
      %2004 = vmatprep.subr.bf16.mxu0 0
      %2005 = vmatpush1.bf16.msra.mxu0 %v1981
      %2006 = vmatprep.subr.bf16.mxu0 0
      %2007 = vmatpush1.bf16.msra.mxu0 0
      %2008 = vmatprep.subr.bf16.mxu0 0
      %2009 = vmatpush1.bf16.msra.mxu0 0
      %2010 = vmatprep.subr.bf16.mxu0 0
      %2011 = vmatpush1.bf16.msra.mxu0 0
      %2012 = vmatprep.subr.bf16.mxu0 0
      %2013 = vmatpush1.bf16.msra.mxu0 0
      %2014 = vmatprep.subr.bf16.mxu0 0
      %2015 = vmatpush1.bf16.msra.mxu0 0
      %2016 = vmatprep.subr.bf16.mxu0 0
      %2017 = vmatpush1.bf16.msra.mxu0 0
      %2018 = vmatprep.subr.bf16.mxu0 0
      %2019 = vmatpush1.bf16.msra.mxu0 0
      %2020 = vmatprep.subr.bf16.mxu0 0
      %2021 = vmatpush1.bf16.msra.mxu0 0
      %2022 = vmatprep.mubr.bf16.mxu0 0
      %2023 = vmatmul.mubr.bf16.gmra.mrb[0].mxu0 %v1911
      %v2024 = vpop.f32.mrb[0].mxu0
      %v2025 = vadd.f32 %v1940, %v2024
      %v2026 = vpop.f32.mrb[0].mxu0
      %v2027 = vpop.f32.mrb[0].mxu0
      %v2028 = vadd.f32 %v1940, %v2027
      %v2029 = vpop.f32.mrb[0].mxu0
      %2030 = vmatprep.mubr.bf16.mxu0 0
      %2031 = vmatmul.mubr.bf16.gmra.mrb[0].mxu0 %v1912
      %v2032 = vpop.f32.mrb[0].mxu0
      %v2033 = vadd.f32 %v1940, %v2032
      %v2034 = vpop.f32.mrb[0].mxu0
      %v2035 = vpop.f32.mrb[0].mxu0
      %v2036 = vadd.f32 %v1940, %v2035
      %v2037 = vpop.f32.mrb[0].mxu0
      %2038 = vmatprep.mubr.bf16.mxu0 0
      %2039 = vmatmul.mubr.bf16.gmra.mrb[0].mxu0 %v1913
      %v2040 = vpop.f32.mrb[0].mxu0
      %v2041 = vadd.f32 %v1940, %v2040
      %v2042 = vpop.f32.mrb[0].mxu0
      %v2043 = vpop.f32.mrb[0].mxu0
      %v2044 = vadd.f32 %v1940, %v2043
      %v2045 = vpop.f32.mrb[0].mxu0
      %2046 = vmatprep.mubr.bf16.mxu0 0
      %2047 = vmatmul.mubr.bf16.gmra.mrb[0].mxu0 %v1914
      %v2048 = vpop.f32.mrb[0].mxu0
      %v2049 = vadd.f32 %v1940, %v2048
      %v2050 = vpop.f32.mrb[0].mxu0
      %v2051 = vpop.f32.mrb[0].mxu0
      %v2052 = vadd.f32 %v1940, %v2051
      %v2053 = vpop.f32.mrb[0].mxu0
      %2054 = vmatprep.mubr.bf16.mxu0 0
      %2055 = vmatmul.mubr.bf16.gmra.mrb[0].mxu0 %v1915
      %v2056 = vpop.f32.mrb[0].mxu0
      %v2057 = vadd.f32 %v1940, %v2056
      %v2058 = vpop.f32.mrb[0].mxu0
      %v2059 = vpop.f32.mrb[0].mxu0
      %v2060 = vadd.f32 %v1940, %v2059
      %v2061 = vpop.f32.mrb[0].mxu0
      %2062 = vmatprep.mubr.bf16.mxu0 0
      %2063 = vmatmul.mubr.bf16.gmra.mrb[0].mxu0 %v1916
      %v2064 = vpop.f32.mrb[0].mxu0
      %v2065 = vadd.f32 %v1940, %v2064
      %v2066 = vpop.f32.mrb[0].mxu0
      %v2067 = vpop.f32.mrb[0].mxu0
      %v2068 = vadd.f32 %v1940, %v2067
      %v2069 = vpop.f32.mrb[0].mxu0
      %2070 = vmatprep.mubr.bf16.mxu0 0
      %2071 = vmatmul.mubr.bf16.gmra.mrb[0].mxu0 %v1917
      %v2072 = vpop.f32.mrb[0].mxu0
      %v2073 = vadd.f32 %v1940, %v2072
      %v2074 = vpop.f32.mrb[0].mxu0
      %v2075 = vpop.f32.mrb[0].mxu0
      %v2076 = vadd.f32 %v1940, %v2075
      %v2077 = vpop.f32.mrb[0].mxu0
      %2078 = vmatprep.mubr.bf16.mxu0 0
      %2079 = vmatmul.mubr.bf16.gmra.mrb[0].mxu0 %v1918
      %v2080 = vpop.f32.mrb[0].mxu0
      %v2081 = vadd.f32 %v1940, %v2080
      %v2082 = vpop.f32.mrb[0].mxu0
      %v2083 = vpop.f32.mrb[0].mxu0
      %v2084 = vadd.f32 %v1940, %v2083
      %v2085 = vpop.f32.mrb[0].mxu0
      %2086 = vdwg.mxu0
      %2087 = vst.msk [vmem:[%s550] sm:$0xff] %vm617, %v2025
      %2088 = vst.msk [vmem:[%s550 + $0x8] sm:$0xff] %vm617, %v2028
      %2089 = vst.msk [vmem:[%s550 + $0x10] sm:$0xff] %vm617, %v2033
      %2090 = vst.msk [vmem:[%s550 + $0x18] sm:$0xff] %vm617, %v2036
      %2091 = vst.msk [vmem:[%s550 + $0x20] sm:$0xff] %vm617, %v2041
      %2092 = vst.msk [vmem:[%s550 + $0x28] sm:$0xff] %vm617, %v2044
      %2093 = vst.msk [vmem:[%s550 + $0x30] sm:$0xff] %vm617, %v2049
      %2094 = vst.msk [vmem:[%s550 + $0x38] sm:$0xff] %vm617, %v2052
      %2095 = vst.msk [vmem:[%s550 + $0x40] sm:$0xff] %vm617, %v2057
      %2096 = vst.msk [vmem:[%s550 + $0x48] sm:$0xff] %vm617, %v2060
      %2097 = vst.msk [vmem:[%s550 + $0x50] sm:$0xff] %vm617, %v2065
      %2098 = vst.msk [vmem:[%s550 + $0x58] sm:$0xff] %vm617, %v2068
      %2099 = vst.msk [vmem:[%s550 + $0x60] sm:$0xff] %vm617, %v2073
      %2100 = vst.msk [vmem:[%s550 + $0x68] sm:$0xff] %vm617, %v2076
      %2101 = vst.msk [vmem:[%s550 + $0x70] sm:$0xff] %vm617, %v2081
      %2102 = vst.msk [vmem:[%s550 + $0x78] sm:$0xff] %vm617, %v2084
      %s2103 = scalar_lea.vmem %s544, 64
      %v2104 = vld [vmem:[%s2103] sm:$0xf]
      %v2105 = vld [vmem:[%s2103 + $0x4] sm:$0xf]
      %v2106 = vld [vmem:[%s2103 + $0x8] sm:$0xf]
      %v2107 = vld [vmem:[%s2103 + $0xc] sm:$0xf]
      %v2108 = vld [vmem:[%s2103 + $0x10] sm:$0xf]
      %v2109 = vld [vmem:[%s2103 + $0x14] sm:$0xf]
      %v2110 = vld [vmem:[%s2103 + $0x18] sm:$0xf]
      %v2111 = vld [vmem:[%s2103 + $0x1c] sm:$0xf]
      %v2112 = vld [vmem:[%s2103 + $0x20] sm:$0xf]
      %v2113 = vld [vmem:[%s2103 + $0x24] sm:$0xf]
      %v2114 = vld [vmem:[%s2103 + $0x28] sm:$0xf]
      %v2115 = vld [vmem:[%s2103 + $0x2c] sm:$0xf]
      %v2116 = vld [vmem:[%s2103 + $0x30] sm:$0xf]
      %v2117 = vld [vmem:[%s2103 + $0x34] sm:$0xf]
      %v2118 = vld [vmem:[%s2103 + $0x38] sm:$0xf]
      %v2119 = vld [vmem:[%s2103 + $0x3c] sm:$0xf]
      %v2120 = vld [vmem:[%s1] sm:$0xf]
      %v2121 = vld [vmem:[%s2] sm:$0x1]
      %v2123 = vlaneseq
      %v2124 = vshrl.u32 %v2123, 7
      %v2125 = vsub.s32 0, %v2124
      %v2126 = vrot.slane %v2121, %v2125
      %v2144 = vunpack.c.l.b16 %v2104
      %v2145 = vunpack.c.l.b16 %v2105
      %v2146 = vunpack.c.l.b16 %v2106
      %v2147 = vunpack.c.l.b16 %v2107
      %v2148 = vunpack.c.l.b16 %v2108
      %v2149 = vunpack.c.l.b16 %v2109
      %v2150 = vunpack.c.l.b16 %v2110
      %v2151 = vunpack.c.l.b16 %v2111
      %v2152 = vunpack.c.l.b16 %v2112
      %v2153 = vunpack.c.l.b16 %v2113
      %v2154 = vunpack.c.l.b16 %v2114
      %v2155 = vunpack.c.l.b16 %v2115
      %v2156 = vunpack.c.l.b16 %v2116
      %v2157 = vunpack.c.l.b16 %v2117
      %v2158 = vunpack.c.l.b16 %v2118
      %v2159 = vunpack.c.l.b16 %v2119
      %v2160 = vpack.c.b16 %v2145, %v2144
      %v2161 = vpack.c.b16 %v2147, %v2146
      %v2162 = vpack.c.b16 %v2149, %v2148
      %v2163 = vpack.c.b16 %v2151, %v2150
      %v2164 = vpack.c.b16 %v2153, %v2152
      %v2165 = vpack.c.b16 %v2155, %v2154
      %v2166 = vpack.c.b16 %v2157, %v2156
      %v2167 = vpack.c.b16 %v2159, %v2158
      %v2169 = vsel %vm617, %v2160, 0
      %v2172 = vsel %vm617, %v2161, 0
      %v2175 = vsel %vm617, %v2162, 0
      %v2178 = vsel %vm617, %v2163, 0
      %v2181 = vsel %vm617, %v2164, 0
      %v2184 = vsel %vm617, %v2165, 0
      %v2187 = vsel %vm617, %v2166, 0
      %v2190 = vsel %vm617, %v2167, 0
      %v2193 = vsel %vm642, %v2120, 0
      %2195 = vmatprep.subr.bf16.mxu0 0
      %2196 = vmatpush1.bf16.msra.mxu0 %v2193
      %2197 = vmatprep.subr.bf16.mxu0 0
      %2198 = vmatpush1.bf16.msra.mxu0 0
      %2199 = vmatprep.subr.bf16.mxu0 0
      %2200 = vmatpush1.bf16.msra.mxu0 0
      %2201 = vmatprep.subr.bf16.mxu0 0
      %2202 = vmatpush1.bf16.msra.mxu0 0
      %2203 = vmatprep.subr.bf16.mxu0 0
      %2204 = vmatpush1.bf16.msra.mxu0 0
      %2205 = vmatprep.subr.bf16.mxu0 0
      %2206 = vmatpush1.bf16.msra.mxu0 0
      %2207 = vmatprep.subr.bf16.mxu0 0
      %2208 = vmatpush1.bf16.msra.mxu0 0
      %2209 = vmatprep.subr.bf16.mxu0 0
      %2210 = vmatpush1.bf16.msra.mxu0 0
      %2211 = vmatprep.subr.bf16.mxu0 0
      %2212 = vmatpush1.bf16.msra.mxu0 0
      %2213 = vmatprep.subr.bf16.mxu0 0
      %2214 = vmatpush1.bf16.msra.mxu0 0
      %2215 = vmatprep.subr.bf16.mxu0 0
      %2216 = vmatpush1.bf16.msra.mxu0 0
      %2217 = vmatprep.subr.bf16.mxu0 0
      %2218 = vmatpush1.bf16.msra.mxu0 0
      %2219 = vmatprep.subr.bf16.mxu0 0
      %2220 = vmatpush1.bf16.msra.mxu0 0
      %2221 = vmatprep.subr.bf16.mxu0 0
      %2222 = vmatpush1.bf16.msra.mxu0 0
      %2223 = vmatprep.subr.bf16.mxu0 0
      %2224 = vmatpush1.bf16.msra.mxu0 0
      %2225 = vmatprep.subr.bf16.mxu0 0
      %2226 = vmatpush1.bf16.msra.mxu0 0
      %2227 = vmatprep.mubr.bf16.mxu0 0
      %2228 = vmatmul.mubr.bf16.gmra.mrb[0].mxu0 %v2169
      %v2229 = vpop.f32.mrb[0].mxu0
      %v2230 = vadd.f32 %v2126, %v2229
      %v2231 = vpop.f32.mrb[0].mxu0
      %v2232 = vpop.f32.mrb[0].mxu0
      %v2233 = vadd.f32 %v2126, %v2232
      %v2234 = vpop.f32.mrb[0].mxu0
      %2235 = vmatprep.mubr.bf16.mxu0 0
      %2236 = vmatmul.mubr.bf16.gmra.mrb[0].mxu0 %v2172
      %v2237 = vpop.f32.mrb[0].mxu0
      %v2238 = vadd.f32 %v2126, %v2237
      %v2239 = vpop.f32.mrb[0].mxu0
      %v2240 = vpop.f32.mrb[0].mxu0
      %v2241 = vadd.f32 %v2126, %v2240
      %v2242 = vpop.f32.mrb[0].mxu0
      %2243 = vmatprep.mubr.bf16.mxu0 0
      %2244 = vmatmul.mubr.bf16.gmra.mrb[0].mxu0 %v2175
      %v2245 = vpop.f32.mrb[0].mxu0
      %v2246 = vadd.f32 %v2126, %v2245
      %v2247 = vpop.f32.mrb[0].mxu0
      %v2248 = vpop.f32.mrb[0].mxu0
      %v2249 = vadd.f32 %v2126, %v2248
      %v2250 = vpop.f32.mrb[0].mxu0
      %2251 = vmatprep.mubr.bf16.mxu0 0
      %2252 = vmatmul.mubr.bf16.gmra.mrb[0].mxu0 %v2178
      %v2253 = vpop.f32.mrb[0].mxu0
      %v2254 = vadd.f32 %v2126, %v2253
      %v2255 = vpop.f32.mrb[0].mxu0
      %v2256 = vpop.f32.mrb[0].mxu0
      %v2257 = vadd.f32 %v2126, %v2256
      %v2258 = vpop.f32.mrb[0].mxu0
      %2259 = vmatprep.mubr.bf16.mxu0 0
      %2260 = vmatmul.mubr.bf16.gmra.mrb[0].mxu0 %v2181
      %v2261 = vpop.f32.mrb[0].mxu0
      %v2262 = vadd.f32 %v2126, %v2261
      %v2263 = vpop.f32.mrb[0].mxu0
      %v2264 = vpop.f32.mrb[0].mxu0
      %v2265 = vadd.f32 %v2126, %v2264
      %v2266 = vpop.f32.mrb[0].mxu0
      %2267 = vmatprep.mubr.bf16.mxu0 0
      %2268 = vmatmul.mubr.bf16.gmra.mrb[0].mxu0 %v2184
      %v2269 = vpop.f32.mrb[0].mxu0
      %v2270 = vadd.f32 %v2126, %v2269
      %v2271 = vpop.f32.mrb[0].mxu0
      %v2272 = vpop.f32.mrb[0].mxu0
      %v2273 = vadd.f32 %v2126, %v2272
      %v2274 = vpop.f32.mrb[0].mxu0
      %2275 = vmatprep.mubr.bf16.mxu0 0
      %2276 = vmatmul.mubr.bf16.gmra.mrb[0].mxu0 %v2187
      %v2277 = vpop.f32.mrb[0].mxu0
      %v2278 = vadd.f32 %v2126, %v2277
      %v2279 = vpop.f32.mrb[0].mxu0
      %v2280 = vpop.f32.mrb[0].mxu0
      %v2281 = vadd.f32 %v2126, %v2280
      %v2282 = vpop.f32.mrb[0].mxu0
      %2283 = vmatprep.mubr.bf16.mxu0 0
      %2284 = vmatmul.mubr.bf16.gmra.mrb[0].mxu0 %v2190
      %v2285 = vpop.f32.mrb[0].mxu0
      %v2286 = vadd.f32 %v2126, %v2285
      %v2287 = vpop.f32.mrb[0].mxu0
      %v2288 = vpop.f32.mrb[0].mxu0
      %v2289 = vadd.f32 %v2126, %v2288
      %v2290 = vpop.f32.mrb[0].mxu0
      %2291 = vdwg.mxu0
      %v2292 = vtanh.pop %v2230
      %v2293 = vtanh.pop %v2233
      %v2294 = vtanh.pop %v2238
      %v2295 = vtanh.pop %v2241
      %v2296 = vtanh.pop %v2246
      %v2297 = vtanh.pop %v2249
      %v2298 = vtanh.pop %v2254
      %v2299 = vtanh.pop %v2257
      %v2300 = vtanh.pop %v2262
      %v2301 = vtanh.pop %v2265
      %v2302 = vtanh.pop %v2270
      %v2303 = vtanh.pop %v2273
      %v2304 = vtanh.pop %v2278
      %v2305 = vtanh.pop %v2281
      %v2306 = vtanh.pop %v2286
      %v2307 = vtanh.pop %v2289
      %v2308 = vpack.c.bf16 %v2293, %v2292
      %v2309 = vpack.c.bf16 %v2295, %v2294
      %v2310 = vpack.c.bf16 %v2297, %v2296
      %v2311 = vpack.c.bf16 %v2299, %v2298
      %v2312 = vpack.c.bf16 %v2301, %v2300
      %v2313 = vpack.c.bf16 %v2303, %v2302
      %v2314 = vpack.c.bf16 %v2305, %v2304
      %v2315 = vpack.c.bf16 %v2307, %v2306
      %v2316 = vld [vmem:[%s3] sm:$0xf]
      %v2317 = vld [vmem:[%s3 + $0x4] sm:$0xf]
      %v2318 = vld [vmem:[%s3 + $0x8] sm:$0xf]
      %v2319 = vld [vmem:[%s3 + $0xc] sm:$0xf]
      %v2320 = vld [vmem:[%s3 + $0x10] sm:$0xf]
      %v2321 = vld [vmem:[%s3 + $0x14] sm:$0xf]
      %v2322 = vld [vmem:[%s3 + $0x18] sm:$0xf]
      %v2323 = vld [vmem:[%s3 + $0x1c] sm:$0xf]
      %v2324 = vld [vmem:[%s3 + $0x20] sm:$0xf]
      %v2325 = vld [vmem:[%s3 + $0x24] sm:$0xf]
      %v2326 = vld [vmem:[%s3 + $0x28] sm:$0xf]
      %v2327 = vld [vmem:[%s3 + $0x2c] sm:$0xf]
      %v2328 = vld [vmem:[%s3 + $0x30] sm:$0xf]
      %v2329 = vld [vmem:[%s3 + $0x34] sm:$0xf]
      %v2330 = vld [vmem:[%s3 + $0x38] sm:$0xf]
      %v2331 = vld [vmem:[%s3 + $0x3c] sm:$0xf]
      %v2332 = vld [vmem:[%s4] sm:$0x1]
      %v2334 = vlaneseq
      %v2335 = vshrl.u32 %v2334, 7
      %v2336 = vsub.s32 0, %v2335
      %v2337 = vrot.slane %v2332, %v2336
      %v2355 = vunpack.c.l.b16 %v2316
      %v2356 = vunpack.c.l.b16 %v2317
      %v2357 = vunpack.c.l.b16 %v2318
      %v2358 = vunpack.c.l.b16 %v2319
      %v2359 = vunpack.c.l.b16 %v2320
      %v2360 = vunpack.c.l.b16 %v2321
      %v2361 = vunpack.c.l.b16 %v2322
      %v2362 = vunpack.c.l.b16 %v2323
      %v2363 = vunpack.c.l.b16 %v2324
      %v2364 = vunpack.c.l.b16 %v2325
      %v2365 = vunpack.c.l.b16 %v2326
      %v2366 = vunpack.c.l.b16 %v2327
      %v2367 = vunpack.c.l.b16 %v2328
      %v2368 = vunpack.c.l.b16 %v2329
      %v2369 = vunpack.c.l.b16 %v2330
      %v2370 = vunpack.c.l.b16 %v2331
      %v2371 = vpack.c.b16 %v2356, %v2355
      %v2372 = vpack.c.b16 %v2358, %v2357
      %v2373 = vpack.c.b16 %v2360, %v2359
      %v2374 = vpack.c.b16 %v2362, %v2361
      %v2375 = vpack.c.b16 %v2364, %v2363
      %v2376 = vpack.c.b16 %v2366, %v2365
      %v2377 = vpack.c.b16 %v2368, %v2367
      %v2378 = vpack.c.b16 %v2370, %v2369
      %2387 = vmatprep.subr.bf16.mxu0 0
      %2388 = vmatpush1.bf16.msra.mxu0 %v2371
      %2389 = vmatprep.subr.bf16.mxu0 0
      %2390 = vmatpush1.bf16.msra.mxu0 %v2372
      %2391 = vmatprep.subr.bf16.mxu0 0
      %2392 = vmatpush1.bf16.msra.mxu0 %v2373
      %2393 = vmatprep.subr.bf16.mxu0 0
      %2394 = vmatpush1.bf16.msra.mxu0 %v2374
      %2395 = vmatprep.subr.bf16.mxu0 0
      %2396 = vmatpush1.bf16.msra.mxu0 %v2375
      %2397 = vmatprep.subr.bf16.mxu0 0
      %2398 = vmatpush1.bf16.msra.mxu0 %v2376
      %2399 = vmatprep.subr.bf16.mxu0 0
      %2400 = vmatpush1.bf16.msra.mxu0 %v2377
      %2401 = vmatprep.subr.bf16.mxu0 0
      %2402 = vmatpush1.bf16.msra.mxu0 %v2378
      %2403 = vmatprep.subr.bf16.mxu0 0
      %2404 = vmatpush1.bf16.msra.mxu0 0
      %2405 = vmatprep.subr.bf16.mxu0 0
      %2406 = vmatpush1.bf16.msra.mxu0 0
      %2407 = vmatprep.subr.bf16.mxu0 0
      %2408 = vmatpush1.bf16.msra.mxu0 0
      %2409 = vmatprep.subr.bf16.mxu0 0
      %2410 = vmatpush1.bf16.msra.mxu0 0
      %2411 = vmatprep.subr.bf16.mxu0 0
      %2412 = vmatpush1.bf16.msra.mxu0 0
      %2413 = vmatprep.subr.bf16.mxu0 0
      %2414 = vmatpush1.bf16.msra.mxu0 0
      %2415 = vmatprep.subr.bf16.mxu0 0
      %2416 = vmatpush1.bf16.msra.mxu0 0
      %2417 = vmatprep.subr.bf16.mxu0 0
      %2418 = vmatpush1.bf16.msra.mxu0 0
      %2419 = vmatprep.mubr.bf16.mxu0 0
      %2420 = vmatmul.mubr.bf16.gmra.mrb[0].mxu0 %v2308
      %v2421 = vpop.f32.mrb[0].mxu0
      %v2422 = vadd.f32 %v2337, %v2421
      %v2423 = vpop.f32.mrb[0].mxu0
      %v2424 = vpop.f32.mrb[0].mxu0
      %v2425 = vadd.f32 %v2337, %v2424
      %v2426 = vpop.f32.mrb[0].mxu0
      %2427 = vmatprep.mubr.bf16.mxu0 0
      %2428 = vmatmul.mubr.bf16.gmra.mrb[0].mxu0 %v2309
      %v2429 = vpop.f32.mrb[0].mxu0
      %v2430 = vadd.f32 %v2337, %v2429
      %v2431 = vpop.f32.mrb[0].mxu0
      %v2432 = vpop.f32.mrb[0].mxu0
      %v2433 = vadd.f32 %v2337, %v2432
      %v2434 = vpop.f32.mrb[0].mxu0
      %2435 = vmatprep.mubr.bf16.mxu0 0
      %2436 = vmatmul.mubr.bf16.gmra.mrb[0].mxu0 %v2310
      %v2437 = vpop.f32.mrb[0].mxu0
      %v2438 = vadd.f32 %v2337, %v2437
      %v2439 = vpop.f32.mrb[0].mxu0
      %v2440 = vpop.f32.mrb[0].mxu0
      %v2441 = vadd.f32 %v2337, %v2440
      %v2442 = vpop.f32.mrb[0].mxu0
      %2443 = vmatprep.mubr.bf16.mxu0 0
      %2444 = vmatmul.mubr.bf16.gmra.mrb[0].mxu0 %v2311
      %v2445 = vpop.f32.mrb[0].mxu0
      %v2446 = vadd.f32 %v2337, %v2445
      %v2447 = vpop.f32.mrb[0].mxu0
      %v2448 = vpop.f32.mrb[0].mxu0
      %v2449 = vadd.f32 %v2337, %v2448
      %v2450 = vpop.f32.mrb[0].mxu0
      %2451 = vmatprep.mubr.bf16.mxu0 0
      %2452 = vmatmul.mubr.bf16.gmra.mrb[0].mxu0 %v2312
      %v2453 = vpop.f32.mrb[0].mxu0
      %v2454 = vadd.f32 %v2337, %v2453
      %v2455 = vpop.f32.mrb[0].mxu0
      %v2456 = vpop.f32.mrb[0].mxu0
      %v2457 = vadd.f32 %v2337, %v2456
      %v2458 = vpop.f32.mrb[0].mxu0
      %2459 = vmatprep.mubr.bf16.mxu0 0
      %2460 = vmatmul.mubr.bf16.gmra.mrb[0].mxu0 %v2313
      %v2461 = vpop.f32.mrb[0].mxu0
      %v2462 = vadd.f32 %v2337, %v2461
      %v2463 = vpop.f32.mrb[0].mxu0
      %v2464 = vpop.f32.mrb[0].mxu0
      %v2465 = vadd.f32 %v2337, %v2464
      %v2466 = vpop.f32.mrb[0].mxu0
      %2467 = vmatprep.mubr.bf16.mxu0 0
      %2468 = vmatmul.mubr.bf16.gmra.mrb[0].mxu0 %v2314
      %v2469 = vpop.f32.mrb[0].mxu0
      %v2470 = vadd.f32 %v2337, %v2469
      %v2471 = vpop.f32.mrb[0].mxu0
      %v2472 = vpop.f32.mrb[0].mxu0
      %v2473 = vadd.f32 %v2337, %v2472
      %v2474 = vpop.f32.mrb[0].mxu0
      %2475 = vmatprep.mubr.bf16.mxu0 0
      %2476 = vmatmul.mubr.bf16.gmra.mrb[0].mxu0 %v2315
      %v2477 = vpop.f32.mrb[0].mxu0
      %v2478 = vadd.f32 %v2337, %v2477
      %v2479 = vpop.f32.mrb[0].mxu0
      %v2480 = vpop.f32.mrb[0].mxu0
      %v2481 = vadd.f32 %v2337, %v2480
      %v2482 = vpop.f32.mrb[0].mxu0
      %2483 = vdwg.mxu0
      %v2484 = vtanh.pop %v2422
      %v2485 = vtanh.pop %v2425
      %v2486 = vtanh.pop %v2430
      %v2487 = vtanh.pop %v2433
      %v2488 = vtanh.pop %v2438
      %v2489 = vtanh.pop %v2441
      %v2490 = vtanh.pop %v2446
      %v2491 = vtanh.pop %v2449
      %v2492 = vtanh.pop %v2454
      %v2493 = vtanh.pop %v2457
      %v2494 = vtanh.pop %v2462
      %v2495 = vtanh.pop %v2465
      %v2496 = vtanh.pop %v2470
      %v2497 = vtanh.pop %v2473
      %v2498 = vtanh.pop %v2478
      %v2499 = vtanh.pop %v2481
      %v2500 = vpack.c.bf16 %v2485, %v2484
      %v2501 = vpack.c.bf16 %v2487, %v2486
      %v2502 = vpack.c.bf16 %v2489, %v2488
      %v2503 = vpack.c.bf16 %v2491, %v2490
      %v2504 = vpack.c.bf16 %v2493, %v2492
      %v2505 = vpack.c.bf16 %v2495, %v2494
      %v2506 = vpack.c.bf16 %v2497, %v2496
      %v2507 = vpack.c.bf16 %v2499, %v2498
      %v2508 = vld [vmem:[%s5] sm:$0xf]
      %v2509 = vld [vmem:[%s5 + $0x4] sm:$0xf]
      %v2510 = vld [vmem:[%s5 + $0x8] sm:$0xf]
      %v2511 = vld [vmem:[%s5 + $0xc] sm:$0xf]
      %v2512 = vld [vmem:[%s5 + $0x10] sm:$0xf]
      %v2513 = vld [vmem:[%s5 + $0x14] sm:$0xf]
      %v2514 = vld [vmem:[%s5 + $0x18] sm:$0xf]
      %v2515 = vld [vmem:[%s5 + $0x1c] sm:$0xf]
      %v2516 = vld [vmem:[%s5 + $0x20] sm:$0xf]
      %v2517 = vld [vmem:[%s5 + $0x24] sm:$0xf]
      %v2518 = vld [vmem:[%s5 + $0x28] sm:$0xf]
      %v2519 = vld [vmem:[%s5 + $0x2c] sm:$0xf]
      %v2520 = vld [vmem:[%s5 + $0x30] sm:$0xf]
      %v2521 = vld [vmem:[%s5 + $0x34] sm:$0xf]
      %v2522 = vld [vmem:[%s5 + $0x38] sm:$0xf]
      %v2523 = vld [vmem:[%s5 + $0x3c] sm:$0xf]
      %v2524 = vld [vmem:[%s6] sm:$0x1]
      %v2526 = vlaneseq
      %v2527 = vshrl.u32 %v2526, 7
      %v2528 = vsub.s32 0, %v2527
      %v2529 = vrot.slane %v2524, %v2528
      %v2547 = vunpack.c.l.b16 %v2508
      %v2548 = vunpack.c.l.b16 %v2509
      %v2549 = vunpack.c.l.b16 %v2510
      %v2550 = vunpack.c.l.b16 %v2511
      %v2551 = vunpack.c.l.b16 %v2512
      %v2552 = vunpack.c.l.b16 %v2513
      %v2553 = vunpack.c.l.b16 %v2514
      %v2554 = vunpack.c.l.b16 %v2515
      %v2555 = vunpack.c.l.b16 %v2516
      %v2556 = vunpack.c.l.b16 %v2517
      %v2557 = vunpack.c.l.b16 %v2518
      %v2558 = vunpack.c.l.b16 %v2519
      %v2559 = vunpack.c.l.b16 %v2520
      %v2560 = vunpack.c.l.b16 %v2521
      %v2561 = vunpack.c.l.b16 %v2522
      %v2562 = vunpack.c.l.b16 %v2523
      %v2563 = vpack.c.b16 %v2548, %v2547
      %v2564 = vpack.c.b16 %v2550, %v2549
      %v2565 = vpack.c.b16 %v2552, %v2551
      %v2566 = vpack.c.b16 %v2554, %v2553
      %v2567 = vpack.c.b16 %v2556, %v2555
      %v2568 = vpack.c.b16 %v2558, %v2557
      %v2569 = vpack.c.b16 %v2560, %v2559
      %v2570 = vpack.c.b16 %v2562, %v2561
      %2579 = vmatprep.subr.bf16.mxu0 0
      %2580 = vmatpush1.bf16.msra.mxu0 %v2563
      %2581 = vmatprep.subr.bf16.mxu0 0
      %2582 = vmatpush1.bf16.msra.mxu0 %v2564
      %2583 = vmatprep.subr.bf16.mxu0 0
      %2584 = vmatpush1.bf16.msra.mxu0 %v2565
      %2585 = vmatprep.subr.bf16.mxu0 0
      %2586 = vmatpush1.bf16.msra.mxu0 %v2566
      %2587 = vmatprep.subr.bf16.mxu0 0
      %2588 = vmatpush1.bf16.msra.mxu0 %v2567
      %2589 = vmatprep.subr.bf16.mxu0 0
      %2590 = vmatpush1.bf16.msra.mxu0 %v2568
      %2591 = vmatprep.subr.bf16.mxu0 0
      %2592 = vmatpush1.bf16.msra.mxu0 %v2569
      %2593 = vmatprep.subr.bf16.mxu0 0
      %2594 = vmatpush1.bf16.msra.mxu0 %v2570
      %2595 = vmatprep.subr.bf16.mxu0 0
      %2596 = vmatpush1.bf16.msra.mxu0 0
      %2597 = vmatprep.subr.bf16.mxu0 0
      %2598 = vmatpush1.bf16.msra.mxu0 0
      %2599 = vmatprep.subr.bf16.mxu0 0
      %2600 = vmatpush1.bf16.msra.mxu0 0
      %2601 = vmatprep.subr.bf16.mxu0 0
      %2602 = vmatpush1.bf16.msra.mxu0 0
      %2603 = vmatprep.subr.bf16.mxu0 0
      %2604 = vmatpush1.bf16.msra.mxu0 0
      %2605 = vmatprep.subr.bf16.mxu0 0
      %2606 = vmatpush1.bf16.msra.mxu0 0
      %2607 = vmatprep.subr.bf16.mxu0 0
      %2608 = vmatpush1.bf16.msra.mxu0 0
      %2609 = vmatprep.subr.bf16.mxu0 0
      %2610 = vmatpush1.bf16.msra.mxu0 0
      %2611 = vmatprep.mubr.bf16.mxu0 0
      %2612 = vmatmul.mubr.bf16.gmra.mrb[0].mxu0 %v2500
      %v2613 = vpop.f32.mrb[0].mxu0
      %v2614 = vadd.f32 %v2529, %v2613
      %v2615 = vpop.f32.mrb[0].mxu0
      %v2616 = vpop.f32.mrb[0].mxu0
      %v2617 = vadd.f32 %v2529, %v2616
      %v2618 = vpop.f32.mrb[0].mxu0
      %2619 = vmatprep.mubr.bf16.mxu0 0
      %2620 = vmatmul.mubr.bf16.gmra.mrb[0].mxu0 %v2501
      %v2621 = vpop.f32.mrb[0].mxu0
      %v2622 = vadd.f32 %v2529, %v2621
      %v2623 = vpop.f32.mrb[0].mxu0
      %v2624 = vpop.f32.mrb[0].mxu0
      %v2625 = vadd.f32 %v2529, %v2624
      %v2626 = vpop.f32.mrb[0].mxu0
      %2627 = vmatprep.mubr.bf16.mxu0 0
      %2628 = vmatmul.mubr.bf16.gmra.mrb[0].mxu0 %v2502
      %v2629 = vpop.f32.mrb[0].mxu0
      %v2630 = vadd.f32 %v2529, %v2629
      %v2631 = vpop.f32.mrb[0].mxu0
      %v2632 = vpop.f32.mrb[0].mxu0
      %v2633 = vadd.f32 %v2529, %v2632
      %v2634 = vpop.f32.mrb[0].mxu0
      %2635 = vmatprep.mubr.bf16.mxu0 0
      %2636 = vmatmul.mubr.bf16.gmra.mrb[0].mxu0 %v2503
      %v2637 = vpop.f32.mrb[0].mxu0
      %v2638 = vadd.f32 %v2529, %v2637
      %v2639 = vpop.f32.mrb[0].mxu0
      %v2640 = vpop.f32.mrb[0].mxu0
      %v2641 = vadd.f32 %v2529, %v2640
      %v2642 = vpop.f32.mrb[0].mxu0
      %2643 = vmatprep.mubr.bf16.mxu0 0
      %2644 = vmatmul.mubr.bf16.gmra.mrb[0].mxu0 %v2504
      %v2645 = vpop.f32.mrb[0].mxu0
      %v2646 = vadd.f32 %v2529, %v2645
      %v2647 = vpop.f32.mrb[0].mxu0
      %v2648 = vpop.f32.mrb[0].mxu0
      %v2649 = vadd.f32 %v2529, %v2648
      %v2650 = vpop.f32.mrb[0].mxu0
      %2651 = vmatprep.mubr.bf16.mxu0 0
      %2652 = vmatmul.mubr.bf16.gmra.mrb[0].mxu0 %v2505
      %v2653 = vpop.f32.mrb[0].mxu0
      %v2654 = vadd.f32 %v2529, %v2653
      %v2655 = vpop.f32.mrb[0].mxu0
      %v2656 = vpop.f32.mrb[0].mxu0
      %v2657 = vadd.f32 %v2529, %v2656
      %v2658 = vpop.f32.mrb[0].mxu0
      %2659 = vmatprep.mubr.bf16.mxu0 0
      %2660 = vmatmul.mubr.bf16.gmra.mrb[0].mxu0 %v2506
      %v2661 = vpop.f32.mrb[0].mxu0
      %v2662 = vadd.f32 %v2529, %v2661
      %v2663 = vpop.f32.mrb[0].mxu0
      %v2664 = vpop.f32.mrb[0].mxu0
      %v2665 = vadd.f32 %v2529, %v2664
      %v2666 = vpop.f32.mrb[0].mxu0
      %2667 = vmatprep.mubr.bf16.mxu0 0
      %2668 = vmatmul.mubr.bf16.gmra.mrb[0].mxu0 %v2507
      %v2669 = vpop.f32.mrb[0].mxu0
      %v2670 = vadd.f32 %v2529, %v2669
      %v2671 = vpop.f32.mrb[0].mxu0
      %v2672 = vpop.f32.mrb[0].mxu0
      %v2673 = vadd.f32 %v2529, %v2672
      %v2674 = vpop.f32.mrb[0].mxu0
      %2675 = vdwg.mxu0
      %v2676 = vtanh.pop %v2614
      %v2677 = vtanh.pop %v2617
      %v2678 = vtanh.pop %v2622
      %v2679 = vtanh.pop %v2625
      %v2680 = vtanh.pop %v2630
      %v2681 = vtanh.pop %v2633
      %v2682 = vtanh.pop %v2638
      %v2683 = vtanh.pop %v2641
      %v2684 = vtanh.pop %v2646
      %v2685 = vtanh.pop %v2649
      %v2686 = vtanh.pop %v2654
      %v2687 = vtanh.pop %v2657
      %v2688 = vtanh.pop %v2662
      %v2689 = vtanh.pop %v2665
      %v2690 = vtanh.pop %v2670
      %v2691 = vtanh.pop %v2673
      %v2692 = vpack.c.bf16 %v2677, %v2676
      %v2693 = vpack.c.bf16 %v2679, %v2678
      %v2694 = vpack.c.bf16 %v2681, %v2680
      %v2695 = vpack.c.bf16 %v2683, %v2682
      %v2696 = vpack.c.bf16 %v2685, %v2684
      %v2697 = vpack.c.bf16 %v2687, %v2686
      %v2698 = vpack.c.bf16 %v2689, %v2688
      %v2699 = vpack.c.bf16 %v2691, %v2690
      %v2700 = vld [vmem:[%s7] sm:$0xf]
      %v2701 = vld [vmem:[%s7 + $0x4] sm:$0xf]
      %v2702 = vld [vmem:[%s7 + $0x8] sm:$0xf]
      %v2703 = vld [vmem:[%s7 + $0xc] sm:$0xf]
      %v2704 = vld [vmem:[%s7 + $0x10] sm:$0xf]
      %v2705 = vld [vmem:[%s7 + $0x14] sm:$0xf]
      %v2706 = vld [vmem:[%s7 + $0x18] sm:$0xf]
      %v2707 = vld [vmem:[%s7 + $0x1c] sm:$0xf]
      %v2708 = vld [vmem:[%s7 + $0x20] sm:$0xf]
      %v2709 = vld [vmem:[%s7 + $0x24] sm:$0xf]
      %v2710 = vld [vmem:[%s7 + $0x28] sm:$0xf]
      %v2711 = vld [vmem:[%s7 + $0x2c] sm:$0xf]
      %v2712 = vld [vmem:[%s7 + $0x30] sm:$0xf]
      %v2713 = vld [vmem:[%s7 + $0x34] sm:$0xf]
      %v2714 = vld [vmem:[%s7 + $0x38] sm:$0xf]
      %v2715 = vld [vmem:[%s7 + $0x3c] sm:$0xf]
      %v2716 = vld [vmem:[%s8] sm:$0x1]
      %v2718 = vlaneseq
      %v2719 = vshrl.u32 %v2718, 7
      %v2720 = vsub.s32 0, %v2719
      %v2721 = vrot.slane %v2716, %v2720
      %v2739 = vunpack.c.l.b16 %v2700
      %v2740 = vunpack.c.l.b16 %v2701
      %v2741 = vunpack.c.l.b16 %v2702
      %v2742 = vunpack.c.l.b16 %v2703
      %v2743 = vunpack.c.l.b16 %v2704
      %v2744 = vunpack.c.l.b16 %v2705
      %v2745 = vunpack.c.l.b16 %v2706
      %v2746 = vunpack.c.l.b16 %v2707
      %v2747 = vunpack.c.l.b16 %v2708
      %v2748 = vunpack.c.l.b16 %v2709
      %v2749 = vunpack.c.l.b16 %v2710
      %v2750 = vunpack.c.l.b16 %v2711
      %v2751 = vunpack.c.l.b16 %v2712
      %v2752 = vunpack.c.l.b16 %v2713
      %v2753 = vunpack.c.l.b16 %v2714
      %v2754 = vunpack.c.l.b16 %v2715
      %v2755 = vpack.c.b16 %v2740, %v2739
      %v2756 = vpack.c.b16 %v2742, %v2741
      %v2757 = vpack.c.b16 %v2744, %v2743
      %v2758 = vpack.c.b16 %v2746, %v2745
      %v2759 = vpack.c.b16 %v2748, %v2747
      %v2760 = vpack.c.b16 %v2750, %v2749
      %v2761 = vpack.c.b16 %v2752, %v2751
      %v2762 = vpack.c.b16 %v2754, %v2753
      %2771 = vmatprep.subr.bf16.mxu0 0
      %2772 = vmatpush1.bf16.msra.mxu0 %v2755
      %2773 = vmatprep.subr.bf16.mxu0 0
      %2774 = vmatpush1.bf16.msra.mxu0 %v2756
      %2775 = vmatprep.subr.bf16.mxu0 0
      %2776 = vmatpush1.bf16.msra.mxu0 %v2757
      %2777 = vmatprep.subr.bf16.mxu0 0
      %2778 = vmatpush1.bf16.msra.mxu0 %v2758
      %2779 = vmatprep.subr.bf16.mxu0 0
      %2780 = vmatpush1.bf16.msra.mxu0 %v2759
      %2781 = vmatprep.subr.bf16.mxu0 0
      %2782 = vmatpush1.bf16.msra.mxu0 %v2760
      %2783 = vmatprep.subr.bf16.mxu0 0
      %2784 = vmatpush1.bf16.msra.mxu0 %v2761
      %2785 = vmatprep.subr.bf16.mxu0 0
      %2786 = vmatpush1.bf16.msra.mxu0 %v2762
      %2787 = vmatprep.subr.bf16.mxu0 0
      %2788 = vmatpush1.bf16.msra.mxu0 0
      %2789 = vmatprep.subr.bf16.mxu0 0
      %2790 = vmatpush1.bf16.msra.mxu0 0
      %2791 = vmatprep.subr.bf16.mxu0 0
      %2792 = vmatpush1.bf16.msra.mxu0 0
      %2793 = vmatprep.subr.bf16.mxu0 0
      %2794 = vmatpush1.bf16.msra.mxu0 0
      %2795 = vmatprep.subr.bf16.mxu0 0
      %2796 = vmatpush1.bf16.msra.mxu0 0
      %2797 = vmatprep.subr.bf16.mxu0 0
      %2798 = vmatpush1.bf16.msra.mxu0 0
      %2799 = vmatprep.subr.bf16.mxu0 0
      %2800 = vmatpush1.bf16.msra.mxu0 0
      %2801 = vmatprep.subr.bf16.mxu0 0
      %2802 = vmatpush1.bf16.msra.mxu0 0
      %2803 = vmatprep.mubr.bf16.mxu0 0
      %2804 = vmatmul.mubr.bf16.gmra.mrb[0].mxu0 %v2692
      %v2805 = vpop.f32.mrb[0].mxu0
      %v2806 = vadd.f32 %v2721, %v2805
      %v2807 = vpop.f32.mrb[0].mxu0
      %v2808 = vpop.f32.mrb[0].mxu0
      %v2809 = vadd.f32 %v2721, %v2808
      %v2810 = vpop.f32.mrb[0].mxu0
      %2811 = vmatprep.mubr.bf16.mxu0 0
      %2812 = vmatmul.mubr.bf16.gmra.mrb[0].mxu0 %v2693
      %v2813 = vpop.f32.mrb[0].mxu0
      %v2814 = vadd.f32 %v2721, %v2813
      %v2815 = vpop.f32.mrb[0].mxu0
      %v2816 = vpop.f32.mrb[0].mxu0
      %v2817 = vadd.f32 %v2721, %v2816
      %v2818 = vpop.f32.mrb[0].mxu0
      %2819 = vmatprep.mubr.bf16.mxu0 0
      %2820 = vmatmul.mubr.bf16.gmra.mrb[0].mxu0 %v2694
      %v2821 = vpop.f32.mrb[0].mxu0
      %v2822 = vadd.f32 %v2721, %v2821
      %v2823 = vpop.f32.mrb[0].mxu0
      %v2824 = vpop.f32.mrb[0].mxu0
      %v2825 = vadd.f32 %v2721, %v2824
      %v2826 = vpop.f32.mrb[0].mxu0
      %2827 = vmatprep.mubr.bf16.mxu0 0
      %2828 = vmatmul.mubr.bf16.gmra.mrb[0].mxu0 %v2695
      %v2829 = vpop.f32.mrb[0].mxu0
      %v2830 = vadd.f32 %v2721, %v2829
      %v2831 = vpop.f32.mrb[0].mxu0
      %v2832 = vpop.f32.mrb[0].mxu0
      %v2833 = vadd.f32 %v2721, %v2832
      %v2834 = vpop.f32.mrb[0].mxu0
      %2835 = vmatprep.mubr.bf16.mxu0 0
      %2836 = vmatmul.mubr.bf16.gmra.mrb[0].mxu0 %v2696
      %v2837 = vpop.f32.mrb[0].mxu0
      %v2838 = vadd.f32 %v2721, %v2837
      %v2839 = vpop.f32.mrb[0].mxu0
      %v2840 = vpop.f32.mrb[0].mxu0
      %v2841 = vadd.f32 %v2721, %v2840
      %v2842 = vpop.f32.mrb[0].mxu0
      %2843 = vmatprep.mubr.bf16.mxu0 0
      %2844 = vmatmul.mubr.bf16.gmra.mrb[0].mxu0 %v2697
      %v2845 = vpop.f32.mrb[0].mxu0
      %v2846 = vadd.f32 %v2721, %v2845
      %v2847 = vpop.f32.mrb[0].mxu0
      %v2848 = vpop.f32.mrb[0].mxu0
      %v2849 = vadd.f32 %v2721, %v2848
      %v2850 = vpop.f32.mrb[0].mxu0
      %2851 = vmatprep.mubr.bf16.mxu0 0
      %2852 = vmatmul.mubr.bf16.gmra.mrb[0].mxu0 %v2698
      %v2853 = vpop.f32.mrb[0].mxu0
      %v2854 = vadd.f32 %v2721, %v2853
      %v2855 = vpop.f32.mrb[0].mxu0
      %v2856 = vpop.f32.mrb[0].mxu0
      %v2857 = vadd.f32 %v2721, %v2856
      %v2858 = vpop.f32.mrb[0].mxu0
      %2859 = vmatprep.mubr.bf16.mxu0 0
      %2860 = vmatmul.mubr.bf16.gmra.mrb[0].mxu0 %v2699
      %v2861 = vpop.f32.mrb[0].mxu0
      %v2862 = vadd.f32 %v2721, %v2861
      %v2863 = vpop.f32.mrb[0].mxu0
      %v2864 = vpop.f32.mrb[0].mxu0
      %v2865 = vadd.f32 %v2721, %v2864
      %v2866 = vpop.f32.mrb[0].mxu0
      %2867 = vdwg.mxu0
      %v2868 = vtanh.pop %v2806
      %v2869 = vtanh.pop %v2809
      %v2870 = vtanh.pop %v2814
      %v2871 = vtanh.pop %v2817
      %v2872 = vtanh.pop %v2822
      %v2873 = vtanh.pop %v2825
      %v2874 = vtanh.pop %v2830
      %v2875 = vtanh.pop %v2833
      %v2876 = vtanh.pop %v2838
      %v2877 = vtanh.pop %v2841
      %v2878 = vtanh.pop %v2846
      %v2879 = vtanh.pop %v2849
      %v2880 = vtanh.pop %v2854
      %v2881 = vtanh.pop %v2857
      %v2882 = vtanh.pop %v2862
      %v2883 = vtanh.pop %v2865
      %v2884 = vpack.c.bf16 %v2869, %v2868
      %v2885 = vpack.c.bf16 %v2871, %v2870
      %v2886 = vpack.c.bf16 %v2873, %v2872
      %v2887 = vpack.c.bf16 %v2875, %v2874
      %v2888 = vpack.c.bf16 %v2877, %v2876
      %v2889 = vpack.c.bf16 %v2879, %v2878
      %v2890 = vpack.c.bf16 %v2881, %v2880
      %v2891 = vpack.c.bf16 %v2883, %v2882
      %v2892 = vld [vmem:[%s9] sm:$0xf]
      %v2893 = vld [vmem:[%s9 + $0x4] sm:$0xf]
      %v2894 = vld [vmem:[%s9 + $0x8] sm:$0xf]
      %v2895 = vld [vmem:[%s9 + $0xc] sm:$0xf]
      %v2896 = vld [vmem:[%s9 + $0x10] sm:$0xf]
      %v2897 = vld [vmem:[%s9 + $0x14] sm:$0xf]
      %v2898 = vld [vmem:[%s9 + $0x18] sm:$0xf]
      %v2899 = vld [vmem:[%s9 + $0x1c] sm:$0xf]
      %v2900 = vld [vmem:[%s9 + $0x20] sm:$0xf]
      %v2901 = vld [vmem:[%s9 + $0x24] sm:$0xf]
      %v2902 = vld [vmem:[%s9 + $0x28] sm:$0xf]
      %v2903 = vld [vmem:[%s9 + $0x2c] sm:$0xf]
      %v2904 = vld [vmem:[%s9 + $0x30] sm:$0xf]
      %v2905 = vld [vmem:[%s9 + $0x34] sm:$0xf]
      %v2906 = vld [vmem:[%s9 + $0x38] sm:$0xf]
      %v2907 = vld [vmem:[%s9 + $0x3c] sm:$0xf]
      %v2908 = vld [vmem:[%s10] sm:$0x1]
      %v2910 = vlaneseq
      %v2911 = vshrl.u32 %v2910, 7
      %v2912 = vsub.s32 0, %v2911
      %v2913 = vrot.slane %v2908, %v2912
      %v2931 = vunpack.c.l.b16 %v2892
      %v2932 = vunpack.c.l.b16 %v2893
      %v2933 = vunpack.c.l.b16 %v2894
      %v2934 = vunpack.c.l.b16 %v2895
      %v2935 = vunpack.c.l.b16 %v2896
      %v2936 = vunpack.c.l.b16 %v2897
      %v2937 = vunpack.c.l.b16 %v2898
      %v2938 = vunpack.c.l.b16 %v2899
      %v2939 = vunpack.c.l.b16 %v2900
      %v2940 = vunpack.c.l.b16 %v2901
      %v2941 = vunpack.c.l.b16 %v2902
      %v2942 = vunpack.c.l.b16 %v2903
      %v2943 = vunpack.c.l.b16 %v2904
      %v2944 = vunpack.c.l.b16 %v2905
      %v2945 = vunpack.c.l.b16 %v2906
      %v2946 = vunpack.c.l.b16 %v2907
      %v2947 = vpack.c.b16 %v2932, %v2931
      %v2948 = vpack.c.b16 %v2934, %v2933
      %v2949 = vpack.c.b16 %v2936, %v2935
      %v2950 = vpack.c.b16 %v2938, %v2937
      %v2951 = vpack.c.b16 %v2940, %v2939
      %v2952 = vpack.c.b16 %v2942, %v2941
      %v2953 = vpack.c.b16 %v2944, %v2943
      %v2954 = vpack.c.b16 %v2946, %v2945
      %2963 = vmatprep.subr.bf16.mxu0 0
      %2964 = vmatpush1.bf16.msra.mxu0 %v2947
      %2965 = vmatprep.subr.bf16.mxu0 0
      %2966 = vmatpush1.bf16.msra.mxu0 %v2948
      %2967 = vmatprep.subr.bf16.mxu0 0
      %2968 = vmatpush1.bf16.msra.mxu0 %v2949
      %2969 = vmatprep.subr.bf16.mxu0 0
      %2970 = vmatpush1.bf16.msra.mxu0 %v2950
      %2971 = vmatprep.subr.bf16.mxu0 0
      %2972 = vmatpush1.bf16.msra.mxu0 %v2951
      %2973 = vmatprep.subr.bf16.mxu0 0
      %2974 = vmatpush1.bf16.msra.mxu0 %v2952
      %2975 = vmatprep.subr.bf16.mxu0 0
      %2976 = vmatpush1.bf16.msra.mxu0 %v2953
      %2977 = vmatprep.subr.bf16.mxu0 0
      %2978 = vmatpush1.bf16.msra.mxu0 %v2954
      %2979 = vmatprep.subr.bf16.mxu0 0
      %2980 = vmatpush1.bf16.msra.mxu0 0
      %2981 = vmatprep.subr.bf16.mxu0 0
      %2982 = vmatpush1.bf16.msra.mxu0 0
      %2983 = vmatprep.subr.bf16.mxu0 0
      %2984 = vmatpush1.bf16.msra.mxu0 0
      %2985 = vmatprep.subr.bf16.mxu0 0
      %2986 = vmatpush1.bf16.msra.mxu0 0
      %2987 = vmatprep.subr.bf16.mxu0 0
      %2988 = vmatpush1.bf16.msra.mxu0 0
      %2989 = vmatprep.subr.bf16.mxu0 0
      %2990 = vmatpush1.bf16.msra.mxu0 0
      %2991 = vmatprep.subr.bf16.mxu0 0
      %2992 = vmatpush1.bf16.msra.mxu0 0
      %2993 = vmatprep.subr.bf16.mxu0 0
      %2994 = vmatpush1.bf16.msra.mxu0 0
      %2995 = vmatprep.mubr.bf16.mxu0 0
      %2996 = vmatmul.mubr.bf16.gmra.mrb[0].mxu0 %v2884
      %v2997 = vpop.f32.mrb[0].mxu0
      %v2998 = vadd.f32 %v2913, %v2997
      %v2999 = vpop.f32.mrb[0].mxu0
      %v3000 = vpop.f32.mrb[0].mxu0
      %v3001 = vadd.f32 %v2913, %v3000
      %v3002 = vpop.f32.mrb[0].mxu0
      %3003 = vmatprep.mubr.bf16.mxu0 0
      %3004 = vmatmul.mubr.bf16.gmra.mrb[0].mxu0 %v2885
      %v3005 = vpop.f32.mrb[0].mxu0
      %v3006 = vadd.f32 %v2913, %v3005
      %v3007 = vpop.f32.mrb[0].mxu0
      %v3008 = vpop.f32.mrb[0].mxu0
      %v3009 = vadd.f32 %v2913, %v3008
      %v3010 = vpop.f32.mrb[0].mxu0
      %3011 = vmatprep.mubr.bf16.mxu0 0
      %3012 = vmatmul.mubr.bf16.gmra.mrb[0].mxu0 %v2886
      %v3013 = vpop.f32.mrb[0].mxu0
      %v3014 = vadd.f32 %v2913, %v3013
      %v3015 = vpop.f32.mrb[0].mxu0
      %v3016 = vpop.f32.mrb[0].mxu0
      %v3017 = vadd.f32 %v2913, %v3016
      %v3018 = vpop.f32.mrb[0].mxu0
      %3019 = vmatprep.mubr.bf16.mxu0 0
      %3020 = vmatmul.mubr.bf16.gmra.mrb[0].mxu0 %v2887
      %v3021 = vpop.f32.mrb[0].mxu0
      %v3022 = vadd.f32 %v2913, %v3021
      %v3023 = vpop.f32.mrb[0].mxu0
      %v3024 = vpop.f32.mrb[0].mxu0
      %v3025 = vadd.f32 %v2913, %v3024
      %v3026 = vpop.f32.mrb[0].mxu0
      %3027 = vmatprep.mubr.bf16.mxu0 0
      %3028 = vmatmul.mubr.bf16.gmra.mrb[0].mxu0 %v2888
      %v3029 = vpop.f32.mrb[0].mxu0
      %v3030 = vadd.f32 %v2913, %v3029
      %v3031 = vpop.f32.mrb[0].mxu0
      %v3032 = vpop.f32.mrb[0].mxu0
      %v3033 = vadd.f32 %v2913, %v3032
      %v3034 = vpop.f32.mrb[0].mxu0
      %3035 = vmatprep.mubr.bf16.mxu0 0
      %3036 = vmatmul.mubr.bf16.gmra.mrb[0].mxu0 %v2889
      %v3037 = vpop.f32.mrb[0].mxu0
      %v3038 = vadd.f32 %v2913, %v3037
      %v3039 = vpop.f32.mrb[0].mxu0
      %v3040 = vpop.f32.mrb[0].mxu0
      %v3041 = vadd.f32 %v2913, %v3040
      %v3042 = vpop.f32.mrb[0].mxu0
      %3043 = vmatprep.mubr.bf16.mxu0 0
      %3044 = vmatmul.mubr.bf16.gmra.mrb[0].mxu0 %v2890
      %v3045 = vpop.f32.mrb[0].mxu0
      %v3046 = vadd.f32 %v2913, %v3045
      %v3047 = vpop.f32.mrb[0].mxu0
      %v3048 = vpop.f32.mrb[0].mxu0
      %v3049 = vadd.f32 %v2913, %v3048
      %v3050 = vpop.f32.mrb[0].mxu0
      %3051 = vmatprep.mubr.bf16.mxu0 0
      %3052 = vmatmul.mubr.bf16.gmra.mrb[0].mxu0 %v2891
      %v3053 = vpop.f32.mrb[0].mxu0
      %v3054 = vadd.f32 %v2913, %v3053
      %v3055 = vpop.f32.mrb[0].mxu0
      %v3056 = vpop.f32.mrb[0].mxu0
      %v3057 = vadd.f32 %v2913, %v3056
      %v3058 = vpop.f32.mrb[0].mxu0
      %3059 = vdwg.mxu0
      %v3060 = vtanh.pop %v2998
      %v3061 = vtanh.pop %v3001
      %v3062 = vtanh.pop %v3006
      %v3063 = vtanh.pop %v3009
      %v3064 = vtanh.pop %v3014
      %v3065 = vtanh.pop %v3017
      %v3066 = vtanh.pop %v3022
      %v3067 = vtanh.pop %v3025
      %v3068 = vtanh.pop %v3030
      %v3069 = vtanh.pop %v3033
      %v3070 = vtanh.pop %v3038
      %v3071 = vtanh.pop %v3041
      %v3072 = vtanh.pop %v3046
      %v3073 = vtanh.pop %v3049
      %v3074 = vtanh.pop %v3054
      %v3075 = vtanh.pop %v3057
      %v3076 = vpack.c.bf16 %v3061, %v3060
      %v3077 = vpack.c.bf16 %v3063, %v3062
      %v3078 = vpack.c.bf16 %v3065, %v3064
      %v3079 = vpack.c.bf16 %v3067, %v3066
      %v3080 = vpack.c.bf16 %v3069, %v3068
      %v3081 = vpack.c.bf16 %v3071, %v3070
      %v3082 = vpack.c.bf16 %v3073, %v3072
      %v3083 = vpack.c.bf16 %v3075, %v3074
      %v3084 = vld [vmem:[%s11] sm:$0xf]
      %v3085 = vld [vmem:[%s11 + $0x4] sm:$0xf]
      %v3086 = vld [vmem:[%s11 + $0x8] sm:$0xf]
      %v3087 = vld [vmem:[%s11 + $0xc] sm:$0xf]
      %v3088 = vld [vmem:[%s11 + $0x10] sm:$0xf]
      %v3089 = vld [vmem:[%s11 + $0x14] sm:$0xf]
      %v3090 = vld [vmem:[%s11 + $0x18] sm:$0xf]
      %v3091 = vld [vmem:[%s11 + $0x1c] sm:$0xf]
      %v3092 = vld [vmem:[%s11 + $0x20] sm:$0xf]
      %v3093 = vld [vmem:[%s11 + $0x24] sm:$0xf]
      %v3094 = vld [vmem:[%s11 + $0x28] sm:$0xf]
      %v3095 = vld [vmem:[%s11 + $0x2c] sm:$0xf]
      %v3096 = vld [vmem:[%s11 + $0x30] sm:$0xf]
      %v3097 = vld [vmem:[%s11 + $0x34] sm:$0xf]
      %v3098 = vld [vmem:[%s11 + $0x38] sm:$0xf]
      %v3099 = vld [vmem:[%s11 + $0x3c] sm:$0xf]
      %v3100 = vld [vmem:[%s12] sm:$0x1]
      %v3102 = vlaneseq
      %v3103 = vshrl.u32 %v3102, 7
      %v3104 = vsub.s32 0, %v3103
      %v3105 = vrot.slane %v3100, %v3104
      %v3123 = vunpack.c.l.b16 %v3084
      %v3124 = vunpack.c.l.b16 %v3085
      %v3125 = vunpack.c.l.b16 %v3086
      %v3126 = vunpack.c.l.b16 %v3087
      %v3127 = vunpack.c.l.b16 %v3088
      %v3128 = vunpack.c.l.b16 %v3089
      %v3129 = vunpack.c.l.b16 %v3090
      %v3130 = vunpack.c.l.b16 %v3091
      %v3131 = vunpack.c.l.b16 %v3092
      %v3132 = vunpack.c.l.b16 %v3093
      %v3133 = vunpack.c.l.b16 %v3094
      %v3134 = vunpack.c.l.b16 %v3095
      %v3135 = vunpack.c.l.b16 %v3096
      %v3136 = vunpack.c.l.b16 %v3097
      %v3137 = vunpack.c.l.b16 %v3098
      %v3138 = vunpack.c.l.b16 %v3099
      %v3139 = vpack.c.b16 %v3124, %v3123
      %v3140 = vpack.c.b16 %v3126, %v3125
      %v3141 = vpack.c.b16 %v3128, %v3127
      %v3142 = vpack.c.b16 %v3130, %v3129
      %v3143 = vpack.c.b16 %v3132, %v3131
      %v3144 = vpack.c.b16 %v3134, %v3133
      %v3145 = vpack.c.b16 %v3136, %v3135
      %v3146 = vpack.c.b16 %v3138, %v3137
      %3155 = vmatprep.subr.bf16.mxu0 0
      %3156 = vmatpush1.bf16.msra.mxu0 %v3139
      %3157 = vmatprep.subr.bf16.mxu0 0
      %3158 = vmatpush1.bf16.msra.mxu0 %v3140
      %3159 = vmatprep.subr.bf16.mxu0 0
      %3160 = vmatpush1.bf16.msra.mxu0 %v3141
      %3161 = vmatprep.subr.bf16.mxu0 0
      %3162 = vmatpush1.bf16.msra.mxu0 %v3142
      %3163 = vmatprep.subr.bf16.mxu0 0
      %3164 = vmatpush1.bf16.msra.mxu0 %v3143
      %3165 = vmatprep.subr.bf16.mxu0 0
      %3166 = vmatpush1.bf16.msra.mxu0 %v3144
      %3167 = vmatprep.subr.bf16.mxu0 0
      %3168 = vmatpush1.bf16.msra.mxu0 %v3145
      %3169 = vmatprep.subr.bf16.mxu0 0
      %3170 = vmatpush1.bf16.msra.mxu0 %v3146
      %3171 = vmatprep.subr.bf16.mxu0 0
      %3172 = vmatpush1.bf16.msra.mxu0 0
      %3173 = vmatprep.subr.bf16.mxu0 0
      %3174 = vmatpush1.bf16.msra.mxu0 0
      %3175 = vmatprep.subr.bf16.mxu0 0
      %3176 = vmatpush1.bf16.msra.mxu0 0
      %3177 = vmatprep.subr.bf16.mxu0 0
      %3178 = vmatpush1.bf16.msra.mxu0 0
      %3179 = vmatprep.subr.bf16.mxu0 0
      %3180 = vmatpush1.bf16.msra.mxu0 0
      %3181 = vmatprep.subr.bf16.mxu0 0
      %3182 = vmatpush1.bf16.msra.mxu0 0
      %3183 = vmatprep.subr.bf16.mxu0 0
      %3184 = vmatpush1.bf16.msra.mxu0 0
      %3185 = vmatprep.subr.bf16.mxu0 0
      %3186 = vmatpush1.bf16.msra.mxu0 0
      %3187 = vmatprep.mubr.bf16.mxu0 0
      %3188 = vmatmul.mubr.bf16.gmra.mrb[0].mxu0 %v3076
      %v3189 = vpop.f32.mrb[0].mxu0
      %v3190 = vadd.f32 %v3105, %v3189
      %v3191 = vpop.f32.mrb[0].mxu0
      %v3192 = vpop.f32.mrb[0].mxu0
      %v3193 = vadd.f32 %v3105, %v3192
      %v3194 = vpop.f32.mrb[0].mxu0
      %3195 = vmatprep.mubr.bf16.mxu0 0
      %3196 = vmatmul.mubr.bf16.gmra.mrb[0].mxu0 %v3077
      %v3197 = vpop.f32.mrb[0].mxu0
      %v3198 = vadd.f32 %v3105, %v3197
      %v3199 = vpop.f32.mrb[0].mxu0
      %v3200 = vpop.f32.mrb[0].mxu0
      %v3201 = vadd.f32 %v3105, %v3200
      %v3202 = vpop.f32.mrb[0].mxu0
      %3203 = vmatprep.mubr.bf16.mxu0 0
      %3204 = vmatmul.mubr.bf16.gmra.mrb[0].mxu0 %v3078
      %v3205 = vpop.f32.mrb[0].mxu0
      %v3206 = vadd.f32 %v3105, %v3205
      %v3207 = vpop.f32.mrb[0].mxu0
      %v3208 = vpop.f32.mrb[0].mxu0
      %v3209 = vadd.f32 %v3105, %v3208
      %v3210 = vpop.f32.mrb[0].mxu0
      %3211 = vmatprep.mubr.bf16.mxu0 0
      %3212 = vmatmul.mubr.bf16.gmra.mrb[0].mxu0 %v3079
      %v3213 = vpop.f32.mrb[0].mxu0
      %v3214 = vadd.f32 %v3105, %v3213
      %v3215 = vpop.f32.mrb[0].mxu0
      %v3216 = vpop.f32.mrb[0].mxu0
      %v3217 = vadd.f32 %v3105, %v3216
      %v3218 = vpop.f32.mrb[0].mxu0
      %3219 = vmatprep.mubr.bf16.mxu0 0
      %3220 = vmatmul.mubr.bf16.gmra.mrb[0].mxu0 %v3080
      %v3221 = vpop.f32.mrb[0].mxu0
      %v3222 = vadd.f32 %v3105, %v3221
      %v3223 = vpop.f32.mrb[0].mxu0
      %v3224 = vpop.f32.mrb[0].mxu0
      %v3225 = vadd.f32 %v3105, %v3224
      %v3226 = vpop.f32.mrb[0].mxu0
      %3227 = vmatprep.mubr.bf16.mxu0 0
      %3228 = vmatmul.mubr.bf16.gmra.mrb[0].mxu0 %v3081
      %v3229 = vpop.f32.mrb[0].mxu0
      %v3230 = vadd.f32 %v3105, %v3229
      %v3231 = vpop.f32.mrb[0].mxu0
      %v3232 = vpop.f32.mrb[0].mxu0
      %v3233 = vadd.f32 %v3105, %v3232
      %v3234 = vpop.f32.mrb[0].mxu0
      %3235 = vmatprep.mubr.bf16.mxu0 0
      %3236 = vmatmul.mubr.bf16.gmra.mrb[0].mxu0 %v3082
      %v3237 = vpop.f32.mrb[0].mxu0
      %v3238 = vadd.f32 %v3105, %v3237
      %v3239 = vpop.f32.mrb[0].mxu0
      %v3240 = vpop.f32.mrb[0].mxu0
      %v3241 = vadd.f32 %v3105, %v3240
      %v3242 = vpop.f32.mrb[0].mxu0
      %3243 = vmatprep.mubr.bf16.mxu0 0
      %3244 = vmatmul.mubr.bf16.gmra.mrb[0].mxu0 %v3083
      %v3245 = vpop.f32.mrb[0].mxu0
      %v3246 = vadd.f32 %v3105, %v3245
      %v3247 = vpop.f32.mrb[0].mxu0
      %v3248 = vpop.f32.mrb[0].mxu0
      %v3249 = vadd.f32 %v3105, %v3248
      %v3250 = vpop.f32.mrb[0].mxu0
      %3251 = vdwg.mxu0
      %v3252 = vtanh.pop %v3190
      %v3253 = vtanh.pop %v3193
      %v3254 = vtanh.pop %v3198
      %v3255 = vtanh.pop %v3201
      %v3256 = vtanh.pop %v3206
      %v3257 = vtanh.pop %v3209
      %v3258 = vtanh.pop %v3214
      %v3259 = vtanh.pop %v3217
      %v3260 = vtanh.pop %v3222
      %v3261 = vtanh.pop %v3225
      %v3262 = vtanh.pop %v3230
      %v3263 = vtanh.pop %v3233
      %v3264 = vtanh.pop %v3238
      %v3265 = vtanh.pop %v3241
      %v3266 = vtanh.pop %v3246
      %v3267 = vtanh.pop %v3249
      %v3268 = vpack.c.bf16 %v3253, %v3252
      %v3269 = vpack.c.bf16 %v3255, %v3254
      %v3270 = vpack.c.bf16 %v3257, %v3256
      %v3271 = vpack.c.bf16 %v3259, %v3258
      %v3272 = vpack.c.bf16 %v3261, %v3260
      %v3273 = vpack.c.bf16 %v3263, %v3262
      %v3274 = vpack.c.bf16 %v3265, %v3264
      %v3275 = vpack.c.bf16 %v3267, %v3266
      %v3276 = vld [vmem:[%s13] sm:$0xf]
      %v3277 = vld [vmem:[%s13 + $0x4] sm:$0xf]
      %v3278 = vld [vmem:[%s13 + $0x8] sm:$0xf]
      %v3279 = vld [vmem:[%s13 + $0xc] sm:$0xf]
      %v3280 = vld [vmem:[%s13 + $0x10] sm:$0xf]
      %v3281 = vld [vmem:[%s13 + $0x14] sm:$0xf]
      %v3282 = vld [vmem:[%s13 + $0x18] sm:$0xf]
      %v3283 = vld [vmem:[%s13 + $0x1c] sm:$0xf]
      %v3284 = vld [vmem:[%s13 + $0x20] sm:$0xf]
      %v3285 = vld [vmem:[%s13 + $0x24] sm:$0xf]
      %v3286 = vld [vmem:[%s13 + $0x28] sm:$0xf]
      %v3287 = vld [vmem:[%s13 + $0x2c] sm:$0xf]
      %v3288 = vld [vmem:[%s13 + $0x30] sm:$0xf]
      %v3289 = vld [vmem:[%s13 + $0x34] sm:$0xf]
      %v3290 = vld [vmem:[%s13 + $0x38] sm:$0xf]
      %v3291 = vld [vmem:[%s13 + $0x3c] sm:$0xf]
      %v3292 = vld [vmem:[%s14] sm:$0x1]
      %v3294 = vlaneseq
      %v3295 = vshrl.u32 %v3294, 7
      %v3296 = vsub.s32 0, %v3295
      %v3297 = vrot.slane %v3292, %v3296
      %v3315 = vunpack.c.l.b16 %v3276
      %v3316 = vunpack.c.l.b16 %v3277
      %v3317 = vunpack.c.l.b16 %v3278
      %v3318 = vunpack.c.l.b16 %v3279
      %v3319 = vunpack.c.l.b16 %v3280
      %v3320 = vunpack.c.l.b16 %v3281
      %v3321 = vunpack.c.l.b16 %v3282
      %v3322 = vunpack.c.l.b16 %v3283
      %v3323 = vunpack.c.l.b16 %v3284
      %v3324 = vunpack.c.l.b16 %v3285
      %v3325 = vunpack.c.l.b16 %v3286
      %v3326 = vunpack.c.l.b16 %v3287
      %v3327 = vunpack.c.l.b16 %v3288
      %v3328 = vunpack.c.l.b16 %v3289
      %v3329 = vunpack.c.l.b16 %v3290
      %v3330 = vunpack.c.l.b16 %v3291
      %v3331 = vpack.c.b16 %v3316, %v3315
      %v3332 = vpack.c.b16 %v3318, %v3317
      %v3333 = vpack.c.b16 %v3320, %v3319
      %v3334 = vpack.c.b16 %v3322, %v3321
      %v3335 = vpack.c.b16 %v3324, %v3323
      %v3336 = vpack.c.b16 %v3326, %v3325
      %v3337 = vpack.c.b16 %v3328, %v3327
      %v3338 = vpack.c.b16 %v3330, %v3329
      %3347 = vmatprep.subr.bf16.mxu0 0
      %3348 = vmatpush1.bf16.msra.mxu0 %v3331
      %3349 = vmatprep.subr.bf16.mxu0 0
      %3350 = vmatpush1.bf16.msra.mxu0 %v3332
      %3351 = vmatprep.subr.bf16.mxu0 0
      %3352 = vmatpush1.bf16.msra.mxu0 %v3333
      %3353 = vmatprep.subr.bf16.mxu0 0
      %3354 = vmatpush1.bf16.msra.mxu0 %v3334
      %3355 = vmatprep.subr.bf16.mxu0 0
      %3356 = vmatpush1.bf16.msra.mxu0 %v3335
      %3357 = vmatprep.subr.bf16.mxu0 0
      %3358 = vmatpush1.bf16.msra.mxu0 %v3336
      %3359 = vmatprep.subr.bf16.mxu0 0
      %3360 = vmatpush1.bf16.msra.mxu0 %v3337
      %3361 = vmatprep.subr.bf16.mxu0 0
      %3362 = vmatpush1.bf16.msra.mxu0 %v3338
      %3363 = vmatprep.subr.bf16.mxu0 0
      %3364 = vmatpush1.bf16.msra.mxu0 0
      %3365 = vmatprep.subr.bf16.mxu0 0
      %3366 = vmatpush1.bf16.msra.mxu0 0
      %3367 = vmatprep.subr.bf16.mxu0 0
      %3368 = vmatpush1.bf16.msra.mxu0 0
      %3369 = vmatprep.subr.bf16.mxu0 0
      %3370 = vmatpush1.bf16.msra.mxu0 0
      %3371 = vmatprep.subr.bf16.mxu0 0
      %3372 = vmatpush1.bf16.msra.mxu0 0
      %3373 = vmatprep.subr.bf16.mxu0 0
      %3374 = vmatpush1.bf16.msra.mxu0 0
      %3375 = vmatprep.subr.bf16.mxu0 0
      %3376 = vmatpush1.bf16.msra.mxu0 0
      %3377 = vmatprep.subr.bf16.mxu0 0
      %3378 = vmatpush1.bf16.msra.mxu0 0
      %3379 = vmatprep.mubr.bf16.mxu0 0
      %3380 = vmatmul.mubr.bf16.gmra.mrb[0].mxu0 %v3268
      %v3381 = vpop.f32.mrb[0].mxu0
      %v3382 = vadd.f32 %v3297, %v3381
      %v3383 = vpop.f32.mrb[0].mxu0
      %v3384 = vpop.f32.mrb[0].mxu0
      %v3385 = vadd.f32 %v3297, %v3384
      %v3386 = vpop.f32.mrb[0].mxu0
      %3387 = vmatprep.mubr.bf16.mxu0 0
      %3388 = vmatmul.mubr.bf16.gmra.mrb[0].mxu0 %v3269
      %v3389 = vpop.f32.mrb[0].mxu0
      %v3390 = vadd.f32 %v3297, %v3389
      %v3391 = vpop.f32.mrb[0].mxu0
      %v3392 = vpop.f32.mrb[0].mxu0
      %v3393 = vadd.f32 %v3297, %v3392
      %v3394 = vpop.f32.mrb[0].mxu0
      %3395 = vmatprep.mubr.bf16.mxu0 0
      %3396 = vmatmul.mubr.bf16.gmra.mrb[0].mxu0 %v3270
      %v3397 = vpop.f32.mrb[0].mxu0
      %v3398 = vadd.f32 %v3297, %v3397
      %v3399 = vpop.f32.mrb[0].mxu0
      %v3400 = vpop.f32.mrb[0].mxu0
      %v3401 = vadd.f32 %v3297, %v3400
      %v3402 = vpop.f32.mrb[0].mxu0
      %3403 = vmatprep.mubr.bf16.mxu0 0
      %3404 = vmatmul.mubr.bf16.gmra.mrb[0].mxu0 %v3271
      %v3405 = vpop.f32.mrb[0].mxu0
      %v3406 = vadd.f32 %v3297, %v3405
      %v3407 = vpop.f32.mrb[0].mxu0
      %v3408 = vpop.f32.mrb[0].mxu0
      %v3409 = vadd.f32 %v3297, %v3408
      %v3410 = vpop.f32.mrb[0].mxu0
      %3411 = vmatprep.mubr.bf16.mxu0 0
      %3412 = vmatmul.mubr.bf16.gmra.mrb[0].mxu0 %v3272
      %v3413 = vpop.f32.mrb[0].mxu0
      %v3414 = vadd.f32 %v3297, %v3413
      %v3415 = vpop.f32.mrb[0].mxu0
      %v3416 = vpop.f32.mrb[0].mxu0
      %v3417 = vadd.f32 %v3297, %v3416
      %v3418 = vpop.f32.mrb[0].mxu0
      %3419 = vmatprep.mubr.bf16.mxu0 0
      %3420 = vmatmul.mubr.bf16.gmra.mrb[0].mxu0 %v3273
      %v3421 = vpop.f32.mrb[0].mxu0
      %v3422 = vadd.f32 %v3297, %v3421
      %v3423 = vpop.f32.mrb[0].mxu0
      %v3424 = vpop.f32.mrb[0].mxu0
      %v3425 = vadd.f32 %v3297, %v3424
      %v3426 = vpop.f32.mrb[0].mxu0
      %3427 = vmatprep.mubr.bf16.mxu0 0
      %3428 = vmatmul.mubr.bf16.gmra.mrb[0].mxu0 %v3274
      %v3429 = vpop.f32.mrb[0].mxu0
      %v3430 = vadd.f32 %v3297, %v3429
      %v3431 = vpop.f32.mrb[0].mxu0
      %v3432 = vpop.f32.mrb[0].mxu0
      %v3433 = vadd.f32 %v3297, %v3432
      %v3434 = vpop.f32.mrb[0].mxu0
      %3435 = vmatprep.mubr.bf16.mxu0 0
      %3436 = vmatmul.mubr.bf16.gmra.mrb[0].mxu0 %v3275
      %v3437 = vpop.f32.mrb[0].mxu0
      %v3438 = vadd.f32 %v3297, %v3437
      %v3439 = vpop.f32.mrb[0].mxu0
      %v3440 = vpop.f32.mrb[0].mxu0
      %v3441 = vadd.f32 %v3297, %v3440
      %v3442 = vpop.f32.mrb[0].mxu0
      %3443 = vdwg.mxu0
      %v3444 = vtanh.pop %v3382
      %v3445 = vtanh.pop %v3385
      %v3446 = vtanh.pop %v3390
      %v3447 = vtanh.pop %v3393
      %v3448 = vtanh.pop %v3398
      %v3449 = vtanh.pop %v3401
      %v3450 = vtanh.pop %v3406
      %v3451 = vtanh.pop %v3409
      %v3452 = vtanh.pop %v3414
      %v3453 = vtanh.pop %v3417
      %v3454 = vtanh.pop %v3422
      %v3455 = vtanh.pop %v3425
      %v3456 = vtanh.pop %v3430
      %v3457 = vtanh.pop %v3433
      %v3458 = vtanh.pop %v3438
      %v3459 = vtanh.pop %v3441
      %v3460 = vpack.c.bf16 %v3445, %v3444
      %v3461 = vpack.c.bf16 %v3447, %v3446
      %v3462 = vpack.c.bf16 %v3449, %v3448
      %v3463 = vpack.c.bf16 %v3451, %v3450
      %v3464 = vpack.c.bf16 %v3453, %v3452
      %v3465 = vpack.c.bf16 %v3455, %v3454
      %v3466 = vpack.c.bf16 %v3457, %v3456
      %v3467 = vpack.c.bf16 %v3459, %v3458
      %v3468 = vld [vmem:[%s15] sm:$0xf]
      %v3469 = vld [vmem:[%s15 + $0x4] sm:$0xf]
      %v3470 = vld [vmem:[%s15 + $0x8] sm:$0xf]
      %v3471 = vld [vmem:[%s15 + $0xc] sm:$0xf]
      %v3472 = vld [vmem:[%s15 + $0x10] sm:$0xf]
      %v3473 = vld [vmem:[%s15 + $0x14] sm:$0xf]
      %v3474 = vld [vmem:[%s15 + $0x18] sm:$0xf]
      %v3475 = vld [vmem:[%s15 + $0x1c] sm:$0xf]
      %v3476 = vld [vmem:[%s15 + $0x20] sm:$0xf]
      %v3477 = vld [vmem:[%s15 + $0x24] sm:$0xf]
      %v3478 = vld [vmem:[%s15 + $0x28] sm:$0xf]
      %v3479 = vld [vmem:[%s15 + $0x2c] sm:$0xf]
      %v3480 = vld [vmem:[%s15 + $0x30] sm:$0xf]
      %v3481 = vld [vmem:[%s15 + $0x34] sm:$0xf]
      %v3482 = vld [vmem:[%s15 + $0x38] sm:$0xf]
      %v3483 = vld [vmem:[%s15 + $0x3c] sm:$0xf]
      %v3484 = vld [vmem:[%s16] sm:$0x1]
      %v3486 = vlaneseq
      %v3487 = vshrl.u32 %v3486, 7
      %v3488 = vsub.s32 0, %v3487
      %v3489 = vrot.slane %v3484, %v3488
      %v3507 = vunpack.c.l.b16 %v3468
      %v3508 = vunpack.c.l.b16 %v3469
      %v3509 = vunpack.c.l.b16 %v3470
      %v3510 = vunpack.c.l.b16 %v3471
      %v3511 = vunpack.c.l.b16 %v3472
      %v3512 = vunpack.c.l.b16 %v3473
      %v3513 = vunpack.c.l.b16 %v3474
      %v3514 = vunpack.c.l.b16 %v3475
      %v3515 = vunpack.c.l.b16 %v3476
      %v3516 = vunpack.c.l.b16 %v3477
      %v3517 = vunpack.c.l.b16 %v3478
      %v3518 = vunpack.c.l.b16 %v3479
      %v3519 = vunpack.c.l.b16 %v3480
      %v3520 = vunpack.c.l.b16 %v3481
      %v3521 = vunpack.c.l.b16 %v3482
      %v3522 = vunpack.c.l.b16 %v3483
      %v3523 = vpack.c.b16 %v3508, %v3507
      %v3524 = vpack.c.b16 %v3510, %v3509
      %v3525 = vpack.c.b16 %v3512, %v3511
      %v3526 = vpack.c.b16 %v3514, %v3513
      %v3527 = vpack.c.b16 %v3516, %v3515
      %v3528 = vpack.c.b16 %v3518, %v3517
      %v3529 = vpack.c.b16 %v3520, %v3519
      %v3530 = vpack.c.b16 %v3522, %v3521
      %3539 = vmatprep.subr.bf16.mxu0 0
      %3540 = vmatpush1.bf16.msra.mxu0 %v3523
      %3541 = vmatprep.subr.bf16.mxu0 0
      %3542 = vmatpush1.bf16.msra.mxu0 %v3524
      %3543 = vmatprep.subr.bf16.mxu0 0
      %3544 = vmatpush1.bf16.msra.mxu0 %v3525
      %3545 = vmatprep.subr.bf16.mxu0 0
      %3546 = vmatpush1.bf16.msra.mxu0 %v3526
      %3547 = vmatprep.subr.bf16.mxu0 0
      %3548 = vmatpush1.bf16.msra.mxu0 %v3527
      %3549 = vmatprep.subr.bf16.mxu0 0
      %3550 = vmatpush1.bf16.msra.mxu0 %v3528
      %3551 = vmatprep.subr.bf16.mxu0 0
      %3552 = vmatpush1.bf16.msra.mxu0 %v3529
      %3553 = vmatprep.subr.bf16.mxu0 0
      %3554 = vmatpush1.bf16.msra.mxu0 %v3530
      %3555 = vmatprep.subr.bf16.mxu0 0
      %3556 = vmatpush1.bf16.msra.mxu0 0
      %3557 = vmatprep.subr.bf16.mxu0 0
      %3558 = vmatpush1.bf16.msra.mxu0 0
      %3559 = vmatprep.subr.bf16.mxu0 0
      %3560 = vmatpush1.bf16.msra.mxu0 0
      %3561 = vmatprep.subr.bf16.mxu0 0
      %3562 = vmatpush1.bf16.msra.mxu0 0
      %3563 = vmatprep.subr.bf16.mxu0 0
      %3564 = vmatpush1.bf16.msra.mxu0 0
      %3565 = vmatprep.subr.bf16.mxu0 0
      %3566 = vmatpush1.bf16.msra.mxu0 0
      %3567 = vmatprep.subr.bf16.mxu0 0
      %3568 = vmatpush1.bf16.msra.mxu0 0
      %3569 = vmatprep.subr.bf16.mxu0 0
      %3570 = vmatpush1.bf16.msra.mxu0 0
      %3571 = vmatprep.mubr.bf16.mxu0 0
      %3572 = vmatmul.mubr.bf16.gmra.mrb[0].mxu0 %v3460
      %v3573 = vpop.f32.mrb[0].mxu0
      %v3574 = vadd.f32 %v3489, %v3573
      %v3575 = vpop.f32.mrb[0].mxu0
      %v3576 = vpop.f32.mrb[0].mxu0
      %v3577 = vadd.f32 %v3489, %v3576
      %v3578 = vpop.f32.mrb[0].mxu0
      %3579 = vmatprep.mubr.bf16.mxu0 0
      %3580 = vmatmul.mubr.bf16.gmra.mrb[0].mxu0 %v3461
      %v3581 = vpop.f32.mrb[0].mxu0
      %v3582 = vadd.f32 %v3489, %v3581
      %v3583 = vpop.f32.mrb[0].mxu0
      %v3584 = vpop.f32.mrb[0].mxu0
      %v3585 = vadd.f32 %v3489, %v3584
      %v3586 = vpop.f32.mrb[0].mxu0
      %3587 = vmatprep.mubr.bf16.mxu0 0
      %3588 = vmatmul.mubr.bf16.gmra.mrb[0].mxu0 %v3462
      %v3589 = vpop.f32.mrb[0].mxu0
      %v3590 = vadd.f32 %v3489, %v3589
      %v3591 = vpop.f32.mrb[0].mxu0
      %v3592 = vpop.f32.mrb[0].mxu0
      %v3593 = vadd.f32 %v3489, %v3592
      %v3594 = vpop.f32.mrb[0].mxu0
      %3595 = vmatprep.mubr.bf16.mxu0 0
      %3596 = vmatmul.mubr.bf16.gmra.mrb[0].mxu0 %v3463
      %v3597 = vpop.f32.mrb[0].mxu0
      %v3598 = vadd.f32 %v3489, %v3597
      %v3599 = vpop.f32.mrb[0].mxu0
      %v3600 = vpop.f32.mrb[0].mxu0
      %v3601 = vadd.f32 %v3489, %v3600
      %v3602 = vpop.f32.mrb[0].mxu0
      %3603 = vmatprep.mubr.bf16.mxu0 0
      %3604 = vmatmul.mubr.bf16.gmra.mrb[0].mxu0 %v3464
      %v3605 = vpop.f32.mrb[0].mxu0
      %v3606 = vadd.f32 %v3489, %v3605
      %v3607 = vpop.f32.mrb[0].mxu0
      %v3608 = vpop.f32.mrb[0].mxu0
      %v3609 = vadd.f32 %v3489, %v3608
      %v3610 = vpop.f32.mrb[0].mxu0
      %3611 = vmatprep.mubr.bf16.mxu0 0
      %3612 = vmatmul.mubr.bf16.gmra.mrb[0].mxu0 %v3465
      %v3613 = vpop.f32.mrb[0].mxu0
      %v3614 = vadd.f32 %v3489, %v3613
      %v3615 = vpop.f32.mrb[0].mxu0
      %v3616 = vpop.f32.mrb[0].mxu0
      %v3617 = vadd.f32 %v3489, %v3616
      %v3618 = vpop.f32.mrb[0].mxu0
      %3619 = vmatprep.mubr.bf16.mxu0 0
      %3620 = vmatmul.mubr.bf16.gmra.mrb[0].mxu0 %v3466
      %v3621 = vpop.f32.mrb[0].mxu0
      %v3622 = vadd.f32 %v3489, %v3621
      %v3623 = vpop.f32.mrb[0].mxu0
      %v3624 = vpop.f32.mrb[0].mxu0
      %v3625 = vadd.f32 %v3489, %v3624
      %v3626 = vpop.f32.mrb[0].mxu0
      %3627 = vmatprep.mubr.bf16.mxu0 0
      %3628 = vmatmul.mubr.bf16.gmra.mrb[0].mxu0 %v3467
      %v3629 = vpop.f32.mrb[0].mxu0
      %v3630 = vadd.f32 %v3489, %v3629
      %v3631 = vpop.f32.mrb[0].mxu0
      %v3632 = vpop.f32.mrb[0].mxu0
      %v3633 = vadd.f32 %v3489, %v3632
      %v3634 = vpop.f32.mrb[0].mxu0
      %3635 = vdwg.mxu0
      %s3636 = scalar_lea.vmem %s550, 128
      %3637 = vst.msk [vmem:[%s3636] sm:$0xff] %vm617, %v3574
      %3638 = vst.msk [vmem:[%s3636 + $0x8] sm:$0xff] %vm617, %v3577
      %3639 = vst.msk [vmem:[%s3636 + $0x10] sm:$0xff] %vm617, %v3582
      %3640 = vst.msk [vmem:[%s3636 + $0x18] sm:$0xff] %vm617, %v3585
      %3641 = vst.msk [vmem:[%s3636 + $0x20] sm:$0xff] %vm617, %v3590
      %3642 = vst.msk [vmem:[%s3636 + $0x28] sm:$0xff] %vm617, %v3593
      %3643 = vst.msk [vmem:[%s3636 + $0x30] sm:$0xff] %vm617, %v3598
      %3644 = vst.msk [vmem:[%s3636 + $0x38] sm:$0xff] %vm617, %v3601
      %3645 = vst.msk [vmem:[%s3636 + $0x40] sm:$0xff] %vm617, %v3606
      %3646 = vst.msk [vmem:[%s3636 + $0x48] sm:$0xff] %vm617, %v3609
      %3647 = vst.msk [vmem:[%s3636 + $0x50] sm:$0xff] %vm617, %v3614
      %3648 = vst.msk [vmem:[%s3636 + $0x58] sm:$0xff] %vm617, %v3617
      %3649 = vst.msk [vmem:[%s3636 + $0x60] sm:$0xff] %vm617, %v3622
      %3650 = vst.msk [vmem:[%s3636 + $0x68] sm:$0xff] %vm617, %v3625
      %3651 = vst.msk [vmem:[%s3636 + $0x70] sm:$0xff] %vm617, %v3630
      %3652 = vst.msk [vmem:[%s3636 + $0x78] sm:$0xff] %vm617, %v3633
      %s3653 = smul.u32 32, %s28
      %p3654 = scmp.lt.s32.totalorder %s3653, 63
      %s3655 = scalar_select %p3654, %s3653, 63
      %s3656 = smul.addr %s3655, 8
      %s3657 = scalar_lea.vmem %s17, %s3656
      // Predicated region
      $region89: #{_lambda_.1} parent=87 // pred_check
        %p3658 = pneg %p408
      $region90: #{_lambda_.1} parent=87 // pred_check_branch
        %3660 = sbr.rel (%p3658) target = $region92
      $region91: #{_lambda_.1} parent=87 // pred_region
        %s3661 = smul.u32 32, %s28
      $region92: #{_lambda_.1} parent=87 // pred_fallthru
        _
    $region88: #{_lambda_.1} parent=5 // pred_fallthru
      _
    %p3662 = scmp.le.s32.totalorder 2, %s23
    // Predicated region
    $region93: #{_lambda_.1} parent=5 // pred_check
      %p3663 = pneg %p3662
    $region94: #{_lambda_.1} parent=5 // pred_check_branch
      %3665 = sbr.rel (%p3663) target = $region96
    $region95: #{_lambda_.1} parent=5 // pred_region
      %s3666 = ssub.s32 %s23, 2
      // Predicated region
      $region97: #{_lambda_.1} parent=95 // pred_check
        %p3667 = pneg %p414
      $region98: #{_lambda_.1} parent=95 // pred_check_branch
        %3669 = sbr.rel (%p3667) target = $region100
      $region99: #{_lambda_.1} parent=95 // pred_region
        %s3670 = smul.u32 32, %s29
        %p3671 = scmp.lt.s32.totalorder %s3670, 63
        %s3672 = scalar_select %p3671, %s3670, 63
        %s3673 = smul.addr %s3672, 8
        %s3674 = scalar_lea.vmem %s17, %s3673
      $region100: #{_lambda_.1} parent=95 // pred_fallthru
        _
    $region96: #{_lambda_.1} parent=5 // pred_fallthru
      _
  $region6: #{_lambda_.1} parent=0 // loop_footer
    %s27 = sadd.s32 1, %s23
  $region7: #{_lambda_.1} parent=0 // loop_footer_branch
    %22 = sbr.rel target = $region3
  $region8: #{_lambda_.1} parent=0 // loop_exit
    _

</llo_original>
